<compile_context>
chip_gen: v6e
topology: v6e:2x2x1
jax: 0.10.0
libtpu: 0.0.40
codegen_flags: <defaults>
</compile_context>

<pallas_src>
import jax
import jax.numpy as jnp
from jax import lax
from jax.experimental import pallas as pl
from jax.experimental.pallas import tpu as pltpu

# ----------------------------- config ---------------------------------------
N_EMBED = 384                       # n_embed from the module
NUM_HEADS = 6
HEAD_SIZE = N_EMBED // NUM_HEADS    # 64
CONTEXT_LENGTH = 256
NEG_BIG = -1e30                     # plain Python float -> literal, NOT a captured const


# ------------------------- fused attention kernel ---------------------------
def _mha_fused_kernel(x_ref, wqkv_ref, wproj_ref, bproj_ref, o_ref, cat_ref):
    """Bb batch elements: fused QKV -> per-head causal attention -> slab -> projection.

    x_ref     : (Bb, T, C)   bf16   input block
    wqkv_ref  : (C, 3*C)     bf16   packed [Wq*scale | Wk | Wv] (all heads)
    wproj_ref : (C, C)       bf16   output projection weight (in, out)
    bproj_ref : (1, C)       f32    output projection bias
    o_ref     : (Bb, T, C)   bf16   output block
    cat_ref   : (Bb*T, C)    bf16   VMEM scratch slab for concatenated head outputs
    """
    Bb, T, C = x_ref.shape
    Hs = HEAD_SIZE

    # One tall lane-dense QKV matmul (M = Bb*T, N = 3C), f32 accumulation on MXU.
    x2d = x_ref[...].reshape(Bb * T, C)                                  # bf16
    qkv = jnp.dot(x2d, wqkv_ref[...],
                  preferred_element_type=jnp.float32)                    # (Bb*T, 3C) f32
    qkv = qkv.astype(jnp.bfloat16)                                       # cast once

    # Causal mask, shared by all batch elements / heads.
    row = lax.broadcasted_iota(jnp.int32, (T, T), 0)
    col = lax.broadcasted_iota(jnp.int32, (T, T), 1)
    causal = col <= row

    for b in range(Bb):
        qkv_b = qkv[b * T:(b + 1) * T, :]                                # (T, 3C) bf16
        for h in range(NUM_HEADS):
            # C**-0.5 score scale already folded into Wq on the host.
            q = qkv_b[:, h * Hs:(h + 1) * Hs]                            # (T, Hs) bf16
            k = qkv_b[:, C + h * Hs:C + (h + 1) * Hs]                    # (T, Hs) bf16
            v = qkv_b[:, 2 * C + h * Hs:2 * C + (h + 1) * Hs]            # (T, Hs) bf16

            # q @ k^T with the transpose folded into MXU operand ordering (no XLU pass).
            wei = lax.dot_general(q, k, (((1,), (1,)), ((), ())),
                                  preferred_element_type=jnp.float32)    # (T, T) f32
            wei = jnp.where(causal, wei, NEG_BIG)

            # numerically-stable softmax; normalize AFTER the PV matmul.
            m = jnp.max(wei, axis=-1, keepdims=True)
            e = jnp.exp(wei - m)                                          # <= 1, f32
            s = jnp.sum(e, axis=-1, keepdims=True)                        # (T, 1) f32

            pv = jnp.dot(e.astype(jnp.bfloat16), v,
                         preferred_element_type=jnp.float32)              # (T, Hs) f32
            pv = pv * pl.reciprocal(s, approx=True)                       # EUP vrcp

            cat_ref[b * T:(b + 1) * T, h * Hs:(h + 1) * Hs] = pv.astype(cat_ref.dtype)

    # Single K=384 projection matmul over the whole (Bb*T, C) slab, plus bias.
    out = jnp.dot(cat_ref[...], wproj_ref[...],
                  preferred_element_type=jnp.float32) + bproj_ref[...]    # (Bb*T, C) f32
    o_ref[...] = out.reshape(Bb, T, C).astype(o_ref.dtype)


# --------------------- one-time host-side weight packing ---------------------
def pack_params(params):
    """Pack per-head weights into the kernel layout. Call ONCE at param-load time."""
    wq, wk, wv, wproj, bproj = params
    H, C, Hs = wq.shape
    scale = float(C) ** -0.5          # module uses C**-0.5 (n_embed), kept as-is
    wq_p = (wq.astype(jnp.float32) * scale).transpose(1, 0, 2).reshape(C, H * Hs)
    wk_p = wk.astype(jnp.float32).transpose(1, 0, 2).reshape(C, H * Hs)
    wv_p = wv.astype(jnp.float32).transpose(1, 0, 2).reshape(C, H * Hs)
    wqkv = jnp.concatenate([wq_p, wk_p, wv_p], axis=-1)                   # (C, 3C)
    return (wqkv.astype(jnp.bfloat16),
            wproj.astype(jnp.bfloat16),
            bproj.astype(jnp.float32).reshape(1, C))


def _pick_block_batch(B):
    """Largest Bb that divides B while keeping grid >= 2 (both v7x TCs busy)."""
    for bb in (8, 4, 2):
        if B % bb == 0 and B // bb >= 2:
            return bb
    return 1


# ----------------------------- full module ----------------------------------
def multi_head_attention(x, packed_params, block_batch=None):
    """Forward pass of MultiHeadAttention (inference / dropout disabled).

    x             : (B, T, C) f32 or bf16
    packed_params : output of pack_params()
    """
    wqkv_bf, wproj_bf, bproj_f32 = packed_params
    B, T, C = x.shape
    Bb = block_batch if block_batch is not None else _pick_block_batch(B)
    assert B % Bb == 0, (B, Bb)

    x_bf = x.astype(jnp.bfloat16)

    return pl.pallas_call(
        _mha_fused_kernel,
        out_shape=jax.ShapeDtypeStruct((B, T, C), jnp.bfloat16),
        grid_spec=pltpu.PrefetchScalarGridSpec(
            num_scalar_prefetch=0,
            grid=(B // Bb,),
            in_specs=[
                pl.BlockSpec((Bb, T, C), lambda b: (b, 0, 0)),
                # constant block index -> weights stay VMEM-resident across the grid
                pl.BlockSpec((C, 3 * C), lambda b: (0, 0)),
                pl.BlockSpec((C, C), lambda b: (0, 0)),
                pl.BlockSpec((1, C), lambda b: (0, 0)),
            ],
            out_specs=pl.BlockSpec((Bb, T, C), lambda b: (b, 0, 0)),
            scratch_shapes=[pltpu.VMEM((Bb * T, C), jnp.bfloat16)],
        ),
        compiler_params=pltpu.CompilerParams(
            dimension_semantics=("parallel",),
            vmem_limit_bytes=48 * 1024 * 1024,   # explicit budget; fits v7x's 64 MiB
        ),
    )(x_bf, wqkv_bf, wproj_bf, bproj_f32)


def reference(x, params):
    """Plain-JAX f32 reference mirroring the PyTorch forward (eval mode)."""
    wq, wk, wv, wproj, bproj = params
    B, T, C = x.shape
    outs = []
    for h in range(wq.shape[0]):
        q = x @ wq[h]
        k = x @ wk[h]
        v = x @ wv[h]
        wei = (q @ jnp.swapaxes(k, -2, -1)) * C ** (-0.5)
        tril = jnp.tril(jnp.ones((T, T), dtype=bool))
        wei = jnp.where(tril, wei, -jnp.inf)
        wei = jax.nn.softmax(wei, axis=-1)
        outs.append(wei @ v)
    cat = jnp.concatenate(outs, axis=-1)
    return cat @ wproj + bproj


# ------------------------------- main ----------------------------------------
if __name__ == "__main__":
    B, T = 2, 16                      # T <= context_length (256)
    C, H, Hs = N_EMBED, NUM_HEADS, HEAD_SIZE

    key = jax.random.PRNGKey(0)
    kx, kq, kk, kv, kw, kb = jax.random.split(key, 6)

    x = jax.random.normal(kx, (B, T, C), dtype=jnp.float32)
    # deterministic synthetic parameters (Linear weights stored as (in, out))
    wq = jax.random.normal(kq, (H, C, Hs), dtype=jnp.float32) * (C ** -0.5)
    wk = jax.random.normal(kk, (H, C, Hs), dtype=jnp.float32) * (C ** -0.5)
    wv = jax.random.normal(kv, (H, C, Hs), dtype=jnp.float32) * (C ** -0.5)
    wproj = jax.random.normal(kw, (C, C), dtype=jnp.float32) * (C ** -0.5)
    bproj = jax.random.normal(kb, (1, C), dtype=jnp.float32) * 0.01

    params = (wq, wk, wv, wproj, bproj)
    packed = pack_params(params)      # one-time packing, hoisted out of forward path

    out = multi_head_attention(x, packed)
    out = jax.block_until_ready(out)

    ref = reference(x, params)
    assert out.shape == (B, T, C), out.shape
    # bf16 matmul operands / bf16 output (f32 accumulation) -> loosened tolerance
    out_f32 = out.astype(jnp.float32)
    max_err = float(jnp.max(jnp.abs(out_f32 - ref)))
    assert jnp.allclose(out_f32, ref, atol=1e-1, rtol=1e-1), max_err

    print("KERNEL_OK")
</pallas_src>

<mosaic_0001>
module attributes {stable_mosaic.version = 11 : i64} {
  func.func @_mha_fused_kernel(%arg0: i32, %arg1: memref<1x16x384xbf16, #tpu.memory_space<vmem>>, %arg2: memref<384x1152xbf16, #tpu.memory_space<vmem>>, %arg3: memref<384x384xbf16, #tpu.memory_space<vmem>>, %arg4: memref<1x384xf32, #tpu.memory_space<vmem>>, %arg5: memref<1x16x384xbf16, #tpu.memory_space<vmem>>, %arg6: memref<16x384xbf16, #tpu.memory_space<vmem>>) attributes {dimension_semantics = [#tpu.dimension_semantics<parallel>], iteration_bounds = array<i64: 2>, scalar_prefetch = 0 : i64, scratch_operands = 1 : i64, tpu.core_type = #tpu.core_type<tc>, window_params = [{transform_indices = @transform_0, window_bounds = array<i64: 1, 16, 384>}, {pipeline_mode = #tpu.pipeline_mode<synchronous>, transform_indices = @transform_1, window_bounds = array<i64: 384, 1152>}, {pipeline_mode = #tpu.pipeline_mode<synchronous>, transform_indices = @transform_2, window_bounds = array<i64: 384, 384>}, {pipeline_mode = #tpu.pipeline_mode<synchronous>, transform_indices = @transform_3, window_bounds = array<i64: 1, 384>}, {transform_indices = @transform_4, window_bounds = array<i64: 1, 16, 384>}]} {
    %c0 = arith.constant 0 : index
    %c0_0 = arith.constant 0 : index
    %c0_1 = arith.constant 0 : index
    %0 = vector.load %arg1[%c0, %c0_0, %c0_1] : memref<1x16x384xbf16, #tpu.memory_space<vmem>>, vector<1x16x384xbf16>
    %1 = vector.shape_cast %0 : vector<1x16x384xbf16> to vector<16x384xbf16>
    %c0_2 = arith.constant 0 : index
    %c0_3 = arith.constant 0 : index
    %2 = vector.load %arg2[%c0_2, %c0_3] : memref<384x1152xbf16, #tpu.memory_space<vmem>>, vector<384x1152xbf16>
    %cst = arith.constant dense<0.000000e+00> : vector<16x1152xf32>
    %3 = tpu.matmul %1, %2, %cst {dimension_numbers = #tpu.dot_dimension_numbers<[1], [0], [0], [1], [0, 0, 1, 1], [], []>} : vector<16x384xbf16>, vector<384x1152xbf16>, vector<16x1152xf32> -> vector<16x1152xf32>
    %4 = arith.truncf %3 : vector<16x1152xf32> to vector<16x1152xbf16>
    %5 = tpu.iota {dimensions = array<i32: 0>} : vector<16x16xi32>
    %6 = tpu.iota {dimensions = array<i32: 1>} : vector<16x16xi32>
    %7 = arith.cmpi sle, %6, %5 : vector<16x16xi32>
    %8 = vector.extract_strided_slice %4 {offsets = [0, 0], sizes = [16, 64], strides = [1, 1]} : vector<16x1152xbf16> to vector<16x64xbf16>
    %9 = vector.extract_strided_slice %4 {offsets = [0, 384], sizes = [16, 64], strides = [1, 1]} : vector<16x1152xbf16> to vector<16x64xbf16>
    %10 = vector.extract_strided_slice %4 {offsets = [0, 768], sizes = [16, 64], strides = [1, 1]} : vector<16x1152xbf16> to vector<16x64xbf16>
    %cst_4 = arith.constant dense<0.000000e+00> : vector<16x16xf32>
    %11 = tpu.matmul %8, %9, %cst_4 {dimension_numbers = #tpu.dot_dimension_numbers<[1], [1], [0], [0], [0, 0, 1, 0], [], []>} : vector<16x64xbf16>, vector<16x64xbf16>, vector<16x16xf32> -> vector<16x16xf32>
    %cst_5 = arith.constant -1.000000e+30 : f32
    %12 = vector.broadcast %cst_5 : f32 to vector<16x16xf32>
    %13 = arith.select %7, %11, %12 : vector<16x16xi1>, vector<16x16xf32>
    %cst_6 = arith.constant dense<0xFF800000> : vector<16xf32>
    %14 = vector.multi_reduction <maximumf>, %13, %cst_6 [1] : vector<16x16xf32> to vector<16xf32>
    %15 = vector.shape_cast %14 : vector<16xf32> to vector<16x1xf32>
    %16 = vector.broadcast %15 : vector<16x1xf32> to vector<16x16xf32>
    %17 = arith.subf %13, %16 : vector<16x16xf32>
    %18 = math.exp %17 : vector<16x16xf32>
    %cst_7 = arith.constant dense<0.000000e+00> : vector<16xf32>
    %19 = vector.multi_reduction <add>, %18, %cst_7 [1] : vector<16x16xf32> to vector<16xf32>
    %20 = vector.shape_cast %19 : vector<16xf32> to vector<16x1xf32>
    %21 = arith.truncf %18 : vector<16x16xf32> to vector<16x16xbf16>
    %cst_8 = arith.constant dense<0.000000e+00> : vector<16x64xf32>
    %22 = tpu.matmul %21, %10, %cst_8 {dimension_numbers = #tpu.dot_dimension_numbers<[1], [0], [0], [1], [0, 0, 1, 1], [], []>} : vector<16x16xbf16>, vector<16x64xbf16>, vector<16x64xf32> -> vector<16x64xf32>
    %23 = tpu.reciprocal %20 {approx = true} : vector<16x1xf32> -> vector<16x1xf32>
    %24 = vector.broadcast %23 : vector<16x1xf32> to vector<16x64xf32>
    %25 = arith.mulf %22, %24 : vector<16x64xf32>
    %26 = arith.truncf %25 : vector<16x64xf32> to vector<16x64xbf16>
    %c0_9 = arith.constant 0 : index
    %c0_10 = arith.constant 0 : index
    %27 = vector.load %arg6[%c0_9, %c0_10] : memref<16x384xbf16, #tpu.memory_space<vmem>>, vector<16x64xbf16>
    tpu.vector_store %arg6[%c0_9, %c0_10], %26 {strides = array<i32>} : memref<16x384xbf16, #tpu.memory_space<vmem>>, vector<16x64xbf16>,
    %28 = vector.extract_strided_slice %4 {offsets = [0, 64], sizes = [16, 64], strides = [1, 1]} : vector<16x1152xbf16> to vector<16x64xbf16>
    %29 = vector.extract_strided_slice %4 {offsets = [0, 448], sizes = [16, 64], strides = [1, 1]} : vector<16x1152xbf16> to vector<16x64xbf16>
    %30 = vector.extract_strided_slice %4 {offsets = [0, 832], sizes = [16, 64], strides = [1, 1]} : vector<16x1152xbf16> to vector<16x64xbf16>
    %cst_11 = arith.constant dense<0.000000e+00> : vector<16x16xf32>
    %31 = tpu.matmul %28, %29, %cst_11 {dimension_numbers = #tpu.dot_dimension_numbers<[1], [1], [0], [0], [0, 0, 1, 0], [], []>} : vector<16x64xbf16>, vector<16x64xbf16>, vector<16x16xf32> -> vector<16x16xf32>
    %cst_12 = arith.constant -1.000000e+30 : f32
    %32 = vector.broadcast %cst_12 : f32 to vector<16x16xf32>
    %33 = arith.select %7, %31, %32 : vector<16x16xi1>, vector<16x16xf32>
    %cst_13 = arith.constant dense<0xFF800000> : vector<16xf32>
    %34 = vector.multi_reduction <maximumf>, %33, %cst_13 [1] : vector<16x16xf32> to vector<16xf32>
    %35 = vector.shape_cast %34 : vector<16xf32> to vector<16x1xf32>
    %36 = vector.broadcast %35 : vector<16x1xf32> to vector<16x16xf32>
    %37 = arith.subf %33, %36 : vector<16x16xf32>
    %38 = math.exp %37 : vector<16x16xf32>
    %cst_14 = arith.constant dense<0.000000e+00> : vector<16xf32>
    %39 = vector.multi_reduction <add>, %38, %cst_14 [1] : vector<16x16xf32> to vector<16xf32>
    %40 = vector.shape_cast %39 : vector<16xf32> to vector<16x1xf32>
    %41 = arith.truncf %38 : vector<16x16xf32> to vector<16x16xbf16>
    %cst_15 = arith.constant dense<0.000000e+00> : vector<16x64xf32>
    %42 = tpu.matmul %41, %30, %cst_15 {dimension_numbers = #tpu.dot_dimension_numbers<[1], [0], [0], [1], [0, 0, 1, 1], [], []>} : vector<16x16xbf16>, vector<16x64xbf16>, vector<16x64xf32> -> vector<16x64xf32>
    %43 = tpu.reciprocal %40 {approx = true} : vector<16x1xf32> -> vector<16x1xf32>
    %44 = vector.broadcast %43 : vector<16x1xf32> to vector<16x64xf32>
    %45 = arith.mulf %42, %44 : vector<16x64xf32>
    %46 = arith.truncf %45 : vector<16x64xf32> to vector<16x64xbf16>
    %c0_16 = arith.constant 0 : index
    %c64 = arith.constant 64 : index
    %47 = vector.load %arg6[%c0_16, %c64] : memref<16x384xbf16, #tpu.memory_space<vmem>>, vector<16x64xbf16>
    tpu.vector_store %arg6[%c0_16, %c64], %46 {strides = array<i32>} : memref<16x384xbf16, #tpu.memory_space<vmem>>, vector<16x64xbf16>,
    %48 = vector.extract_strided_slice %4 {offsets = [0, 128], sizes = [16, 64], strides = [1, 1]} : vector<16x1152xbf16> to vector<16x64xbf16>
    %49 = vector.extract_strided_slice %4 {offsets = [0, 512], sizes = [16, 64], strides = [1, 1]} : vector<16x1152xbf16> to vector<16x64xbf16>
    %50 = vector.extract_strided_slice %4 {offsets = [0, 896], sizes = [16, 64], strides = [1, 1]} : vector<16x1152xbf16> to vector<16x64xbf16>
    %cst_17 = arith.constant dense<0.000000e+00> : vector<16x16xf32>
    %51 = tpu.matmul %48, %49, %cst_17 {dimension_numbers = #tpu.dot_dimension_numbers<[1], [1], [0], [0], [0, 0, 1, 0], [], []>} : vector<16x64xbf16>, vector<16x64xbf16>, vector<16x16xf32> -> vector<16x16xf32>
    %cst_18 = arith.constant -1.000000e+30 : f32
    %52 = vector.broadcast %cst_18 : f32 to vector<16x16xf32>
    %53 = arith.select %7, %51, %52 : vector<16x16xi1>, vector<16x16xf32>
    %cst_19 = arith.constant dense<0xFF800000> : vector<16xf32>
    %54 = vector.multi_reduction <maximumf>, %53, %cst_19 [1] : vector<16x16xf32> to vector<16xf32>
    %55 = vector.shape_cast %54 : vector<16xf32> to vector<16x1xf32>
    %56 = vector.broadcast %55 : vector<16x1xf32> to vector<16x16xf32>
    %57 = arith.subf %53, %56 : vector<16x16xf32>
    %58 = math.exp %57 : vector<16x16xf32>
    %cst_20 = arith.constant dense<0.000000e+00> : vector<16xf32>
    %59 = vector.multi_reduction <add>, %58, %cst_20 [1] : vector<16x16xf32> to vector<16xf32>
    %60 = vector.shape_cast %59 : vector<16xf32> to vector<16x1xf32>
    %61 = arith.truncf %58 : vector<16x16xf32> to vector<16x16xbf16>
    %cst_21 = arith.constant dense<0.000000e+00> : vector<16x64xf32>
    %62 = tpu.matmul %61, %50, %cst_21 {dimension_numbers = #tpu.dot_dimension_numbers<[1], [0], [0], [1], [0, 0, 1, 1], [], []>} : vector<16x16xbf16>, vector<16x64xbf16>, vector<16x64xf32> -> vector<16x64xf32>
    %63 = tpu.reciprocal %60 {approx = true} : vector<16x1xf32> -> vector<16x1xf32>
    %64 = vector.broadcast %63 : vector<16x1xf32> to vector<16x64xf32>
    %65 = arith.mulf %62, %64 : vector<16x64xf32>
    %66 = arith.truncf %65 : vector<16x64xf32> to vector<16x64xbf16>
    %c0_22 = arith.constant 0 : index
    %c128 = arith.constant 128 : index
    %67 = vector.load %arg6[%c0_22, %c128] : memref<16x384xbf16, #tpu.memory_space<vmem>>, vector<16x64xbf16>
    tpu.vector_store %arg6[%c0_22, %c128], %66 {strides = array<i32>} : memref<16x384xbf16, #tpu.memory_space<vmem>>, vector<16x64xbf16>,
    %68 = vector.extract_strided_slice %4 {offsets = [0, 192], sizes = [16, 64], strides = [1, 1]} : vector<16x1152xbf16> to vector<16x64xbf16>
    %69 = vector.extract_strided_slice %4 {offsets = [0, 576], sizes = [16, 64], strides = [1, 1]} : vector<16x1152xbf16> to vector<16x64xbf16>
    %70 = vector.extract_strided_slice %4 {offsets = [0, 960], sizes = [16, 64], strides = [1, 1]} : vector<16x1152xbf16> to vector<16x64xbf16>
    %cst_23 = arith.constant dense<0.000000e+00> : vector<16x16xf32>
    %71 = tpu.matmul %68, %69, %cst_23 {dimension_numbers = #tpu.dot_dimension_numbers<[1], [1], [0], [0], [0, 0, 1, 0], [], []>} : vector<16x64xbf16>, vector<16x64xbf16>, vector<16x16xf32> -> vector<16x16xf32>
    %cst_24 = arith.constant -1.000000e+30 : f32
    %72 = vector.broadcast %cst_24 : f32 to vector<16x16xf32>
    %73 = arith.select %7, %71, %72 : vector<16x16xi1>, vector<16x16xf32>
    %cst_25 = arith.constant dense<0xFF800000> : vector<16xf32>
    %74 = vector.multi_reduction <maximumf>, %73, %cst_25 [1] : vector<16x16xf32> to vector<16xf32>
    %75 = vector.shape_cast %74 : vector<16xf32> to vector<16x1xf32>
    %76 = vector.broadcast %75 : vector<16x1xf32> to vector<16x16xf32>
    %77 = arith.subf %73, %76 : vector<16x16xf32>
    %78 = math.exp %77 : vector<16x16xf32>
    %cst_26 = arith.constant dense<0.000000e+00> : vector<16xf32>
    %79 = vector.multi_reduction <add>, %78, %cst_26 [1] : vector<16x16xf32> to vector<16xf32>
    %80 = vector.shape_cast %79 : vector<16xf32> to vector<16x1xf32>
    %81 = arith.truncf %78 : vector<16x16xf32> to vector<16x16xbf16>
    %cst_27 = arith.constant dense<0.000000e+00> : vector<16x64xf32>
    %82 = tpu.matmul %81, %70, %cst_27 {dimension_numbers = #tpu.dot_dimension_numbers<[1], [0], [0], [1], [0, 0, 1, 1], [], []>} : vector<16x16xbf16>, vector<16x64xbf16>, vector<16x64xf32> -> vector<16x64xf32>
    %83 = tpu.reciprocal %80 {approx = true} : vector<16x1xf32> -> vector<16x1xf32>
    %84 = vector.broadcast %83 : vector<16x1xf32> to vector<16x64xf32>
    %85 = arith.mulf %82, %84 : vector<16x64xf32>
    %86 = arith.truncf %85 : vector<16x64xf32> to vector<16x64xbf16>
    %c0_28 = arith.constant 0 : index
    %c192 = arith.constant 192 : index
    %87 = vector.load %arg6[%c0_28, %c192] : memref<16x384xbf16, #tpu.memory_space<vmem>>, vector<16x64xbf16>
    tpu.vector_store %arg6[%c0_28, %c192], %86 {strides = array<i32>} : memref<16x384xbf16, #tpu.memory_space<vmem>>, vector<16x64xbf16>,
    %88 = vector.extract_strided_slice %4 {offsets = [0, 256], sizes = [16, 64], strides = [1, 1]} : vector<16x1152xbf16> to vector<16x64xbf16>
    %89 = vector.extract_strided_slice %4 {offsets = [0, 640], sizes = [16, 64], strides = [1, 1]} : vector<16x1152xbf16> to vector<16x64xbf16>
    %90 = vector.extract_strided_slice %4 {offsets = [0, 1024], sizes = [16, 64], strides = [1, 1]} : vector<16x1152xbf16> to vector<16x64xbf16>
    %cst_29 = arith.constant dense<0.000000e+00> : vector<16x16xf32>
    %91 = tpu.matmul %88, %89, %cst_29 {dimension_numbers = #tpu.dot_dimension_numbers<[1], [1], [0], [0], [0, 0, 1, 0], [], []>} : vector<16x64xbf16>, vector<16x64xbf16>, vector<16x16xf32> -> vector<16x16xf32>
    %cst_30 = arith.constant -1.000000e+30 : f32
    %92 = vector.broadcast %cst_30 : f32 to vector<16x16xf32>
    %93 = arith.select %7, %91, %92 : vector<16x16xi1>, vector<16x16xf32>
    %cst_31 = arith.constant dense<0xFF800000> : vector<16xf32>
    %94 = vector.multi_reduction <maximumf>, %93, %cst_31 [1] : vector<16x16xf32> to vector<16xf32>
    %95 = vector.shape_cast %94 : vector<16xf32> to vector<16x1xf32>
    %96 = vector.broadcast %95 : vector<16x1xf32> to vector<16x16xf32>
    %97 = arith.subf %93, %96 : vector<16x16xf32>
    %98 = math.exp %97 : vector<16x16xf32>
    %cst_32 = arith.constant dense<0.000000e+00> : vector<16xf32>
    %99 = vector.multi_reduction <add>, %98, %cst_32 [1] : vector<16x16xf32> to vector<16xf32>
    %100 = vector.shape_cast %99 : vector<16xf32> to vector<16x1xf32>
    %101 = arith.truncf %98 : vector<16x16xf32> to vector<16x16xbf16>
    %cst_33 = arith.constant dense<0.000000e+00> : vector<16x64xf32>
    %102 = tpu.matmul %101, %90, %cst_33 {dimension_numbers = #tpu.dot_dimension_numbers<[1], [0], [0], [1], [0, 0, 1, 1], [], []>} : vector<16x16xbf16>, vector<16x64xbf16>, vector<16x64xf32> -> vector<16x64xf32>
    %103 = tpu.reciprocal %100 {approx = true} : vector<16x1xf32> -> vector<16x1xf32>
    %104 = vector.broadcast %103 : vector<16x1xf32> to vector<16x64xf32>
    %105 = arith.mulf %102, %104 : vector<16x64xf32>
    %106 = arith.truncf %105 : vector<16x64xf32> to vector<16x64xbf16>
    %c0_34 = arith.constant 0 : index
    %c256 = arith.constant 256 : index
    %107 = vector.load %arg6[%c0_34, %c256] : memref<16x384xbf16, #tpu.memory_space<vmem>>, vector<16x64xbf16>
    tpu.vector_store %arg6[%c0_34, %c256], %106 {strides = array<i32>} : memref<16x384xbf16, #tpu.memory_space<vmem>>, vector<16x64xbf16>,
    %108 = vector.extract_strided_slice %4 {offsets = [0, 320], sizes = [16, 64], strides = [1, 1]} : vector<16x1152xbf16> to vector<16x64xbf16>
    %109 = vector.extract_strided_slice %4 {offsets = [0, 704], sizes = [16, 64], strides = [1, 1]} : vector<16x1152xbf16> to vector<16x64xbf16>
    %110 = vector.extract_strided_slice %4 {offsets = [0, 1088], sizes = [16, 64], strides = [1, 1]} : vector<16x1152xbf16> to vector<16x64xbf16>
    %cst_35 = arith.constant dense<0.000000e+00> : vector<16x16xf32>
    %111 = tpu.matmul %108, %109, %cst_35 {dimension_numbers = #tpu.dot_dimension_numbers<[1], [1], [0], [0], [0, 0, 1, 0], [], []>} : vector<16x64xbf16>, vector<16x64xbf16>, vector<16x16xf32> -> vector<16x16xf32>
    %cst_36 = arith.constant -1.000000e+30 : f32
    %112 = vector.broadcast %cst_36 : f32 to vector<16x16xf32>
    %113 = arith.select %7, %111, %112 : vector<16x16xi1>, vector<16x16xf32>
    %cst_37 = arith.constant dense<0xFF800000> : vector<16xf32>
    %114 = vector.multi_reduction <maximumf>, %113, %cst_37 [1] : vector<16x16xf32> to vector<16xf32>
    %115 = vector.shape_cast %114 : vector<16xf32> to vector<16x1xf32>
    %116 = vector.broadcast %115 : vector<16x1xf32> to vector<16x16xf32>
    %117 = arith.subf %113, %116 : vector<16x16xf32>
    %118 = math.exp %117 : vector<16x16xf32>
    %cst_38 = arith.constant dense<0.000000e+00> : vector<16xf32>
    %119 = vector.multi_reduction <add>, %118, %cst_38 [1] : vector<16x16xf32> to vector<16xf32>
    %120 = vector.shape_cast %119 : vector<16xf32> to vector<16x1xf32>
    %121 = arith.truncf %118 : vector<16x16xf32> to vector<16x16xbf16>
    %cst_39 = arith.constant dense<0.000000e+00> : vector<16x64xf32>
    %122 = tpu.matmul %121, %110, %cst_39 {dimension_numbers = #tpu.dot_dimension_numbers<[1], [0], [0], [1], [0, 0, 1, 1], [], []>} : vector<16x16xbf16>, vector<16x64xbf16>, vector<16x64xf32> -> vector<16x64xf32>
    %123 = tpu.reciprocal %120 {approx = true} : vector<16x1xf32> -> vector<16x1xf32>
    %124 = vector.broadcast %123 : vector<16x1xf32> to vector<16x64xf32>
    %125 = arith.mulf %122, %124 : vector<16x64xf32>
    %126 = arith.truncf %125 : vector<16x64xf32> to vector<16x64xbf16>
    %c0_40 = arith.constant 0 : index
    %c320 = arith.constant 320 : index
    %127 = vector.load %arg6[%c0_40, %c320] : memref<16x384xbf16, #tpu.memory_space<vmem>>, vector<16x64xbf16>
    tpu.vector_store %arg6[%c0_40, %c320], %126 {strides = array<i32>} : memref<16x384xbf16, #tpu.memory_space<vmem>>, vector<16x64xbf16>,
    %c0_41 = arith.constant 0 : index
    %c0_42 = arith.constant 0 : index
    %128 = vector.load %arg6[%c0_41, %c0_42] : memref<16x384xbf16, #tpu.memory_space<vmem>>, vector<16x384xbf16>
    %c0_43 = arith.constant 0 : index
    %c0_44 = arith.constant 0 : index
    %129 = vector.load %arg3[%c0_43, %c0_44] : memref<384x384xbf16, #tpu.memory_space<vmem>>, vector<384x384xbf16>
    %cst_45 = arith.constant dense<0.000000e+00> : vector<16x384xf32>
    %130 = tpu.matmul %128, %129, %cst_45 {dimension_numbers = #tpu.dot_dimension_numbers<[1], [0], [0], [1], [0, 0, 1, 1], [], []>} : vector<16x384xbf16>, vector<384x384xbf16>, vector<16x384xf32> -> vector<16x384xf32>
    %c0_46 = arith.constant 0 : index
    %c0_47 = arith.constant 0 : index
    %131 = vector.load %arg4[%c0_46, %c0_47] : memref<1x384xf32, #tpu.memory_space<vmem>>, vector<1x384xf32>
    %132 = vector.broadcast %131 : vector<1x384xf32> to vector<16x384xf32>
    %133 = arith.addf %130, %132 : vector<16x384xf32>
    %134 = vector.shape_cast %133 : vector<16x384xf32> to vector<1x16x384xf32>
    %135 = arith.truncf %134 : vector<1x16x384xf32> to vector<1x16x384xbf16>
    %c0_48 = arith.constant 0 : index
    %c0_49 = arith.constant 0 : index
    %c0_50 = arith.constant 0 : index
    %136 = vector.load %arg5[%c0_48, %c0_49, %c0_50] : memref<1x16x384xbf16, #tpu.memory_space<vmem>>, vector<1x16x384xbf16>
    tpu.vector_store %arg5[%c0_48, %c0_49, %c0_50], %135 {strides = array<i32>} : memref<1x16x384xbf16, #tpu.memory_space<vmem>>, vector<1x16x384xbf16>,
    return
  }
  func.func @transform_0(%arg0: i32) -> (i32, i32, i32) {
    %c0_i32 = arith.constant 0 : i32
    %c0_i32_0 = arith.constant 0 : i32
    %c0_i32_1 = arith.constant 0 : i32
    return %arg0, %c0_i32, %c0_i32_0 : i32, i32, i32
  }
  func.func @transform_1(%arg0: i32) -> (i32, i32) {
    %c0_i32 = arith.constant 0 : i32
    %c0_i32_0 = arith.constant 0 : i32
    %c0_i32_1 = arith.constant 0 : i32
    return %c0_i32, %c0_i32_0 : i32, i32
  }
  func.func @transform_2(%arg0: i32) -> (i32, i32) {
    %c0_i32 = arith.constant 0 : i32
    %c0_i32_0 = arith.constant 0 : i32
    %c0_i32_1 = arith.constant 0 : i32
    return %c0_i32, %c0_i32_0 : i32, i32
  }
  func.func @transform_3(%arg0: i32) -> (i32, i32) {
    %c0_i32 = arith.constant 0 : i32
    %c0_i32_0 = arith.constant 0 : i32
    %c0_i32_1 = arith.constant 0 : i32
    return %c0_i32, %c0_i32_0 : i32, i32
  }
  func.func @transform_4(%arg0: i32) -> (i32, i32, i32) {
    %c0_i32 = arith.constant 0 : i32
    %c0_i32_0 = arith.constant 0 : i32
    %c0_i32_1 = arith.constant 0 : i32
    return %arg0, %c0_i32, %c0_i32_0 : i32, i32, i32
  }
}

</mosaic_0001>

<llo_original>
// kernel: tpu_custom_call.1
$region0: #{tpu_custom_call.1}
  #allocation0 [shape = 'u32[]', space=smem, size = 0x4, offset = 0x4, fixed_abs, tag = 'smem constant byte address 0x4 - core index']
  #allocation1 [shape = 'u32[144,128]{1,0:T(1,128)}', space=vmem, size = 0x12000, scoped, tag = 'internal scratch']
  #allocation2 [shape = 'bf16[16,384]{1,0:T(8,128)(2,1)}', space=vmem, size = 0x3000, scoped, tag = 'scratch operand']
  %s0 = inlined_call_operand.hbm [shape: bf16[2,16,384], index: 0, kind: input, shape index: {}]
  %s1 = inlined_call_operand.hbm [shape: bf16[384,1152], index: 1, kind: input, shape index: {}]
  %s2 = inlined_call_operand.hbm [shape: bf16[384,384], index: 2, kind: input, shape index: {}]
  %s3 = inlined_call_operand.vmem [shape: f32[1,384], index: 3, kind: input, shape index: {}]
  %s4 = inlined_call_operand.hbm [shape: bf16[2,16,384], index: 4, kind: output, shape index: {}]
  %s5 = sld [smem:[#allocation0]]
  $region61: #{tpu_custom_call.1} parent=0
    _
  %s7 = ssub.s32 1, %s5
  %s8 = scalar_select 0, %s7, %s5
  $region1: #{tpu_custom_call.1} parent=0
    #allocation3 [shape = 'u8[24576]{0}', space=vmem, size = 0x6000, scoped, tag = 'input window, operand 0']
    #allocation4 [shape = 's32[2]{0}', space=sflag, size = 0x8, scoped, tag = 'scoped memory for tpu_custom_call.1']
    #allocation5 [shape = 's32[2]{0}', space=sflag, size = 0x8, scoped, tag = 'scoped memory for tpu_custom_call.1']
    #allocation6 [shape = 'u8[884736]{0}', space=vmem, size = 0xd8000, scoped, tag = 'input window, operand 1, single buffered']
    #allocation7 [shape = 's32[1]{0}', space=sflag, size = 0x4, scoped, tag = 'scoped memory for tpu_custom_call.1']
    #allocation8 [shape = 'u8[294912]{0}', space=vmem, size = 0x48000, scoped, tag = 'input window, operand 2, single buffered']
    #allocation9 [shape = 'u8[24576]{0}', space=vmem, size = 0x6000, scoped, tag = 'output window, operand 0']
    %9 = vsyncpa [#allocation4], 0
    %s10 = scalar_lea.sflag [#allocation4], 1
    %11 = vsyncpa %s10, 0
    %12 = vsyncpa [#allocation7], 0
    %13 = vsyncpa [#allocation5], 0
    %s14 = scalar_lea.sflag [#allocation5], 1
    %15 = vsyncpa %s14, 0
    loop: start=0, step=1, limit=4
    $region2: #{tpu_custom_call.1} parent=1 // loop_pre_header
      _
    $region3: #{tpu_custom_call.1} parent=1 // loop_header
      %s17 = sphi 0, %s21
      %p18 = scmp.ge.s32.totalorder %s17, 4
      %s27 = sphi 0, %s29
      %s30 = sphi 0, %s27
      %s31 = sphi 0, %s30
      %s47 = sphi 0, %s31
      %s51 = sphi 0, %s51
      %s53 = sphi 0, %s51
      %s54 = sphi 0, %s53
      %s68 = sphi 0, %s54
      %s72 = sphi 0, %s72
      %s74 = sphi 0, %s72
      %s75 = sphi 0, %s74
      %s89 = sphi 0, %s75
      %s93 = sphi 0, %s93
      %s95 = sphi 0, %s93
      %s96 = sphi 0, %s95
      %s110 = sphi 0, %s96
      %s116 = sphi 0, %s118
      %s119 = sphi 0, %s116
      %s120 = sphi 0, %s119
      %s136 = sphi 0, %s120
    $region4: #{tpu_custom_call.1} parent=1 // loop_header_branch
      %20 = sbr.rel (%p18) target = $region8
    $region5: #{tpu_custom_call.1} parent=1 // loop_body
      %s22 = ssub.s32 %s17, 1
      %s23 = ssub.s32 %s17, 2
      %s24 = sadd.s32 %s17, 1
      %s25 = ssub.s32 %s17, %s24
      %p26 = scmp.eq.s32.totalorder %s25, 0
      %s28 = sadd.s32 %s27, 1
      %s29 = scalar_select %p26, %s27, %s28
      %p32 = pneg %p26
      %p33 = scmp.eq.s32.totalorder %s17, 1
      %p34 = por %p32, %p33
      %p35 = scmp.ne.s32.totalorder %s27, %s30
      %p36 = scmp.eq.s32.totalorder %s17, 0
      %p37 = por %p35, %p36
      %p38 = scmp.ne.s32.totalorder %s27, %s30
      %p39 = scmp.eq.s32.totalorder %s22, 1
      %p40 = por %p38, %p39
      %p41 = scmp.ne.s32.totalorder %s30, %s31
      %p42 = scmp.eq.s32.totalorder %s22, 0
      %p43 = por %p41, %p42
      %p44 = scmp.ne.s32.totalorder %s30, %s31
      %p45 = scmp.eq.s32.totalorder %s23, 1
      %p46 = por %p44, %p45
      %p48 = scmp.ne.s32.totalorder %s31, %s47
      %p49 = scmp.eq.s32.totalorder %s23, 0
      %p50 = por %p48, %p49
      %s52 = sadd.s32 %s51, 1
      %p55 = scmp.eq.s32.totalorder %s17, 1
      %p56 = scmp.ne.s32.totalorder %s51, %s53
      %p57 = scmp.eq.s32.totalorder %s17, 0
      %p58 = por %p56, %p57
      %p59 = scmp.ne.s32.totalorder %s51, %s53
      %p60 = scmp.eq.s32.totalorder %s22, 1
      %p61 = por %p59, %p60
      %p62 = scmp.ne.s32.totalorder %s53, %s54
      %p63 = scmp.eq.s32.totalorder %s22, 0
      %p64 = por %p62, %p63
      %p65 = scmp.ne.s32.totalorder %s53, %s54
      %p66 = scmp.eq.s32.totalorder %s23, 1
      %p67 = por %p65, %p66
      %p69 = scmp.ne.s32.totalorder %s54, %s68
      %p70 = scmp.eq.s32.totalorder %s23, 0
      %p71 = por %p69, %p70
      %s73 = sadd.s32 %s72, 1
      %p76 = scmp.eq.s32.totalorder %s17, 1
      %p77 = scmp.ne.s32.totalorder %s72, %s74
      %p78 = scmp.eq.s32.totalorder %s17, 0
      %p79 = por %p77, %p78
      %p80 = scmp.ne.s32.totalorder %s72, %s74
      %p81 = scmp.eq.s32.totalorder %s22, 1
      %p82 = por %p80, %p81
      %p83 = scmp.ne.s32.totalorder %s74, %s75
      %p84 = scmp.eq.s32.totalorder %s22, 0
      %p85 = por %p83, %p84
      %p86 = scmp.ne.s32.totalorder %s74, %s75
      %p87 = scmp.eq.s32.totalorder %s23, 1
      %p88 = por %p86, %p87
      %p90 = scmp.ne.s32.totalorder %s75, %s89
      %p91 = scmp.eq.s32.totalorder %s23, 0
      %p92 = por %p90, %p91
      %s94 = sadd.s32 %s93, 1
      %p97 = scmp.eq.s32.totalorder %s17, 1
      %p98 = scmp.ne.s32.totalorder %s93, %s95
      %p99 = scmp.eq.s32.totalorder %s17, 0
      %p100 = por %p98, %p99
      %p101 = scmp.ne.s32.totalorder %s93, %s95
      %p102 = scmp.eq.s32.totalorder %s22, 1
      %p103 = por %p101, %p102
      %p104 = scmp.ne.s32.totalorder %s95, %s96
      %p105 = scmp.eq.s32.totalorder %s22, 0
      %p106 = por %p104, %p105
      %p107 = scmp.ne.s32.totalorder %s95, %s96
      %p108 = scmp.eq.s32.totalorder %s23, 1
      %p109 = por %p107, %p108
      %p111 = scmp.ne.s32.totalorder %s96, %s110
      %p112 = scmp.eq.s32.totalorder %s23, 0
      %p113 = por %p111, %p112
      %s114 = ssub.s32 %s17, %s24
      %p115 = scmp.eq.s32.totalorder %s114, 0
      %s117 = sadd.s32 %s116, 1
      %s118 = scalar_select %p115, %s116, %s117
      %p121 = pneg %p115
      %p122 = scmp.eq.s32.totalorder %s17, 1
      %p123 = por %p121, %p122
      %p124 = scmp.ne.s32.totalorder %s116, %s119
      %p125 = scmp.eq.s32.totalorder %s17, 0
      %p126 = por %p124, %p125
      %p127 = scmp.ne.s32.totalorder %s116, %s119
      %p128 = scmp.eq.s32.totalorder %s22, 1
      %p129 = por %p127, %p128
      %p130 = scmp.ne.s32.totalorder %s119, %s120
      %p131 = scmp.eq.s32.totalorder %s22, 0
      %p132 = por %p130, %p131
      %p133 = scmp.ne.s32.totalorder %s119, %s120
      %p134 = scmp.eq.s32.totalorder %s23, 1
      %p135 = por %p133, %p134
      %p137 = scmp.ne.s32.totalorder %s120, %s136
      %p138 = scmp.eq.s32.totalorder %s23, 0
      %p139 = por %p137, %p138
      %p140 = scmp.le.s32.totalorder 1, %s17
      %p141 = scmp.lt.s32.totalorder %s17, 3
      %p142 = pnand %p140, %p141
      %p143 = pneg %p142
      // Predicated region
      $region9: #{tpu_custom_call.1} parent=5 // pred_check
        _
      $region10: #{tpu_custom_call.1} parent=5 // pred_check_branch
        %145 = sbr.rel (%p142) target = $region12
      $region11: #{tpu_custom_call.1} parent=5 // pred_region
        %s146 = ssub.s32 %s17, 1
        // Predicated region
        $region13: #{tpu_custom_call.1} parent=11 // pred_check
          %p147 = pneg %p64
        $region14: #{tpu_custom_call.1} parent=11 // pred_check_branch
          %149 = sbr.rel (%p147) target = $region16
        $region15: #{tpu_custom_call.1} parent=11 // pred_region
          %s151 = ssub.s32 27648, 27648
          %152 = vsyncadd [#allocation7], %s151
          %s153 = sshll.u32 [#allocation6], 4
          %s154 = int_to_ptr.vmem [resolvable:$true] %s153
          %159 = dma.hbm_to_vmem [thread:$0]  %s1, 27648, %s154, [#allocation7], 576, 576, 36
        $region16: #{tpu_custom_call.1} parent=11 // pred_fallthru
          _
        // Predicated region
        $region17: #{tpu_custom_call.1} parent=11 // pred_check
          %p160 = pneg %p85
        $region18: #{tpu_custom_call.1} parent=11 // pred_check_branch
          %162 = sbr.rel (%p160) target = $region20
        $region19: #{tpu_custom_call.1} parent=11 // pred_region
          %s164 = ssub.s32 9216, 9216
          %165 = vsyncadd [#allocation7], %s164
          %s166 = sshll.u32 [#allocation8], 4
          %s167 = int_to_ptr.vmem [resolvable:$true] %s166
          %172 = dma.hbm_to_vmem [thread:$0]  %s2, 9216, %s167, [#allocation7], 192, 192, 12
        $region20: #{tpu_custom_call.1} parent=11 // pred_fallthru
          _
        // Predicated region
        $region21: #{tpu_custom_call.1} parent=11 // pred_check
          %p173 = pneg %p106
        $region22: #{tpu_custom_call.1} parent=11 // pred_check_branch
          %175 = sbr.rel (%p173) target = $region24
        $region23: #{tpu_custom_call.1} parent=11 // pred_region
          _
        $region24: #{tpu_custom_call.1} parent=11 // pred_fallthru
          _
      $region12: #{tpu_custom_call.1} parent=5 // pred_fallthru
        _
      %p176 = scmp.lt.s32.totalorder %s17, 2
      // Predicated region
      $region25: #{tpu_custom_call.1} parent=5 // pred_check
        %p177 = pneg %p176
      $region26: #{tpu_custom_call.1} parent=5 // pred_check_branch
        %179 = sbr.rel (%p177) target = $region28
      $region27: #{tpu_custom_call.1} parent=5 // pred_region
        // Predicated region
        $region29: #{tpu_custom_call.1} parent=27 // pred_check
          %p180 = pneg %p37
        $region30: #{tpu_custom_call.1} parent=27 // pred_check_branch
          %182 = sbr.rel (%p180) target = $region32
        $region31: #{tpu_custom_call.1} parent=27 // pred_region
          %s183 = sand.u32 %s27, 1
          %s184 = scalar_lea.sflag [#allocation4], %s183
          %s185 = sand.u32 %s27, 1
          %s186 = smul.addr %s185, 24
          %s187 = scalar_lea.vmem [#allocation3], %s186
          %s189 = ssub.s32 384, 384
          %190 = vsyncadd %s184, %s189
          %s191 = smul.addr %s17, 6
          %s192 = smul.addr %s191, 64
          %s193 = scalar_lea.hbm %s0, %s192
          %s194 = sshll.u32 %s187, 4
          %s195 = int_to_ptr.vmem [resolvable:$true] %s194
          %200 = dma.hbm_to_vmem [thread:$0]  %s193, 384, %s195, %s184, 192, 192, 12
        $region32: #{tpu_custom_call.1} parent=27 // pred_fallthru
          _
      $region28: #{tpu_custom_call.1} parent=5 // pred_fallthru
        _
      %p201 = scmp.le.s32.totalorder 1, %s17
      %p202 = scmp.lt.s32.totalorder %s17, 3
      %p203 = pnand %p201, %p202
      %p204 = pneg %p203
      // Predicated region
      $region33: #{tpu_custom_call.1} parent=5 // pred_check
        _
      $region34: #{tpu_custom_call.1} parent=5 // pred_check_branch
        %206 = sbr.rel (%p203) target = $region36
      $region35: #{tpu_custom_call.1} parent=5 // pred_region
        %s207 = ssub.s32 %s17, 1
        %s208 = sand.u32 %s30, 1
        %s209 = scalar_lea.sflag [#allocation4], %s208
        %s210 = sand.u32 %s30, 1
        %s211 = smul.addr %s210, 24
        %s212 = scalar_lea.vmem [#allocation3], %s211
        // Predicated region
        $region37: #{tpu_custom_call.1} parent=35 // pred_check
          %p213 = pneg %p43
        $region38: #{tpu_custom_call.1} parent=35 // pred_check_branch
          %215 = sbr.rel (%p213) target = $region40
        $region39: #{tpu_custom_call.1} parent=35 // pred_region
          %216 = dma.done %s209, 384
        $region40: #{tpu_custom_call.1} parent=35 // pred_fallthru
          _
        // Predicated region
        $region41: #{tpu_custom_call.1} parent=35 // pred_check
          %p217 = pneg %p64
        $region42: #{tpu_custom_call.1} parent=35 // pred_check_branch
          %219 = sbr.rel (%p217) target = $region44
        $region43: #{tpu_custom_call.1} parent=35 // pred_region
          %220 = dma.done [#allocation7], 27648
        $region44: #{tpu_custom_call.1} parent=35 // pred_fallthru
          _
        // Predicated region
        $region45: #{tpu_custom_call.1} parent=35 // pred_check
          %p221 = pneg %p85
        $region46: #{tpu_custom_call.1} parent=35 // pred_check_branch
          %223 = sbr.rel (%p221) target = $region48
        $region47: #{tpu_custom_call.1} parent=35 // pred_region
          %224 = dma.done [#allocation7], 9216
        $region48: #{tpu_custom_call.1} parent=35 // pred_fallthru
          _
        %s225 = sand.u32 %s30, 1
        %s226 = scalar_lea.sflag [#allocation4], %s225
        %s227 = sand.u32 %s30, 1
        %s228 = smul.addr %s227, 24
        %s229 = scalar_lea.vmem [#allocation3], %s228
        %p230 = pneg %p43
        %p231 = pneg %p40
        %p232 = pneg %p64
        %p233 = pneg %p61
        %p234 = pneg %p85
        %p235 = pneg %p82
        %p236 = pneg %p106
        %p237 = pneg %p103
        %p238 = pneg %p132
        %p239 = pneg %p129
        %s240 = sand.u32 %s119, 1
        %s241 = scalar_lea.sflag [#allocation5], %s240
        %s242 = sand.u32 %s119, 1
        %s243 = smul.addr %s242, 24
        %s244 = scalar_lea.vmem [#allocation9], %s243
        %v246 = vld [vmem:[%s212] sm:$0xff]
        %v247 = vld [vmem:[%s212 + $0x8] sm:$0xf]
        %v248 = vld [vmem:[%s212 + $0xc] sm:$0xff]
        %v249 = vld [vmem:[%s212 + $0x14] sm:$0xf]
        %v250 = vld [vmem:[#allocation6] sm:$0xff]
        %v251 = vld [vmem:[#allocation6 + $0x8] sm:$0xff]
        %v252 = vld [vmem:[#allocation6 + $0x10] sm:$0xff]
        %v253 = vld [vmem:[#allocation6 + $0x18] sm:$0xff]
        %v254 = vld [vmem:[#allocation6 + $0x20] sm:$0xf]
        %v255 = vld [vmem:[#allocation6 + $0x24] sm:$0xff]
        %v256 = vld [vmem:[#allocation6 + $0x2c] sm:$0xff]
        %v257 = vld [vmem:[#allocation6 + $0x34] sm:$0xff]
        %v258 = vld [vmem:[#allocation6 + $0x3c] sm:$0xff]
        %v259 = vld [vmem:[#allocation6 + $0x44] sm:$0xf]
        %v260 = vld [vmem:[#allocation6 + $0x48] sm:$0xff]
        %v261 = vld [vmem:[#allocation6 + $0x50] sm:$0xff]
        %v262 = vld [vmem:[#allocation6 + $0x58] sm:$0xff]
        %v263 = vld [vmem:[#allocation6 + $0x60] sm:$0xff]
        %v264 = vld [vmem:[#allocation6 + $0x68] sm:$0xf]
        %v265 = vld [vmem:[#allocation6 + $0x6c] sm:$0xff]
        %v266 = vld [vmem:[#allocation6 + $0x74] sm:$0xff]
        %v267 = vld [vmem:[#allocation6 + $0x7c] sm:$0xff]
        %v268 = vld [vmem:[#allocation6 + $0x84] sm:$0xff]
        %v269 = vld [vmem:[#allocation6 + $0x8c] sm:$0xf]
        %v270 = vld [vmem:[#allocation6 + $0x90] sm:$0xff]
        %v271 = vld [vmem:[#allocation6 + $0x98] sm:$0xff]
        %v272 = vld [vmem:[#allocation6 + $0xa0] sm:$0xff]
        %v273 = vld [vmem:[#allocation6 + $0xa8] sm:$0xff]
        %v274 = vld [vmem:[#allocation6 + $0xb0] sm:$0xf]
        %v275 = vld [vmem:[#allocation6 + $0xb4] sm:$0xff]
        %v276 = vld [vmem:[#allocation6 + $0xbc] sm:$0xff]
        %v277 = vld [vmem:[#allocation6 + $0xc4] sm:$0xff]
        %v278 = vld [vmem:[#allocation6 + $0xcc] sm:$0xff]
        %v279 = vld [vmem:[#allocation6 + $0xd4] sm:$0xf]
        %v280 = vld [vmem:[#allocation6 + $0xd8] sm:$0xff]
        %v281 = vld [vmem:[#allocation6 + $0xe0] sm:$0xff]
        %v282 = vld [vmem:[#allocation6 + $0xe8] sm:$0xff]
        %v283 = vld [vmem:[#allocation6 + $0xf0] sm:$0xff]
        %v284 = vld [vmem:[#allocation6 + $0xf8] sm:$0xf]
        %v285 = vld [vmem:[#allocation6 + $0xfc] sm:$0xff]
        %v286 = vld [vmem:[#allocation6 + $0x104] sm:$0xff]
        %v287 = vld [vmem:[#allocation6 + $0x10c] sm:$0xff]
        %v288 = vld [vmem:[#allocation6 + $0x114] sm:$0xff]
        %v289 = vld [vmem:[#allocation6 + $0x11c] sm:$0xf]
        %v290 = vld [vmem:[#allocation6 + $0x120] sm:$0xff]
        %v291 = vld [vmem:[#allocation6 + $0x128] sm:$0xff]
        %v292 = vld [vmem:[#allocation6 + $0x130] sm:$0xff]
        %v293 = vld [vmem:[#allocation6 + $0x138] sm:$0xff]
        %v294 = vld [vmem:[#allocation6 + $0x140] sm:$0xf]
        %v295 = vld [vmem:[#allocation6 + $0x144] sm:$0xff]
        %v296 = vld [vmem:[#allocation6 + $0x14c] sm:$0xff]
        %v297 = vld [vmem:[#allocation6 + $0x154] sm:$0xff]
        %v298 = vld [vmem:[#allocation6 + $0x15c] sm:$0xff]
        %v299 = vld [vmem:[#allocation6 + $0x164] sm:$0xf]
        %v300 = vld [vmem:[#allocation6 + $0x168] sm:$0xff]
        %v301 = vld [vmem:[#allocation6 + $0x170] sm:$0xff]
        %v302 = vld [vmem:[#allocation6 + $0x178] sm:$0xff]
        %v303 = vld [vmem:[#allocation6 + $0x180] sm:$0xff]
        %v304 = vld [vmem:[#allocation6 + $0x188] sm:$0xf]
        %v305 = vld [vmem:[#allocation6 + $0x18c] sm:$0xff]
        %v306 = vld [vmem:[#allocation6 + $0x194] sm:$0xff]
        %v307 = vld [vmem:[#allocation6 + $0x19c] sm:$0xff]
        %v308 = vld [vmem:[#allocation6 + $0x1a4] sm:$0xff]
        %v309 = vld [vmem:[#allocation6 + $0x1ac] sm:$0xf]
        %v310 = vld [vmem:[#allocation6 + $0x1b0] sm:$0xff]
        %v311 = vld [vmem:[#allocation6 + $0x1b8] sm:$0xff]
        %v312 = vld [vmem:[#allocation6 + $0x1c0] sm:$0xff]
        %v313 = vld [vmem:[#allocation6 + $0x1c8] sm:$0xff]
        %v314 = vld [vmem:[#allocation6 + $0x1d0] sm:$0xf]
        %v315 = vld [vmem:[#allocation6 + $0x1d4] sm:$0xff]
        %v316 = vld [vmem:[#allocation6 + $0x1dc] sm:$0xff]
        %v317 = vld [vmem:[#allocation6 + $0x1e4] sm:$0xff]
        %v318 = vld [vmem:[#allocation6 + $0x1ec] sm:$0xff]
        %v319 = vld [vmem:[#allocation6 + $0x1f4] sm:$0xf]
        %v320 = vld [vmem:[#allocation6 + $0x1f8] sm:$0xff]
        %v321 = vld [vmem:[#allocation6 + $0x200] sm:$0xff]
        %v322 = vld [vmem:[#allocation6 + $0x208] sm:$0xff]
        %v323 = vld [vmem:[#allocation6 + $0x210] sm:$0xff]
        %v324 = vld [vmem:[#allocation6 + $0x218] sm:$0xf]
        %v325 = vld [vmem:[#allocation6 + $0x21c] sm:$0xff]
        %v326 = vld [vmem:[#allocation6 + $0x224] sm:$0xff]
        %v327 = vld [vmem:[#allocation6 + $0x22c] sm:$0xff]
        %v328 = vld [vmem:[#allocation6 + $0x234] sm:$0xff]
        %v329 = vld [vmem:[#allocation6 + $0x23c] sm:$0xf]
        %v330 = vld [vmem:[#allocation6 + $0x240] sm:$0xff]
        %v331 = vld [vmem:[#allocation6 + $0x248] sm:$0xff]
        %v332 = vld [vmem:[#allocation6 + $0x250] sm:$0xff]
        %v333 = vld [vmem:[#allocation6 + $0x258] sm:$0xff]
        %v334 = vld [vmem:[#allocation6 + $0x260] sm:$0xf]
        %v335 = vld [vmem:[#allocation6 + $0x264] sm:$0xff]
        %v336 = vld [vmem:[#allocation6 + $0x26c] sm:$0xff]
        %v337 = vld [vmem:[#allocation6 + $0x274] sm:$0xff]
        %v338 = vld [vmem:[#allocation6 + $0x27c] sm:$0xff]
        %v339 = vld [vmem:[#allocation6 + $0x284] sm:$0xf]
        %v340 = vld [vmem:[#allocation6 + $0x288] sm:$0xff]
        %v341 = vld [vmem:[#allocation6 + $0x290] sm:$0xff]
        %v342 = vld [vmem:[#allocation6 + $0x298] sm:$0xff]
        %v343 = vld [vmem:[#allocation6 + $0x2a0] sm:$0xff]
        %v344 = vld [vmem:[#allocation6 + $0x2a8] sm:$0xf]
        %v345 = vld [vmem:[#allocation6 + $0x2ac] sm:$0xff]
        %v346 = vld [vmem:[#allocation6 + $0x2b4] sm:$0xff]
        %v347 = vld [vmem:[#allocation6 + $0x2bc] sm:$0xff]
        %v348 = vld [vmem:[#allocation6 + $0x2c4] sm:$0xff]
        %v349 = vld [vmem:[#allocation6 + $0x2cc] sm:$0xf]
        %v350 = vld [vmem:[#allocation6 + $0x2d0] sm:$0xff]
        %v351 = vld [vmem:[#allocation6 + $0x2d8] sm:$0xff]
        %v352 = vld [vmem:[#allocation6 + $0x2e0] sm:$0xff]
        %v353 = vld [vmem:[#allocation6 + $0x2e8] sm:$0xff]
        %v354 = vld [vmem:[#allocation6 + $0x2f0] sm:$0xf]
        %v355 = vld [vmem:[#allocation6 + $0x2f4] sm:$0xff]
        %v356 = vld [vmem:[#allocation6 + $0x2fc] sm:$0xff]
        %v357 = vld [vmem:[#allocation6 + $0x304] sm:$0xff]
        %v358 = vld [vmem:[#allocation6 + $0x30c] sm:$0xff]
        %v359 = vld [vmem:[#allocation6 + $0x314] sm:$0xf]
        %v360 = vld [vmem:[#allocation6 + $0x318] sm:$0xff]
        %v361 = vld [vmem:[#allocation6 + $0x320] sm:$0xff]
        %v362 = vld [vmem:[#allocation6 + $0x328] sm:$0xff]
        %v363 = vld [vmem:[#allocation6 + $0x330] sm:$0xff]
        %v364 = vld [vmem:[#allocation6 + $0x338] sm:$0xf]
        %v365 = vld [vmem:[#allocation6 + $0x33c] sm:$0xff]
        %v366 = vld [vmem:[#allocation6 + $0x344] sm:$0xff]
        %v367 = vld [vmem:[#allocation6 + $0x34c] sm:$0xff]
        %v368 = vld [vmem:[#allocation6 + $0x354] sm:$0xff]
        %v369 = vld [vmem:[#allocation6 + $0x35c] sm:$0xf]
        %v370 = vld [vmem:[#allocation6 + $0x360] sm:$0xff]
        %v371 = vld [vmem:[#allocation6 + $0x368] sm:$0xff]
        %v372 = vld [vmem:[#allocation6 + $0x370] sm:$0xff]
        %v373 = vld [vmem:[#allocation6 + $0x378] sm:$0xff]
        %v374 = vld [vmem:[#allocation6 + $0x380] sm:$0xf]
        %v375 = vld [vmem:[#allocation6 + $0x384] sm:$0xff]
        %v376 = vld [vmem:[#allocation6 + $0x38c] sm:$0xff]
        %v377 = vld [vmem:[#allocation6 + $0x394] sm:$0xff]
        %v378 = vld [vmem:[#allocation6 + $0x39c] sm:$0xff]
        %v379 = vld [vmem:[#allocation6 + $0x3a4] sm:$0xf]
        %v380 = vld [vmem:[#allocation6 + $0x3a8] sm:$0xff]
        %v381 = vld [vmem:[#allocation6 + $0x3b0] sm:$0xff]
        %v382 = vld [vmem:[#allocation6 + $0x3b8] sm:$0xff]
        %v383 = vld [vmem:[#allocation6 + $0x3c0] sm:$0xff]
        %v384 = vld [vmem:[#allocation6 + $0x3c8] sm:$0xf]
        %v385 = vld [vmem:[#allocation6 + $0x3cc] sm:$0xff]
        %v386 = vld [vmem:[#allocation6 + $0x3d4] sm:$0xff]
        %v387 = vld [vmem:[#allocation6 + $0x3dc] sm:$0xff]
        %v388 = vld [vmem:[#allocation6 + $0x3e4] sm:$0xff]
        %v389 = vld [vmem:[#allocation6 + $0x3ec] sm:$0xf]
        %v390 = vld [vmem:[#allocation6 + $0x3f0] sm:$0xff]
        %v391 = vld [vmem:[#allocation6 + $0x3f8] sm:$0xff]
        %v392 = vld [vmem:[#allocation6 + $0x400] sm:$0xff]
        %v393 = vld [vmem:[#allocation6 + $0x408] sm:$0xff]
        %v394 = vld [vmem:[#allocation6 + $0x410] sm:$0xf]
        %v395 = vld [vmem:[#allocation6 + $0x414] sm:$0xff]
        %v396 = vld [vmem:[#allocation6 + $0x41c] sm:$0xff]
        %v397 = vld [vmem:[#allocation6 + $0x424] sm:$0xff]
        %v398 = vld [vmem:[#allocation6 + $0x42c] sm:$0xff]
        %v399 = vld [vmem:[#allocation6 + $0x434] sm:$0xf]
        %v400 = vld [vmem:[#allocation6 + $0x438] sm:$0xff]
        %v401 = vld [vmem:[#allocation6 + $0x440] sm:$0xff]
        %v402 = vld [vmem:[#allocation6 + $0x448] sm:$0xff]
        %v403 = vld [vmem:[#allocation6 + $0x450] sm:$0xff]
        %v404 = vld [vmem:[#allocation6 + $0x458] sm:$0xf]
        %v405 = vld [vmem:[#allocation6 + $0x45c] sm:$0xff]
        %v406 = vld [vmem:[#allocation6 + $0x464] sm:$0xff]
        %v407 = vld [vmem:[#allocation6 + $0x46c] sm:$0xff]
        %v408 = vld [vmem:[#allocation6 + $0x474] sm:$0xff]
        %v409 = vld [vmem:[#allocation6 + $0x47c] sm:$0xf]
        %v410 = vld [vmem:[#allocation6 + $0x480] sm:$0xff]
        %v411 = vld [vmem:[#allocation6 + $0x488] sm:$0xff]
        %v412 = vld [vmem:[#allocation6 + $0x490] sm:$0xff]
        %v413 = vld [vmem:[#allocation6 + $0x498] sm:$0xff]
        %v414 = vld [vmem:[#allocation6 + $0x4a0] sm:$0xf]
        %v415 = vld [vmem:[#allocation6 + $0x4a4] sm:$0xff]
        %v416 = vld [vmem:[#allocation6 + $0x4ac] sm:$0xff]
        %v417 = vld [vmem:[#allocation6 + $0x4b4] sm:$0xff]
        %v418 = vld [vmem:[#allocation6 + $0x4bc] sm:$0xff]
        %v419 = vld [vmem:[#allocation6 + $0x4c4] sm:$0xf]
        %v420 = vld [vmem:[#allocation6 + $0x4c8] sm:$0xff]
        %v421 = vld [vmem:[#allocation6 + $0x4d0] sm:$0xff]
        %v422 = vld [vmem:[#allocation6 + $0x4d8] sm:$0xff]
        %v423 = vld [vmem:[#allocation6 + $0x4e0] sm:$0xff]
        %v424 = vld [vmem:[#allocation6 + $0x4e8] sm:$0xf]
        %v425 = vld [vmem:[#allocation6 + $0x4ec] sm:$0xff]
        %v426 = vld [vmem:[#allocation6 + $0x4f4] sm:$0xff]
        %v427 = vld [vmem:[#allocation6 + $0x4fc] sm:$0xff]
        %v428 = vld [vmem:[#allocation6 + $0x504] sm:$0xff]
        %v429 = vld [vmem:[#allocation6 + $0x50c] sm:$0xf]
        %v430 = vld [vmem:[#allocation6 + $0x510] sm:$0xff]
        %v431 = vld [vmem:[#allocation6 + $0x518] sm:$0xff]
        %v432 = vld [vmem:[#allocation6 + $0x520] sm:$0xff]
        %v433 = vld [vmem:[#allocation6 + $0x528] sm:$0xff]
        %v434 = vld [vmem:[#allocation6 + $0x530] sm:$0xf]
        %v435 = vld [vmem:[#allocation6 + $0x534] sm:$0xff]
        %v436 = vld [vmem:[#allocation6 + $0x53c] sm:$0xff]
        %v437 = vld [vmem:[#allocation6 + $0x544] sm:$0xff]
        %v438 = vld [vmem:[#allocation6 + $0x54c] sm:$0xff]
        %v439 = vld [vmem:[#allocation6 + $0x554] sm:$0xf]
        %v440 = vld [vmem:[#allocation6 + $0x558] sm:$0xff]
        %v441 = vld [vmem:[#allocation6 + $0x560] sm:$0xff]
        %v442 = vld [vmem:[#allocation6 + $0x568] sm:$0xff]
        %v443 = vld [vmem:[#allocation6 + $0x570] sm:$0xff]
        %v444 = vld [vmem:[#allocation6 + $0x578] sm:$0xf]
        %v445 = vld [vmem:[#allocation6 + $0x57c] sm:$0xff]
        %v446 = vld [vmem:[#allocation6 + $0x584] sm:$0xff]
        %v447 = vld [vmem:[#allocation6 + $0x58c] sm:$0xff]
        %v448 = vld [vmem:[#allocation6 + $0x594] sm:$0xff]
        %v449 = vld [vmem:[#allocation6 + $0x59c] sm:$0xf]
        %v450 = vld [vmem:[#allocation6 + $0x5a0] sm:$0xff]
        %v451 = vld [vmem:[#allocation6 + $0x5a8] sm:$0xff]
        %v452 = vld [vmem:[#allocation6 + $0x5b0] sm:$0xff]
        %v453 = vld [vmem:[#allocation6 + $0x5b8] sm:$0xff]
        %v454 = vld [vmem:[#allocation6 + $0x5c0] sm:$0xf]
        %v455 = vld [vmem:[#allocation6 + $0x5c4] sm:$0xff]
        %v456 = vld [vmem:[#allocation6 + $0x5cc] sm:$0xff]
        %v457 = vld [vmem:[#allocation6 + $0x5d4] sm:$0xff]
        %v458 = vld [vmem:[#allocation6 + $0x5dc] sm:$0xff]
        %v459 = vld [vmem:[#allocation6 + $0x5e4] sm:$0xf]
        %v460 = vld [vmem:[#allocation6 + $0x5e8] sm:$0xff]
        %v461 = vld [vmem:[#allocation6 + $0x5f0] sm:$0xff]
        %v462 = vld [vmem:[#allocation6 + $0x5f8] sm:$0xff]
        %v463 = vld [vmem:[#allocation6 + $0x600] sm:$0xff]
        %v464 = vld [vmem:[#allocation6 + $0x608] sm:$0xf]
        %v465 = vld [vmem:[#allocation6 + $0x60c] sm:$0xff]
        %v466 = vld [vmem:[#allocation6 + $0x614] sm:$0xff]
        %v467 = vld [vmem:[#allocation6 + $0x61c] sm:$0xff]
        %v468 = vld [vmem:[#allocation6 + $0x624] sm:$0xff]
        %v469 = vld [vmem:[#allocation6 + $0x62c] sm:$0xf]
        %v470 = vld [vmem:[#allocation6 + $0x630] sm:$0xff]
        %v471 = vld [vmem:[#allocation6 + $0x638] sm:$0xff]
        %v472 = vld [vmem:[#allocation6 + $0x640] sm:$0xff]
        %v473 = vld [vmem:[#allocation6 + $0x648] sm:$0xff]
        %v474 = vld [vmem:[#allocation6 + $0x650] sm:$0xf]
        %v475 = vld [vmem:[#allocation6 + $0x654] sm:$0xff]
        %v476 = vld [vmem:[#allocation6 + $0x65c] sm:$0xff]
        %v477 = vld [vmem:[#allocation6 + $0x664] sm:$0xff]
        %v478 = vld [vmem:[#allocation6 + $0x66c] sm:$0xff]
        %v479 = vld [vmem:[#allocation6 + $0x674] sm:$0xf]
        %v480 = vld [vmem:[#allocation6 + $0x678] sm:$0xff]
        %v481 = vld [vmem:[#allocation6 + $0x680] sm:$0xff]
        %v482 = vld [vmem:[#allocation6 + $0x688] sm:$0xff]
        %v483 = vld [vmem:[#allocation6 + $0x690] sm:$0xff]
        %v484 = vld [vmem:[#allocation6 + $0x698] sm:$0xf]
        %v485 = vld [vmem:[#allocation6 + $0x69c] sm:$0xff]
        %v486 = vld [vmem:[#allocation6 + $0x6a4] sm:$0xff]
        %v487 = vld [vmem:[#allocation6 + $0x6ac] sm:$0xff]
        %v488 = vld [vmem:[#allocation6 + $0x6b4] sm:$0xff]
        %v489 = vld [vmem:[#allocation6 + $0x6bc] sm:$0xf]
        %v494 = vunpack.c.l.b16 %v246
        %v495 = vunpack.c.h.b16 %v246
        %v496 = vunpack.c.l.b16 %v247
        %v497 = vunpack.c.l.b16 %v248
        %v498 = vunpack.c.h.b16 %v248
        %v499 = vunpack.c.l.b16 %v249
        %v500 = vpack.c.b16 %v497, %v494
        %v501 = vpack.c.b16 %v498, %v495
        %v502 = vpack.c.b16 %v499, %v496
        %v746 = vunpack.c.l.b16 %v250
        %v747 = vunpack.c.h.b16 %v250
        %v748 = vunpack.c.l.b16 %v251
        %v749 = vunpack.c.h.b16 %v251
        %v750 = vunpack.c.l.b16 %v252
        %v751 = vunpack.c.h.b16 %v252
        %v752 = vunpack.c.l.b16 %v253
        %v753 = vunpack.c.h.b16 %v253
        %v754 = vunpack.c.l.b16 %v254
        %v755 = vunpack.c.l.b16 %v255
        %v756 = vunpack.c.h.b16 %v255
        %v757 = vunpack.c.l.b16 %v256
        %v758 = vunpack.c.h.b16 %v256
        %v759 = vunpack.c.l.b16 %v257
        %v760 = vunpack.c.h.b16 %v257
        %v761 = vunpack.c.l.b16 %v258
        %v762 = vunpack.c.h.b16 %v258
        %v763 = vunpack.c.l.b16 %v259
        %v764 = vunpack.c.l.b16 %v260
        %v765 = vunpack.c.h.b16 %v260
        %v766 = vunpack.c.l.b16 %v261
        %v767 = vunpack.c.h.b16 %v261
        %v768 = vunpack.c.l.b16 %v262
        %v769 = vunpack.c.h.b16 %v262
        %v770 = vunpack.c.l.b16 %v263
        %v771 = vunpack.c.h.b16 %v263
        %v772 = vunpack.c.l.b16 %v264
        %v773 = vunpack.c.l.b16 %v265
        %v774 = vunpack.c.h.b16 %v265
        %v775 = vunpack.c.l.b16 %v266
        %v776 = vunpack.c.h.b16 %v266
        %v777 = vunpack.c.l.b16 %v267
        %v778 = vunpack.c.h.b16 %v267
        %v779 = vunpack.c.l.b16 %v268
        %v780 = vunpack.c.h.b16 %v268
        %v781 = vunpack.c.l.b16 %v269
        %v782 = vunpack.c.l.b16 %v270
        %v783 = vunpack.c.h.b16 %v270
        %v784 = vunpack.c.l.b16 %v271
        %v785 = vunpack.c.h.b16 %v271
        %v786 = vunpack.c.l.b16 %v272
        %v787 = vunpack.c.h.b16 %v272
        %v788 = vunpack.c.l.b16 %v273
        %v789 = vunpack.c.h.b16 %v273
        %v790 = vunpack.c.l.b16 %v274
        %v791 = vunpack.c.l.b16 %v275
        %v792 = vunpack.c.h.b16 %v275
        %v793 = vunpack.c.l.b16 %v276
        %v794 = vunpack.c.h.b16 %v276
        %v795 = vunpack.c.l.b16 %v277
        %v796 = vunpack.c.h.b16 %v277
        %v797 = vunpack.c.l.b16 %v278
        %v798 = vunpack.c.h.b16 %v278
        %v799 = vunpack.c.l.b16 %v279
        %v800 = vunpack.c.l.b16 %v280
        %v801 = vunpack.c.h.b16 %v280
        %v802 = vunpack.c.l.b16 %v281
        %v803 = vunpack.c.h.b16 %v281
        %v804 = vunpack.c.l.b16 %v282
        %v805 = vunpack.c.h.b16 %v282
        %v806 = vunpack.c.l.b16 %v283
        %v807 = vunpack.c.h.b16 %v283
        %v808 = vunpack.c.l.b16 %v284
        %v809 = vunpack.c.l.b16 %v285
        %v810 = vunpack.c.h.b16 %v285
        %v811 = vunpack.c.l.b16 %v286
        %v812 = vunpack.c.h.b16 %v286
        %v813 = vunpack.c.l.b16 %v287
        %v814 = vunpack.c.h.b16 %v287
        %v815 = vunpack.c.l.b16 %v288
        %v816 = vunpack.c.h.b16 %v288
        %v817 = vunpack.c.l.b16 %v289
        %v818 = vunpack.c.l.b16 %v290
        %v819 = vunpack.c.h.b16 %v290
        %v820 = vunpack.c.l.b16 %v291
        %v821 = vunpack.c.h.b16 %v291
        %v822 = vunpack.c.l.b16 %v292
        %v823 = vunpack.c.h.b16 %v292
        %v824 = vunpack.c.l.b16 %v293
        %v825 = vunpack.c.h.b16 %v293
        %v826 = vunpack.c.l.b16 %v294
        %v827 = vunpack.c.l.b16 %v295
        %v828 = vunpack.c.h.b16 %v295
        %v829 = vunpack.c.l.b16 %v296
        %v830 = vunpack.c.h.b16 %v296
        %v831 = vunpack.c.l.b16 %v297
        %v832 = vunpack.c.h.b16 %v297
        %v833 = vunpack.c.l.b16 %v298
        %v834 = vunpack.c.h.b16 %v298
        %v835 = vunpack.c.l.b16 %v299
        %v836 = vunpack.c.l.b16 %v300
        %v837 = vunpack.c.h.b16 %v300
        %v838 = vunpack.c.l.b16 %v301
        %v839 = vunpack.c.h.b16 %v301
        %v840 = vunpack.c.l.b16 %v302
        %v841 = vunpack.c.h.b16 %v302
        %v842 = vunpack.c.l.b16 %v303
        %v843 = vunpack.c.h.b16 %v303
        %v844 = vunpack.c.l.b16 %v304
        %v845 = vunpack.c.l.b16 %v305
        %v846 = vunpack.c.h.b16 %v305
        %v847 = vunpack.c.l.b16 %v306
        %v848 = vunpack.c.h.b16 %v306
        %v849 = vunpack.c.l.b16 %v307
        %v850 = vunpack.c.h.b16 %v307
        %v851 = vunpack.c.l.b16 %v308
        %v852 = vunpack.c.h.b16 %v308
        %v853 = vunpack.c.l.b16 %v309
        %v854 = vunpack.c.l.b16 %v310
        %v855 = vunpack.c.h.b16 %v310
        %v856 = vunpack.c.l.b16 %v311
        %v857 = vunpack.c.h.b16 %v311
        %v858 = vunpack.c.l.b16 %v312
        %v859 = vunpack.c.h.b16 %v312
        %v860 = vunpack.c.l.b16 %v313
        %v861 = vunpack.c.h.b16 %v313
        %v862 = vunpack.c.l.b16 %v314
        %v863 = vunpack.c.l.b16 %v315
        %v864 = vunpack.c.h.b16 %v315
        %v865 = vunpack.c.l.b16 %v316
        %v866 = vunpack.c.h.b16 %v316
        %v867 = vunpack.c.l.b16 %v317
        %v868 = vunpack.c.h.b16 %v317
        %v869 = vunpack.c.l.b16 %v318
        %v870 = vunpack.c.h.b16 %v318
        %v871 = vunpack.c.l.b16 %v319
        %v872 = vunpack.c.l.b16 %v320
        %v873 = vunpack.c.h.b16 %v320
        %v874 = vunpack.c.l.b16 %v321
        %v875 = vunpack.c.h.b16 %v321
        %v876 = vunpack.c.l.b16 %v322
        %v877 = vunpack.c.h.b16 %v322
        %v878 = vunpack.c.l.b16 %v323
        %v879 = vunpack.c.h.b16 %v323
        %v880 = vunpack.c.l.b16 %v324
        %v881 = vunpack.c.l.b16 %v325
        %v882 = vunpack.c.h.b16 %v325
        %v883 = vunpack.c.l.b16 %v326
        %v884 = vunpack.c.h.b16 %v326
        %v885 = vunpack.c.l.b16 %v327
        %v886 = vunpack.c.h.b16 %v327
        %v887 = vunpack.c.l.b16 %v328
        %v888 = vunpack.c.h.b16 %v328
        %v889 = vunpack.c.l.b16 %v329
        %v890 = vunpack.c.l.b16 %v330
        %v891 = vunpack.c.h.b16 %v330
        %v892 = vunpack.c.l.b16 %v331
        %v893 = vunpack.c.h.b16 %v331
        %v894 = vunpack.c.l.b16 %v332
        %v895 = vunpack.c.h.b16 %v332
        %v896 = vunpack.c.l.b16 %v333
        %v897 = vunpack.c.h.b16 %v333
        %v898 = vunpack.c.l.b16 %v334
        %v899 = vunpack.c.l.b16 %v335
        %v900 = vunpack.c.h.b16 %v335
        %v901 = vunpack.c.l.b16 %v336
        %v902 = vunpack.c.h.b16 %v336
        %v903 = vunpack.c.l.b16 %v337
        %v904 = vunpack.c.h.b16 %v337
        %v905 = vunpack.c.l.b16 %v338
        %v906 = vunpack.c.h.b16 %v338
        %v907 = vunpack.c.l.b16 %v339
        %v908 = vunpack.c.l.b16 %v340
        %v909 = vunpack.c.h.b16 %v340
        %v910 = vunpack.c.l.b16 %v341
        %v911 = vunpack.c.h.b16 %v341
        %v912 = vunpack.c.l.b16 %v342
        %v913 = vunpack.c.h.b16 %v342
        %v914 = vunpack.c.l.b16 %v343
        %v915 = vunpack.c.h.b16 %v343
        %v916 = vunpack.c.l.b16 %v344
        %v917 = vunpack.c.l.b16 %v345
        %v918 = vunpack.c.h.b16 %v345
        %v919 = vunpack.c.l.b16 %v346
        %v920 = vunpack.c.h.b16 %v346
        %v921 = vunpack.c.l.b16 %v347
        %v922 = vunpack.c.h.b16 %v347
        %v923 = vunpack.c.l.b16 %v348
        %v924 = vunpack.c.h.b16 %v348
        %v925 = vunpack.c.l.b16 %v349
        %v926 = vunpack.c.l.b16 %v350
        %v927 = vunpack.c.h.b16 %v350
        %v928 = vunpack.c.l.b16 %v351
        %v929 = vunpack.c.h.b16 %v351
        %v930 = vunpack.c.l.b16 %v352
        %v931 = vunpack.c.h.b16 %v352
        %v932 = vunpack.c.l.b16 %v353
        %v933 = vunpack.c.h.b16 %v353
        %v934 = vunpack.c.l.b16 %v354
        %v935 = vunpack.c.l.b16 %v355
        %v936 = vunpack.c.h.b16 %v355
        %v937 = vunpack.c.l.b16 %v356
        %v938 = vunpack.c.h.b16 %v356
        %v939 = vunpack.c.l.b16 %v357
        %v940 = vunpack.c.h.b16 %v357
        %v941 = vunpack.c.l.b16 %v358
        %v942 = vunpack.c.h.b16 %v358
        %v943 = vunpack.c.l.b16 %v359
        %v944 = vunpack.c.l.b16 %v360
        %v945 = vunpack.c.h.b16 %v360
        %v946 = vunpack.c.l.b16 %v361
        %v947 = vunpack.c.h.b16 %v361
        %v948 = vunpack.c.l.b16 %v362
        %v949 = vunpack.c.h.b16 %v362
        %v950 = vunpack.c.l.b16 %v363
        %v951 = vunpack.c.h.b16 %v363
        %v952 = vunpack.c.l.b16 %v364
        %v953 = vunpack.c.l.b16 %v365
        %v954 = vunpack.c.h.b16 %v365
        %v955 = vunpack.c.l.b16 %v366
        %v956 = vunpack.c.h.b16 %v366
        %v957 = vunpack.c.l.b16 %v367
        %v958 = vunpack.c.h.b16 %v367
        %v959 = vunpack.c.l.b16 %v368
        %v960 = vunpack.c.h.b16 %v368
        %v961 = vunpack.c.l.b16 %v369
        %v962 = vunpack.c.l.b16 %v370
        %v963 = vunpack.c.h.b16 %v370
        %v964 = vunpack.c.l.b16 %v371
        %v965 = vunpack.c.h.b16 %v371
        %v966 = vunpack.c.l.b16 %v372
        %v967 = vunpack.c.h.b16 %v372
        %v968 = vunpack.c.l.b16 %v373
        %v969 = vunpack.c.h.b16 %v373
        %v970 = vunpack.c.l.b16 %v374
        %v971 = vunpack.c.l.b16 %v375
        %v972 = vunpack.c.h.b16 %v375
        %v973 = vunpack.c.l.b16 %v376
        %v974 = vunpack.c.h.b16 %v376
        %v975 = vunpack.c.l.b16 %v377
        %v976 = vunpack.c.h.b16 %v377
        %v977 = vunpack.c.l.b16 %v378
        %v978 = vunpack.c.h.b16 %v378
        %v979 = vunpack.c.l.b16 %v379
        %v980 = vunpack.c.l.b16 %v380
        %v981 = vunpack.c.h.b16 %v380
        %v982 = vunpack.c.l.b16 %v381
        %v983 = vunpack.c.h.b16 %v381
        %v984 = vunpack.c.l.b16 %v382
        %v985 = vunpack.c.h.b16 %v382
        %v986 = vunpack.c.l.b16 %v383
        %v987 = vunpack.c.h.b16 %v383
        %v988 = vunpack.c.l.b16 %v384
        %v989 = vunpack.c.l.b16 %v385
        %v990 = vunpack.c.h.b16 %v385
        %v991 = vunpack.c.l.b16 %v386
        %v992 = vunpack.c.h.b16 %v386
        %v993 = vunpack.c.l.b16 %v387
        %v994 = vunpack.c.h.b16 %v387
        %v995 = vunpack.c.l.b16 %v388
        %v996 = vunpack.c.h.b16 %v388
        %v997 = vunpack.c.l.b16 %v389
        %v998 = vunpack.c.l.b16 %v390
        %v999 = vunpack.c.h.b16 %v390
        %v1000 = vunpack.c.l.b16 %v391
        %v1001 = vunpack.c.h.b16 %v391
        %v1002 = vunpack.c.l.b16 %v392
        %v1003 = vunpack.c.h.b16 %v392
        %v1004 = vunpack.c.l.b16 %v393
        %v1005 = vunpack.c.h.b16 %v393
        %v1006 = vunpack.c.l.b16 %v394
        %v1007 = vunpack.c.l.b16 %v395
        %v1008 = vunpack.c.h.b16 %v395
        %v1009 = vunpack.c.l.b16 %v396
        %v1010 = vunpack.c.h.b16 %v396
        %v1011 = vunpack.c.l.b16 %v397
        %v1012 = vunpack.c.h.b16 %v397
        %v1013 = vunpack.c.l.b16 %v398
        %v1014 = vunpack.c.h.b16 %v398
        %v1015 = vunpack.c.l.b16 %v399
        %v1016 = vunpack.c.l.b16 %v400
        %v1017 = vunpack.c.h.b16 %v400
        %v1018 = vunpack.c.l.b16 %v401
        %v1019 = vunpack.c.h.b16 %v401
        %v1020 = vunpack.c.l.b16 %v402
        %v1021 = vunpack.c.h.b16 %v402
        %v1022 = vunpack.c.l.b16 %v403
        %v1023 = vunpack.c.h.b16 %v403
        %v1024 = vunpack.c.l.b16 %v404
        %v1025 = vunpack.c.l.b16 %v405
        %v1026 = vunpack.c.h.b16 %v405
        %v1027 = vunpack.c.l.b16 %v406
        %v1028 = vunpack.c.h.b16 %v406
        %v1029 = vunpack.c.l.b16 %v407
        %v1030 = vunpack.c.h.b16 %v407
        %v1031 = vunpack.c.l.b16 %v408
        %v1032 = vunpack.c.h.b16 %v408
        %v1033 = vunpack.c.l.b16 %v409
        %v1034 = vunpack.c.l.b16 %v410
        %v1035 = vunpack.c.h.b16 %v410
        %v1036 = vunpack.c.l.b16 %v411
        %v1037 = vunpack.c.h.b16 %v411
        %v1038 = vunpack.c.l.b16 %v412
        %v1039 = vunpack.c.h.b16 %v412
        %v1040 = vunpack.c.l.b16 %v413
        %v1041 = vunpack.c.h.b16 %v413
        %v1042 = vunpack.c.l.b16 %v414
        %v1043 = vunpack.c.l.b16 %v415
        %v1044 = vunpack.c.h.b16 %v415
        %v1045 = vunpack.c.l.b16 %v416
        %v1046 = vunpack.c.h.b16 %v416
        %v1047 = vunpack.c.l.b16 %v417
        %v1048 = vunpack.c.h.b16 %v417
        %v1049 = vunpack.c.l.b16 %v418
        %v1050 = vunpack.c.h.b16 %v418
        %v1051 = vunpack.c.l.b16 %v419
        %v1052 = vunpack.c.l.b16 %v420
        %v1053 = vunpack.c.h.b16 %v420
        %v1054 = vunpack.c.l.b16 %v421
        %v1055 = vunpack.c.h.b16 %v421
        %v1056 = vunpack.c.l.b16 %v422
        %v1057 = vunpack.c.h.b16 %v422
        %v1058 = vunpack.c.l.b16 %v423
        %v1059 = vunpack.c.h.b16 %v423
        %v1060 = vunpack.c.l.b16 %v424
        %v1061 = vunpack.c.l.b16 %v425
        %v1062 = vunpack.c.h.b16 %v425
        %v1063 = vunpack.c.l.b16 %v426
        %v1064 = vunpack.c.h.b16 %v426
        %v1065 = vunpack.c.l.b16 %v427
        %v1066 = vunpack.c.h.b16 %v427
        %v1067 = vunpack.c.l.b16 %v428
        %v1068 = vunpack.c.h.b16 %v428
        %v1069 = vunpack.c.l.b16 %v429
        %v1070 = vunpack.c.l.b16 %v430
        %v1071 = vunpack.c.h.b16 %v430
        %v1072 = vunpack.c.l.b16 %v431
        %v1073 = vunpack.c.h.b16 %v431
        %v1074 = vunpack.c.l.b16 %v432
        %v1075 = vunpack.c.h.b16 %v432
        %v1076 = vunpack.c.l.b16 %v433
        %v1077 = vunpack.c.h.b16 %v433
        %v1078 = vunpack.c.l.b16 %v434
        %v1079 = vunpack.c.l.b16 %v435
        %v1080 = vunpack.c.h.b16 %v435
        %v1081 = vunpack.c.l.b16 %v436
        %v1082 = vunpack.c.h.b16 %v436
        %v1083 = vunpack.c.l.b16 %v437
        %v1084 = vunpack.c.h.b16 %v437
        %v1085 = vunpack.c.l.b16 %v438
        %v1086 = vunpack.c.h.b16 %v438
        %v1087 = vunpack.c.l.b16 %v439
        %v1088 = vunpack.c.l.b16 %v440
        %v1089 = vunpack.c.h.b16 %v440
        %v1090 = vunpack.c.l.b16 %v441
        %v1091 = vunpack.c.h.b16 %v441
        %v1092 = vunpack.c.l.b16 %v442
        %v1093 = vunpack.c.h.b16 %v442
        %v1094 = vunpack.c.l.b16 %v443
        %v1095 = vunpack.c.h.b16 %v443
        %v1096 = vunpack.c.l.b16 %v444
        %v1097 = vunpack.c.l.b16 %v445
        %v1098 = vunpack.c.h.b16 %v445
        %v1099 = vunpack.c.l.b16 %v446
        %v1100 = vunpack.c.h.b16 %v446
        %v1101 = vunpack.c.l.b16 %v447
        %v1102 = vunpack.c.h.b16 %v447
        %v1103 = vunpack.c.l.b16 %v448
        %v1104 = vunpack.c.h.b16 %v448
        %v1105 = vunpack.c.l.b16 %v449
        %v1106 = vunpack.c.l.b16 %v450
        %v1107 = vunpack.c.h.b16 %v450
        %v1108 = vunpack.c.l.b16 %v451
        %v1109 = vunpack.c.h.b16 %v451
        %v1110 = vunpack.c.l.b16 %v452
        %v1111 = vunpack.c.h.b16 %v452
        %v1112 = vunpack.c.l.b16 %v453
        %v1113 = vunpack.c.h.b16 %v453
        %v1114 = vunpack.c.l.b16 %v454
        %v1115 = vunpack.c.l.b16 %v455
        %v1116 = vunpack.c.h.b16 %v455
        %v1117 = vunpack.c.l.b16 %v456
        %v1118 = vunpack.c.h.b16 %v456
        %v1119 = vunpack.c.l.b16 %v457
        %v1120 = vunpack.c.h.b16 %v457
        %v1121 = vunpack.c.l.b16 %v458
        %v1122 = vunpack.c.h.b16 %v458
        %v1123 = vunpack.c.l.b16 %v459
        %v1124 = vunpack.c.l.b16 %v460
        %v1125 = vunpack.c.h.b16 %v460
        %v1126 = vunpack.c.l.b16 %v461
        %v1127 = vunpack.c.h.b16 %v461
        %v1128 = vunpack.c.l.b16 %v462
        %v1129 = vunpack.c.h.b16 %v462
        %v1130 = vunpack.c.l.b16 %v463
        %v1131 = vunpack.c.h.b16 %v463
        %v1132 = vunpack.c.l.b16 %v464
        %v1133 = vunpack.c.l.b16 %v465
        %v1134 = vunpack.c.h.b16 %v465
        %v1135 = vunpack.c.l.b16 %v466
        %v1136 = vunpack.c.h.b16 %v466
        %v1137 = vunpack.c.l.b16 %v467
        %v1138 = vunpack.c.h.b16 %v467
        %v1139 = vunpack.c.l.b16 %v468
        %v1140 = vunpack.c.h.b16 %v468
        %v1141 = vunpack.c.l.b16 %v469
        %v1142 = vunpack.c.l.b16 %v470
        %v1143 = vunpack.c.h.b16 %v470
        %v1144 = vunpack.c.l.b16 %v471
        %v1145 = vunpack.c.h.b16 %v471
        %v1146 = vunpack.c.l.b16 %v472
        %v1147 = vunpack.c.h.b16 %v472
        %v1148 = vunpack.c.l.b16 %v473
        %v1149 = vunpack.c.h.b16 %v473
        %v1150 = vunpack.c.l.b16 %v474
        %v1151 = vunpack.c.l.b16 %v475
        %v1152 = vunpack.c.h.b16 %v475
        %v1153 = vunpack.c.l.b16 %v476
        %v1154 = vunpack.c.h.b16 %v476
        %v1155 = vunpack.c.l.b16 %v477
        %v1156 = vunpack.c.h.b16 %v477
        %v1157 = vunpack.c.l.b16 %v478
        %v1158 = vunpack.c.h.b16 %v478
        %v1159 = vunpack.c.l.b16 %v479
        %v1160 = vunpack.c.l.b16 %v480
        %v1161 = vunpack.c.h.b16 %v480
        %v1162 = vunpack.c.l.b16 %v481
        %v1163 = vunpack.c.h.b16 %v481
        %v1164 = vunpack.c.l.b16 %v482
        %v1165 = vunpack.c.h.b16 %v482
        %v1166 = vunpack.c.l.b16 %v483
        %v1167 = vunpack.c.h.b16 %v483
        %v1168 = vunpack.c.l.b16 %v484
        %v1169 = vunpack.c.l.b16 %v485
        %v1170 = vunpack.c.h.b16 %v485
        %v1171 = vunpack.c.l.b16 %v486
        %v1172 = vunpack.c.h.b16 %v486
        %v1173 = vunpack.c.l.b16 %v487
        %v1174 = vunpack.c.h.b16 %v487
        %v1175 = vunpack.c.l.b16 %v488
        %v1176 = vunpack.c.h.b16 %v488
        %v1177 = vunpack.c.l.b16 %v489
        %v1178 = vpack.c.b16 %v755, %v746
        %v1179 = vpack.c.b16 %v756, %v747
        %v1180 = vpack.c.b16 %v757, %v748
        %v1181 = vpack.c.b16 %v758, %v749
        %v1182 = vpack.c.b16 %v759, %v750
        %v1183 = vpack.c.b16 %v760, %v751
        %v1184 = vpack.c.b16 %v761, %v752
        %v1185 = vpack.c.b16 %v762, %v753
        %v1186 = vpack.c.b16 %v763, %v754
        %v1187 = vpack.c.b16 %v773, %v764
        %v1188 = vpack.c.b16 %v774, %v765
        %v1189 = vpack.c.b16 %v775, %v766
        %v1190 = vpack.c.b16 %v776, %v767
        %v1191 = vpack.c.b16 %v777, %v768
        %v1192 = vpack.c.b16 %v778, %v769
        %v1193 = vpack.c.b16 %v779, %v770
        %v1194 = vpack.c.b16 %v780, %v771
        %v1195 = vpack.c.b16 %v781, %v772
        %v1196 = vpack.c.b16 %v791, %v782
        %v1197 = vpack.c.b16 %v792, %v783
        %v1198 = vpack.c.b16 %v793, %v784
        %v1199 = vpack.c.b16 %v794, %v785
        %v1200 = vpack.c.b16 %v795, %v786
        %v1201 = vpack.c.b16 %v796, %v787
        %v1202 = vpack.c.b16 %v797, %v788
        %v1203 = vpack.c.b16 %v798, %v789
        %v1204 = vpack.c.b16 %v799, %v790
        %v1205 = vpack.c.b16 %v809, %v800
        %v1206 = vpack.c.b16 %v810, %v801
        %v1207 = vpack.c.b16 %v811, %v802
        %v1208 = vpack.c.b16 %v812, %v803
        %v1209 = vpack.c.b16 %v813, %v804
        %v1210 = vpack.c.b16 %v814, %v805
        %v1211 = vpack.c.b16 %v815, %v806
        %v1212 = vpack.c.b16 %v816, %v807
        %v1213 = vpack.c.b16 %v817, %v808
        %v1214 = vpack.c.b16 %v827, %v818
        %v1215 = vpack.c.b16 %v828, %v819
        %v1216 = vpack.c.b16 %v829, %v820
        %v1217 = vpack.c.b16 %v830, %v821
        %v1218 = vpack.c.b16 %v831, %v822
        %v1219 = vpack.c.b16 %v832, %v823
        %v1220 = vpack.c.b16 %v833, %v824
        %v1221 = vpack.c.b16 %v834, %v825
        %v1222 = vpack.c.b16 %v835, %v826
        %v1223 = vpack.c.b16 %v845, %v836
        %v1224 = vpack.c.b16 %v846, %v837
        %v1225 = vpack.c.b16 %v847, %v838
        %v1226 = vpack.c.b16 %v848, %v839
        %v1227 = vpack.c.b16 %v849, %v840
        %v1228 = vpack.c.b16 %v850, %v841
        %v1229 = vpack.c.b16 %v851, %v842
        %v1230 = vpack.c.b16 %v852, %v843
        %v1231 = vpack.c.b16 %v853, %v844
        %v1232 = vpack.c.b16 %v863, %v854
        %v1233 = vpack.c.b16 %v864, %v855
        %v1234 = vpack.c.b16 %v865, %v856
        %v1235 = vpack.c.b16 %v866, %v857
        %v1236 = vpack.c.b16 %v867, %v858
        %v1237 = vpack.c.b16 %v868, %v859
        %v1238 = vpack.c.b16 %v869, %v860
        %v1239 = vpack.c.b16 %v870, %v861
        %v1240 = vpack.c.b16 %v871, %v862
        %v1241 = vpack.c.b16 %v881, %v872
        %v1242 = vpack.c.b16 %v882, %v873
        %v1243 = vpack.c.b16 %v883, %v874
        %v1244 = vpack.c.b16 %v884, %v875
        %v1245 = vpack.c.b16 %v885, %v876
        %v1246 = vpack.c.b16 %v886, %v877
        %v1247 = vpack.c.b16 %v887, %v878
        %v1248 = vpack.c.b16 %v888, %v879
        %v1249 = vpack.c.b16 %v889, %v880
        %v1250 = vpack.c.b16 %v899, %v890
        %v1251 = vpack.c.b16 %v900, %v891
        %v1252 = vpack.c.b16 %v901, %v892
        %v1253 = vpack.c.b16 %v902, %v893
        %v1254 = vpack.c.b16 %v903, %v894
        %v1255 = vpack.c.b16 %v904, %v895
        %v1256 = vpack.c.b16 %v905, %v896
        %v1257 = vpack.c.b16 %v906, %v897
        %v1258 = vpack.c.b16 %v907, %v898
        %v1259 = vpack.c.b16 %v917, %v908
        %v1260 = vpack.c.b16 %v918, %v909
        %v1261 = vpack.c.b16 %v919, %v910
        %v1262 = vpack.c.b16 %v920, %v911
        %v1263 = vpack.c.b16 %v921, %v912
        %v1264 = vpack.c.b16 %v922, %v913
        %v1265 = vpack.c.b16 %v923, %v914
        %v1266 = vpack.c.b16 %v924, %v915
        %v1267 = vpack.c.b16 %v925, %v916
        %v1268 = vpack.c.b16 %v935, %v926
        %v1269 = vpack.c.b16 %v936, %v927
        %v1270 = vpack.c.b16 %v937, %v928
        %v1271 = vpack.c.b16 %v938, %v929
        %v1272 = vpack.c.b16 %v939, %v930
        %v1273 = vpack.c.b16 %v940, %v931
        %v1274 = vpack.c.b16 %v941, %v932
        %v1275 = vpack.c.b16 %v942, %v933
        %v1276 = vpack.c.b16 %v943, %v934
        %v1277 = vpack.c.b16 %v953, %v944
        %v1278 = vpack.c.b16 %v954, %v945
        %v1279 = vpack.c.b16 %v955, %v946
        %v1280 = vpack.c.b16 %v956, %v947
        %v1281 = vpack.c.b16 %v957, %v948
        %v1282 = vpack.c.b16 %v958, %v949
        %v1283 = vpack.c.b16 %v959, %v950
        %v1284 = vpack.c.b16 %v960, %v951
        %v1285 = vpack.c.b16 %v961, %v952
        %v1286 = vpack.c.b16 %v971, %v962
        %v1287 = vpack.c.b16 %v972, %v963
        %v1288 = vpack.c.b16 %v973, %v964
        %v1289 = vpack.c.b16 %v974, %v965
        %v1290 = vpack.c.b16 %v975, %v966
        %v1291 = vpack.c.b16 %v976, %v967
        %v1292 = vpack.c.b16 %v977, %v968
        %v1293 = vpack.c.b16 %v978, %v969
        %v1294 = vpack.c.b16 %v979, %v970
        %v1295 = vpack.c.b16 %v989, %v980
        %v1296 = vpack.c.b16 %v990, %v981
        %v1297 = vpack.c.b16 %v991, %v982
        %v1298 = vpack.c.b16 %v992, %v983
        %v1299 = vpack.c.b16 %v993, %v984
        %v1300 = vpack.c.b16 %v994, %v985
        %v1301 = vpack.c.b16 %v995, %v986
        %v1302 = vpack.c.b16 %v996, %v987
        %v1303 = vpack.c.b16 %v997, %v988
        %v1304 = vpack.c.b16 %v1007, %v998
        %v1305 = vpack.c.b16 %v1008, %v999
        %v1306 = vpack.c.b16 %v1009, %v1000
        %v1307 = vpack.c.b16 %v1010, %v1001
        %v1308 = vpack.c.b16 %v1011, %v1002
        %v1309 = vpack.c.b16 %v1012, %v1003
        %v1310 = vpack.c.b16 %v1013, %v1004
        %v1311 = vpack.c.b16 %v1014, %v1005
        %v1312 = vpack.c.b16 %v1015, %v1006
        %v1313 = vpack.c.b16 %v1025, %v1016
        %v1314 = vpack.c.b16 %v1026, %v1017
        %v1315 = vpack.c.b16 %v1027, %v1018
        %v1316 = vpack.c.b16 %v1028, %v1019
        %v1317 = vpack.c.b16 %v1029, %v1020
        %v1318 = vpack.c.b16 %v1030, %v1021
        %v1319 = vpack.c.b16 %v1031, %v1022
        %v1320 = vpack.c.b16 %v1032, %v1023
        %v1321 = vpack.c.b16 %v1033, %v1024
        %v1322 = vpack.c.b16 %v1043, %v1034
        %v1323 = vpack.c.b16 %v1044, %v1035
        %v1324 = vpack.c.b16 %v1045, %v1036
        %v1325 = vpack.c.b16 %v1046, %v1037
        %v1326 = vpack.c.b16 %v1047, %v1038
        %v1327 = vpack.c.b16 %v1048, %v1039
        %v1328 = vpack.c.b16 %v1049, %v1040
        %v1329 = vpack.c.b16 %v1050, %v1041
        %v1330 = vpack.c.b16 %v1051, %v1042
        %v1331 = vpack.c.b16 %v1061, %v1052
        %v1332 = vpack.c.b16 %v1062, %v1053
        %v1333 = vpack.c.b16 %v1063, %v1054
        %v1334 = vpack.c.b16 %v1064, %v1055
        %v1335 = vpack.c.b16 %v1065, %v1056
        %v1336 = vpack.c.b16 %v1066, %v1057
        %v1337 = vpack.c.b16 %v1067, %v1058
        %v1338 = vpack.c.b16 %v1068, %v1059
        %v1339 = vpack.c.b16 %v1069, %v1060
        %v1340 = vpack.c.b16 %v1079, %v1070
        %v1341 = vpack.c.b16 %v1080, %v1071
        %v1342 = vpack.c.b16 %v1081, %v1072
        %v1343 = vpack.c.b16 %v1082, %v1073
        %v1344 = vpack.c.b16 %v1083, %v1074
        %v1345 = vpack.c.b16 %v1084, %v1075
        %v1346 = vpack.c.b16 %v1085, %v1076
        %v1347 = vpack.c.b16 %v1086, %v1077
        %v1348 = vpack.c.b16 %v1087, %v1078
        %v1349 = vpack.c.b16 %v1097, %v1088
        %v1350 = vpack.c.b16 %v1098, %v1089
        %v1351 = vpack.c.b16 %v1099, %v1090
        %v1352 = vpack.c.b16 %v1100, %v1091
        %v1353 = vpack.c.b16 %v1101, %v1092
        %v1354 = vpack.c.b16 %v1102, %v1093
        %v1355 = vpack.c.b16 %v1103, %v1094
        %v1356 = vpack.c.b16 %v1104, %v1095
        %v1357 = vpack.c.b16 %v1105, %v1096
        %v1358 = vpack.c.b16 %v1115, %v1106
        %v1359 = vpack.c.b16 %v1116, %v1107
        %v1360 = vpack.c.b16 %v1117, %v1108
        %v1361 = vpack.c.b16 %v1118, %v1109
        %v1362 = vpack.c.b16 %v1119, %v1110
        %v1363 = vpack.c.b16 %v1120, %v1111
        %v1364 = vpack.c.b16 %v1121, %v1112
        %v1365 = vpack.c.b16 %v1122, %v1113
        %v1366 = vpack.c.b16 %v1123, %v1114
        %v1367 = vpack.c.b16 %v1133, %v1124
        %v1368 = vpack.c.b16 %v1134, %v1125
        %v1369 = vpack.c.b16 %v1135, %v1126
        %v1370 = vpack.c.b16 %v1136, %v1127
        %v1371 = vpack.c.b16 %v1137, %v1128
        %v1372 = vpack.c.b16 %v1138, %v1129
        %v1373 = vpack.c.b16 %v1139, %v1130
        %v1374 = vpack.c.b16 %v1140, %v1131
        %v1375 = vpack.c.b16 %v1141, %v1132
        %v1376 = vpack.c.b16 %v1151, %v1142
        %v1377 = vpack.c.b16 %v1152, %v1143
        %v1378 = vpack.c.b16 %v1153, %v1144
        %v1379 = vpack.c.b16 %v1154, %v1145
        %v1380 = vpack.c.b16 %v1155, %v1146
        %v1381 = vpack.c.b16 %v1156, %v1147
        %v1382 = vpack.c.b16 %v1157, %v1148
        %v1383 = vpack.c.b16 %v1158, %v1149
        %v1384 = vpack.c.b16 %v1159, %v1150
        %v1385 = vpack.c.b16 %v1169, %v1160
        %v1386 = vpack.c.b16 %v1170, %v1161
        %v1387 = vpack.c.b16 %v1171, %v1162
        %v1388 = vpack.c.b16 %v1172, %v1163
        %v1389 = vpack.c.b16 %v1173, %v1164
        %v1390 = vpack.c.b16 %v1174, %v1165
        %v1391 = vpack.c.b16 %v1175, %v1166
        %v1392 = vpack.c.b16 %v1176, %v1167
        %v1393 = vpack.c.b16 %v1177, %v1168
        %1610 = vmatprep.subr.bf16.mxu0 %v1242
        %1611 = vmatpush1.bf16.msra.mxu0 %v1241
        %1612 = vmatprep.subr.bf16.mxu0 %v1233
        %1613 = vmatpush1.bf16.msra.mxu0 %v1232
        %1614 = vmatprep.subr.bf16.mxu0 %v1224
        %1615 = vmatpush1.bf16.msra.mxu0 %v1223
        %1616 = vmatprep.subr.bf16.mxu0 %v1215
        %1617 = vmatpush1.bf16.msra.mxu0 %v1214
        %1618 = vmatprep.subr.bf16.mxu0 %v1206
        %1619 = vmatpush1.bf16.msra.mxu0 %v1205
        %1620 = vmatprep.subr.bf16.mxu0 %v1197
        %1621 = vmatpush1.bf16.msra.mxu0 %v1196
        %1622 = vmatprep.subr.bf16.mxu0 %v1188
        %1623 = vmatpush1.bf16.msra.mxu0 %v1187
        %1624 = vmatprep.subr.bf16.mxu0 %v1179
        %1625 = vmatpush1.bf16.msra.mxu0 %v1178
        %1626 = vmatprep.subr.bf16.mxu0 %v1314
        %1627 = vmatpush2.bf16.msra.mxu0 %v1313
        %1628 = vmatprep.subr.bf16.mxu0 %v1305
        %1629 = vmatpush2.bf16.msra.mxu0 %v1304
        %1630 = vmatprep.subr.bf16.mxu0 %v1296
        %1631 = vmatpush2.bf16.msra.mxu0 %v1295
        %1632 = vmatprep.subr.bf16.mxu0 %v1287
        %1633 = vmatpush2.bf16.msra.mxu0 %v1286
        %1634 = vmatprep.subr.bf16.mxu0 %v1278
        %1635 = vmatpush2.bf16.msra.mxu0 %v1277
        %1636 = vmatprep.subr.bf16.mxu0 %v1269
        %1637 = vmatpush2.bf16.msra.mxu0 %v1268
        %1638 = vmatprep.subr.bf16.mxu0 %v1260
        %1639 = vmatpush2.bf16.msra.mxu0 %v1259
        %1640 = vmatprep.subr.bf16.mxu0 %v1251
        %1641 = vmatpush2.bf16.msra.mxu0 %v1250
        %1642 = vmatprep.mubr.bf16.mxu0 %v501
        %1643 = vmatmul.mubr.bf16.gmra.mxu0 %v500
        %v1644 = vpop.f32.mrf.mxu0
        %v1645 = vadd.f32 0.0, %v1644
        %v1646 = vpop.f32.mrf.mxu0
        %v1647 = vadd.f32 0.0, %v1646
        %v1648 = vpop.f32.mrf.mxu0
        %v1649 = vadd.f32 0.0, %v1648
        %v1650 = vpop.f32.mrf.mxu0
        %v1651 = vadd.f32 0.0, %v1650
        %1652 = vdwg.mxu0
        %1653 = vmatprep.subr.bf16.mxu0 %v1386
        %1654 = vmatpush1.bf16.msra.mxu0 %v1385
        %1655 = vmatprep.subr.bf16.mxu0 %v1377
        %1656 = vmatpush1.bf16.msra.mxu0 %v1376
        %1657 = vmatprep.subr.bf16.mxu0 %v1368
        %1658 = vmatpush1.bf16.msra.mxu0 %v1367
        %1659 = vmatprep.subr.bf16.mxu0 %v1359
        %1660 = vmatpush1.bf16.msra.mxu0 %v1358
        %1661 = vmatprep.subr.bf16.mxu0 %v1350
        %1662 = vmatpush1.bf16.msra.mxu0 %v1349
        %1663 = vmatprep.subr.bf16.mxu0 %v1341
        %1664 = vmatpush1.bf16.msra.mxu0 %v1340
        %1665 = vmatprep.subr.bf16.mxu0 %v1332
        %1666 = vmatpush1.bf16.msra.mxu0 %v1331
        %1667 = vmatprep.subr.bf16.mxu0 %v1323
        %1668 = vmatpush1.bf16.msra.mxu0 %v1322
        %1669 = vmatprep.subr.bf16.mxu0 0
        %1670 = vmatpush2.bf16.msra.mxu0 0
        %1671 = vmatprep.subr.bf16.mxu0 0
        %1672 = vmatpush2.bf16.msra.mxu0 0
        %1673 = vmatprep.subr.bf16.mxu0 0
        %1674 = vmatpush2.bf16.msra.mxu0 0
        %1675 = vmatprep.subr.bf16.mxu0 0
        %1676 = vmatpush2.bf16.msra.mxu0 0
        %1677 = vmatprep.subr.bf16.mxu0 0
        %1678 = vmatpush2.bf16.msra.mxu0 0
        %1679 = vmatprep.subr.bf16.mxu0 0
        %1680 = vmatpush2.bf16.msra.mxu0 0
        %1681 = vmatprep.subr.bf16.mxu0 0
        %1682 = vmatpush2.bf16.msra.mxu0 0
        %1683 = vmatprep.subr.bf16.mxu0 0
        %1684 = vmatpush2.bf16.msra.mxu0 0
        %1685 = vmatprep.mubr.bf16.mxu0 0
        %1686 = vmatmul.mubr.bf16.gmra.mxu0 %v502
        %v1687 = vpop.f32.mrf.mxu0
        %v1688 = vadd.f32 %v1645, %v1687
        %v1689 = vpop.f32.mrf.mxu0
        %v1690 = vadd.f32 %v1647, %v1689
        %v1691 = vpop.f32.mrf.mxu0
        %v1692 = vadd.f32 %v1649, %v1691
        %v1693 = vpop.f32.mrf.mxu0
        %v1694 = vadd.f32 %v1651, %v1693
        %1695 = vdwg.mxu0
        %1696 = vmatprep.subr.bf16.mxu0 %v1244
        %1697 = vmatpush1.bf16.msra.mxu0 %v1243
        %1698 = vmatprep.subr.bf16.mxu0 %v1235
        %1699 = vmatpush1.bf16.msra.mxu0 %v1234
        %1700 = vmatprep.subr.bf16.mxu0 %v1226
        %1701 = vmatpush1.bf16.msra.mxu0 %v1225
        %1702 = vmatprep.subr.bf16.mxu0 %v1217
        %1703 = vmatpush1.bf16.msra.mxu0 %v1216
        %1704 = vmatprep.subr.bf16.mxu0 %v1208
        %1705 = vmatpush1.bf16.msra.mxu0 %v1207
        %1706 = vmatprep.subr.bf16.mxu0 %v1199
        %1707 = vmatpush1.bf16.msra.mxu0 %v1198
        %1708 = vmatprep.subr.bf16.mxu0 %v1190
        %1709 = vmatpush1.bf16.msra.mxu0 %v1189
        %1710 = vmatprep.subr.bf16.mxu0 %v1181
        %1711 = vmatpush1.bf16.msra.mxu0 %v1180
        %1712 = vmatprep.subr.bf16.mxu0 %v1316
        %1713 = vmatpush2.bf16.msra.mxu0 %v1315
        %1714 = vmatprep.subr.bf16.mxu0 %v1307
        %1715 = vmatpush2.bf16.msra.mxu0 %v1306
        %1716 = vmatprep.subr.bf16.mxu0 %v1298
        %1717 = vmatpush2.bf16.msra.mxu0 %v1297
        %1718 = vmatprep.subr.bf16.mxu0 %v1289
        %1719 = vmatpush2.bf16.msra.mxu0 %v1288
        %1720 = vmatprep.subr.bf16.mxu0 %v1280
        %1721 = vmatpush2.bf16.msra.mxu0 %v1279
        %1722 = vmatprep.subr.bf16.mxu0 %v1271
        %1723 = vmatpush2.bf16.msra.mxu0 %v1270
        %1724 = vmatprep.subr.bf16.mxu0 %v1262
        %1725 = vmatpush2.bf16.msra.mxu0 %v1261
        %1726 = vmatprep.subr.bf16.mxu0 %v1253
        %1727 = vmatpush2.bf16.msra.mxu0 %v1252
        %1728 = vmatprep.mubr.bf16.mxu0 %v501
        %1729 = vmatmul.mubr.bf16.gmra.mxu0 %v500
        %v1730 = vpop.f32.mrf.mxu0
        %v1731 = vadd.f32 0.0, %v1730
        %v1732 = vpop.f32.mrf.mxu0
        %v1733 = vadd.f32 0.0, %v1732
        %v1734 = vpop.f32.mrf.mxu0
        %v1735 = vadd.f32 0.0, %v1734
        %v1736 = vpop.f32.mrf.mxu0
        %v1737 = vadd.f32 0.0, %v1736
        %1738 = vdwg.mxu0
        %1739 = vmatprep.subr.bf16.mxu0 %v1388
        %1740 = vmatpush1.bf16.msra.mxu0 %v1387
        %1741 = vmatprep.subr.bf16.mxu0 %v1379
        %1742 = vmatpush1.bf16.msra.mxu0 %v1378
        %1743 = vmatprep.subr.bf16.mxu0 %v1370
        %1744 = vmatpush1.bf16.msra.mxu0 %v1369
        %1745 = vmatprep.subr.bf16.mxu0 %v1361
        %1746 = vmatpush1.bf16.msra.mxu0 %v1360
        %1747 = vmatprep.subr.bf16.mxu0 %v1352
        %1748 = vmatpush1.bf16.msra.mxu0 %v1351
        %1749 = vmatprep.subr.bf16.mxu0 %v1343
        %1750 = vmatpush1.bf16.msra.mxu0 %v1342
        %1751 = vmatprep.subr.bf16.mxu0 %v1334
        %1752 = vmatpush1.bf16.msra.mxu0 %v1333
        %1753 = vmatprep.subr.bf16.mxu0 %v1325
        %1754 = vmatpush1.bf16.msra.mxu0 %v1324
        %1755 = vmatprep.subr.bf16.mxu0 0
        %1756 = vmatpush2.bf16.msra.mxu0 0
        %1757 = vmatprep.subr.bf16.mxu0 0
        %1758 = vmatpush2.bf16.msra.mxu0 0
        %1759 = vmatprep.subr.bf16.mxu0 0
        %1760 = vmatpush2.bf16.msra.mxu0 0
        %1761 = vmatprep.subr.bf16.mxu0 0
        %1762 = vmatpush2.bf16.msra.mxu0 0
        %1763 = vmatprep.subr.bf16.mxu0 0
        %1764 = vmatpush2.bf16.msra.mxu0 0
        %1765 = vmatprep.subr.bf16.mxu0 0
        %1766 = vmatpush2.bf16.msra.mxu0 0
        %1767 = vmatprep.subr.bf16.mxu0 0
        %1768 = vmatpush2.bf16.msra.mxu0 0
        %1769 = vmatprep.subr.bf16.mxu0 0
        %1770 = vmatpush2.bf16.msra.mxu0 0
        %1771 = vmatprep.mubr.bf16.mxu0 0
        %1772 = vmatmul.mubr.bf16.gmra.mxu0 %v502
        %v1773 = vpop.f32.mrf.mxu0
        %v1774 = vadd.f32 %v1731, %v1773
        %v1775 = vpop.f32.mrf.mxu0
        %v1776 = vadd.f32 %v1733, %v1775
        %v1777 = vpop.f32.mrf.mxu0
        %v1778 = vadd.f32 %v1735, %v1777
        %v1779 = vpop.f32.mrf.mxu0
        %v1780 = vadd.f32 %v1737, %v1779
        %1781 = vdwg.mxu0
        %1782 = vmatprep.subr.bf16.mxu0 %v1246
        %1783 = vmatpush1.bf16.msra.mxu0 %v1245
        %1784 = vmatprep.subr.bf16.mxu0 %v1237
        %1785 = vmatpush1.bf16.msra.mxu0 %v1236
        %1786 = vmatprep.subr.bf16.mxu0 %v1228
        %1787 = vmatpush1.bf16.msra.mxu0 %v1227
        %1788 = vmatprep.subr.bf16.mxu0 %v1219
        %1789 = vmatpush1.bf16.msra.mxu0 %v1218
        %1790 = vmatprep.subr.bf16.mxu0 %v1210
        %1791 = vmatpush1.bf16.msra.mxu0 %v1209
        %1792 = vmatprep.subr.bf16.mxu0 %v1201
        %1793 = vmatpush1.bf16.msra.mxu0 %v1200
        %1794 = vmatprep.subr.bf16.mxu0 %v1192
        %1795 = vmatpush1.bf16.msra.mxu0 %v1191
        %1796 = vmatprep.subr.bf16.mxu0 %v1183
        %1797 = vmatpush1.bf16.msra.mxu0 %v1182
        %1798 = vmatprep.subr.bf16.mxu0 %v1318
        %1799 = vmatpush2.bf16.msra.mxu0 %v1317
        %1800 = vmatprep.subr.bf16.mxu0 %v1309
        %1801 = vmatpush2.bf16.msra.mxu0 %v1308
        %1802 = vmatprep.subr.bf16.mxu0 %v1300
        %1803 = vmatpush2.bf16.msra.mxu0 %v1299
        %1804 = vmatprep.subr.bf16.mxu0 %v1291
        %1805 = vmatpush2.bf16.msra.mxu0 %v1290
        %1806 = vmatprep.subr.bf16.mxu0 %v1282
        %1807 = vmatpush2.bf16.msra.mxu0 %v1281
        %1808 = vmatprep.subr.bf16.mxu0 %v1273
        %1809 = vmatpush2.bf16.msra.mxu0 %v1272
        %1810 = vmatprep.subr.bf16.mxu0 %v1264
        %1811 = vmatpush2.bf16.msra.mxu0 %v1263
        %1812 = vmatprep.subr.bf16.mxu0 %v1255
        %1813 = vmatpush2.bf16.msra.mxu0 %v1254
        %1814 = vmatprep.mubr.bf16.mxu0 %v501
        %1815 = vmatmul.mubr.bf16.gmra.mxu0 %v500
        %v1816 = vpop.f32.mrf.mxu0
        %v1817 = vadd.f32 0.0, %v1816
        %v1818 = vpop.f32.mrf.mxu0
        %v1819 = vadd.f32 0.0, %v1818
        %v1820 = vpop.f32.mrf.mxu0
        %v1821 = vadd.f32 0.0, %v1820
        %v1822 = vpop.f32.mrf.mxu0
        %v1823 = vadd.f32 0.0, %v1822
        %1824 = vdwg.mxu0
        %1825 = vmatprep.subr.bf16.mxu0 %v1390
        %1826 = vmatpush1.bf16.msra.mxu0 %v1389
        %1827 = vmatprep.subr.bf16.mxu0 %v1381
        %1828 = vmatpush1.bf16.msra.mxu0 %v1380
        %1829 = vmatprep.subr.bf16.mxu0 %v1372
        %1830 = vmatpush1.bf16.msra.mxu0 %v1371
        %1831 = vmatprep.subr.bf16.mxu0 %v1363
        %1832 = vmatpush1.bf16.msra.mxu0 %v1362
        %1833 = vmatprep.subr.bf16.mxu0 %v1354
        %1834 = vmatpush1.bf16.msra.mxu0 %v1353
        %1835 = vmatprep.subr.bf16.mxu0 %v1345
        %1836 = vmatpush1.bf16.msra.mxu0 %v1344
        %1837 = vmatprep.subr.bf16.mxu0 %v1336
        %1838 = vmatpush1.bf16.msra.mxu0 %v1335
        %1839 = vmatprep.subr.bf16.mxu0 %v1327
        %1840 = vmatpush1.bf16.msra.mxu0 %v1326
        %1841 = vmatprep.subr.bf16.mxu0 0
        %1842 = vmatpush2.bf16.msra.mxu0 0
        %1843 = vmatprep.subr.bf16.mxu0 0
        %1844 = vmatpush2.bf16.msra.mxu0 0
        %1845 = vmatprep.subr.bf16.mxu0 0
        %1846 = vmatpush2.bf16.msra.mxu0 0
        %1847 = vmatprep.subr.bf16.mxu0 0
        %1848 = vmatpush2.bf16.msra.mxu0 0
        %1849 = vmatprep.subr.bf16.mxu0 0
        %1850 = vmatpush2.bf16.msra.mxu0 0
        %1851 = vmatprep.subr.bf16.mxu0 0
        %1852 = vmatpush2.bf16.msra.mxu0 0
        %1853 = vmatprep.subr.bf16.mxu0 0
        %1854 = vmatpush2.bf16.msra.mxu0 0
        %1855 = vmatprep.subr.bf16.mxu0 0
        %1856 = vmatpush2.bf16.msra.mxu0 0
        %1857 = vmatprep.mubr.bf16.mxu0 0
        %1858 = vmatmul.mubr.bf16.gmra.mxu0 %v502
        %v1859 = vpop.f32.mrf.mxu0
        %v1860 = vadd.f32 %v1817, %v1859
        %v1861 = vpop.f32.mrf.mxu0
        %v1862 = vadd.f32 %v1819, %v1861
        %v1863 = vpop.f32.mrf.mxu0
        %v1864 = vadd.f32 %v1821, %v1863
        %v1865 = vpop.f32.mrf.mxu0
        %v1866 = vadd.f32 %v1823, %v1865
        %1867 = vdwg.mxu0
        %1868 = vmatprep.subr.bf16.mxu0 %v1248
        %1869 = vmatpush1.bf16.msra.mxu0 %v1247
        %1870 = vmatprep.subr.bf16.mxu0 %v1239
        %1871 = vmatpush1.bf16.msra.mxu0 %v1238
        %1872 = vmatprep.subr.bf16.mxu0 %v1230
        %1873 = vmatpush1.bf16.msra.mxu0 %v1229
        %1874 = vmatprep.subr.bf16.mxu0 %v1221
        %1875 = vmatpush1.bf16.msra.mxu0 %v1220
        %1876 = vmatprep.subr.bf16.mxu0 %v1212
        %1877 = vmatpush1.bf16.msra.mxu0 %v1211
        %1878 = vmatprep.subr.bf16.mxu0 %v1203
        %1879 = vmatpush1.bf16.msra.mxu0 %v1202
        %1880 = vmatprep.subr.bf16.mxu0 %v1194
        %1881 = vmatpush1.bf16.msra.mxu0 %v1193
        %1882 = vmatprep.subr.bf16.mxu0 %v1185
        %1883 = vmatpush1.bf16.msra.mxu0 %v1184
        %1884 = vmatprep.subr.bf16.mxu0 %v1320
        %1885 = vmatpush2.bf16.msra.mxu0 %v1319
        %1886 = vmatprep.subr.bf16.mxu0 %v1311
        %1887 = vmatpush2.bf16.msra.mxu0 %v1310
        %1888 = vmatprep.subr.bf16.mxu0 %v1302
        %1889 = vmatpush2.bf16.msra.mxu0 %v1301
        %1890 = vmatprep.subr.bf16.mxu0 %v1293
        %1891 = vmatpush2.bf16.msra.mxu0 %v1292
        %1892 = vmatprep.subr.bf16.mxu0 %v1284
        %1893 = vmatpush2.bf16.msra.mxu0 %v1283
        %1894 = vmatprep.subr.bf16.mxu0 %v1275
        %1895 = vmatpush2.bf16.msra.mxu0 %v1274
        %1896 = vmatprep.subr.bf16.mxu0 %v1266
        %1897 = vmatpush2.bf16.msra.mxu0 %v1265
        %1898 = vmatprep.subr.bf16.mxu0 %v1257
        %1899 = vmatpush2.bf16.msra.mxu0 %v1256
        %1900 = vmatprep.mubr.bf16.mxu0 %v501
        %1901 = vmatmul.mubr.bf16.gmra.mxu0 %v500
        %v1902 = vpop.f32.mrf.mxu0
        %v1903 = vadd.f32 0.0, %v1902
        %v1904 = vpop.f32.mrf.mxu0
        %v1905 = vadd.f32 0.0, %v1904
        %v1906 = vpop.f32.mrf.mxu0
        %v1907 = vadd.f32 0.0, %v1906
        %v1908 = vpop.f32.mrf.mxu0
        %v1909 = vadd.f32 0.0, %v1908
        %1910 = vdwg.mxu0
        %1911 = vmatprep.subr.bf16.mxu0 %v1392
        %1912 = vmatpush1.bf16.msra.mxu0 %v1391
        %1913 = vmatprep.subr.bf16.mxu0 %v1383
        %1914 = vmatpush1.bf16.msra.mxu0 %v1382
        %1915 = vmatprep.subr.bf16.mxu0 %v1374
        %1916 = vmatpush1.bf16.msra.mxu0 %v1373
        %1917 = vmatprep.subr.bf16.mxu0 %v1365
        %1918 = vmatpush1.bf16.msra.mxu0 %v1364
        %1919 = vmatprep.subr.bf16.mxu0 %v1356
        %1920 = vmatpush1.bf16.msra.mxu0 %v1355
        %1921 = vmatprep.subr.bf16.mxu0 %v1347
        %1922 = vmatpush1.bf16.msra.mxu0 %v1346
        %1923 = vmatprep.subr.bf16.mxu0 %v1338
        %1924 = vmatpush1.bf16.msra.mxu0 %v1337
        %1925 = vmatprep.subr.bf16.mxu0 %v1329
        %1926 = vmatpush1.bf16.msra.mxu0 %v1328
        %1927 = vmatprep.subr.bf16.mxu0 0
        %1928 = vmatpush2.bf16.msra.mxu0 0
        %1929 = vmatprep.subr.bf16.mxu0 0
        %1930 = vmatpush2.bf16.msra.mxu0 0
        %1931 = vmatprep.subr.bf16.mxu0 0
        %1932 = vmatpush2.bf16.msra.mxu0 0
        %1933 = vmatprep.subr.bf16.mxu0 0
        %1934 = vmatpush2.bf16.msra.mxu0 0
        %1935 = vmatprep.subr.bf16.mxu0 0
        %1936 = vmatpush2.bf16.msra.mxu0 0
        %1937 = vmatprep.subr.bf16.mxu0 0
        %1938 = vmatpush2.bf16.msra.mxu0 0
        %1939 = vmatprep.subr.bf16.mxu0 0
        %1940 = vmatpush2.bf16.msra.mxu0 0
        %1941 = vmatprep.subr.bf16.mxu0 0
        %1942 = vmatpush2.bf16.msra.mxu0 0
        %1943 = vmatprep.mubr.bf16.mxu0 0
        %1944 = vmatmul.mubr.bf16.gmra.mxu0 %v502
        %v1945 = vpop.f32.mrf.mxu0
        %v1946 = vadd.f32 %v1903, %v1945
        %v1947 = vpop.f32.mrf.mxu0
        %v1948 = vadd.f32 %v1905, %v1947
        %v1949 = vpop.f32.mrf.mxu0
        %v1950 = vadd.f32 %v1907, %v1949
        %v1951 = vpop.f32.mrf.mxu0
        %v1952 = vadd.f32 %v1909, %v1951
        %1953 = vdwg.mxu0
        %1954 = vmatprep.subr.bf16.mxu0 0
        %1955 = vmatpush1.bf16.msra.mxu0 %v1249
        %1956 = vmatprep.subr.bf16.mxu0 0
        %1957 = vmatpush1.bf16.msra.mxu0 %v1240
        %1958 = vmatprep.subr.bf16.mxu0 0
        %1959 = vmatpush1.bf16.msra.mxu0 %v1231
        %1960 = vmatprep.subr.bf16.mxu0 0
        %1961 = vmatpush1.bf16.msra.mxu0 %v1222
        %1962 = vmatprep.subr.bf16.mxu0 0
        %1963 = vmatpush1.bf16.msra.mxu0 %v1213
        %1964 = vmatprep.subr.bf16.mxu0 0
        %1965 = vmatpush1.bf16.msra.mxu0 %v1204
        %1966 = vmatprep.subr.bf16.mxu0 0
        %1967 = vmatpush1.bf16.msra.mxu0 %v1195
        %1968 = vmatprep.subr.bf16.mxu0 0
        %1969 = vmatpush1.bf16.msra.mxu0 %v1186
        %1970 = vmatprep.subr.bf16.mxu0 0
        %1971 = vmatpush2.bf16.msra.mxu0 %v1321
        %1972 = vmatprep.subr.bf16.mxu0 0
        %1973 = vmatpush2.bf16.msra.mxu0 %v1312
        %1974 = vmatprep.subr.bf16.mxu0 0
        %1975 = vmatpush2.bf16.msra.mxu0 %v1303
        %1976 = vmatprep.subr.bf16.mxu0 0
        %1977 = vmatpush2.bf16.msra.mxu0 %v1294
        %1978 = vmatprep.subr.bf16.mxu0 0
        %1979 = vmatpush2.bf16.msra.mxu0 %v1285
        %1980 = vmatprep.subr.bf16.mxu0 0
        %1981 = vmatpush2.bf16.msra.mxu0 %v1276
        %1982 = vmatprep.subr.bf16.mxu0 0
        %1983 = vmatpush2.bf16.msra.mxu0 %v1267
        %1984 = vmatprep.subr.bf16.mxu0 0
        %1985 = vmatpush2.bf16.msra.mxu0 %v1258
        %1986 = vmatprep.mubr.bf16.mxu0 %v501
        %1987 = vmatmul.mubr.bf16.gmra.mxu0 %v500
        %v1988 = vpop.f32.mrf.mxu0
        %v1989 = vadd.f32 0.0, %v1988
        %v1990 = vpop.f32.mrf.mxu0
        %v1991 = vpop.f32.mrf.mxu0
        %v1992 = vadd.f32 0.0, %v1991
        %v1993 = vpop.f32.mrf.mxu0
        %1994 = vdwg.mxu0
        %1995 = vmatprep.subr.bf16.mxu0 0
        %1996 = vmatpush1.bf16.msra.mxu0 %v1393
        %1997 = vmatprep.subr.bf16.mxu0 0
        %1998 = vmatpush1.bf16.msra.mxu0 %v1384
        %1999 = vmatprep.subr.bf16.mxu0 0
        %2000 = vmatpush1.bf16.msra.mxu0 %v1375
        %2001 = vmatprep.subr.bf16.mxu0 0
        %2002 = vmatpush1.bf16.msra.mxu0 %v1366
        %2003 = vmatprep.subr.bf16.mxu0 0
        %2004 = vmatpush1.bf16.msra.mxu0 %v1357
        %2005 = vmatprep.subr.bf16.mxu0 0
        %2006 = vmatpush1.bf16.msra.mxu0 %v1348
        %2007 = vmatprep.subr.bf16.mxu0 0
        %2008 = vmatpush1.bf16.msra.mxu0 %v1339
        %2009 = vmatprep.subr.bf16.mxu0 0
        %2010 = vmatpush1.bf16.msra.mxu0 %v1330
        %2011 = vmatprep.subr.bf16.mxu0 0
        %2012 = vmatpush2.bf16.msra.mxu0 0
        %2013 = vmatprep.subr.bf16.mxu0 0
        %2014 = vmatpush2.bf16.msra.mxu0 0
        %2015 = vmatprep.subr.bf16.mxu0 0
        %2016 = vmatpush2.bf16.msra.mxu0 0
        %2017 = vmatprep.subr.bf16.mxu0 0
        %2018 = vmatpush2.bf16.msra.mxu0 0
        %2019 = vmatprep.subr.bf16.mxu0 0
        %2020 = vmatpush2.bf16.msra.mxu0 0
        %2021 = vmatprep.subr.bf16.mxu0 0
        %2022 = vmatpush2.bf16.msra.mxu0 0
        %2023 = vmatprep.subr.bf16.mxu0 0
        %2024 = vmatpush2.bf16.msra.mxu0 0
        %2025 = vmatprep.subr.bf16.mxu0 0
        %2026 = vmatpush2.bf16.msra.mxu0 0
        %2027 = vmatprep.mubr.bf16.mxu0 0
        %2028 = vmatmul.mubr.bf16.gmra.mxu0 %v502
        %v2029 = vpop.f32.mrf.mxu0
        %v2030 = vadd.f32 %v1989, %v2029
        %v2031 = vpop.f32.mrf.mxu0
        %v2032 = vpop.f32.mrf.mxu0
        %v2033 = vadd.f32 %v1992, %v2032
        %v2034 = vpop.f32.mrf.mxu0
        %2035 = vdwg.mxu0
        %v2036 = vpack.c.bf16 %v1692, %v1688
        %v2037 = vpack.c.bf16 %v1694, %v1690
        %v2038 = vpack.c.bf16 %v1778, %v1774
        %v2039 = vpack.c.bf16 %v1780, %v1776
        %v2040 = vpack.c.bf16 %v1864, %v1860
        %v2041 = vpack.c.bf16 %v1866, %v1862
        %v2042 = vpack.c.bf16 %v1950, %v1946
        %v2043 = vpack.c.bf16 %v1952, %v1948
        %v2044 = vpack.c.bf16 %v2033, %v2030
        %v2045 = vlaneseq
        %v2046 = vshrl.u32 %v2045, 7
        %v2047 = vadd.s32 %v2046, 8
        %v2048 = vlaneseq
        %v2049 = vand.u32 %v2048, 127
        %vm2050 = vcmp.le.s32.totalorder %v2049, %v2046
        %vm2051 = vcmp.le.s32.totalorder %v2049, %v2047
        %vm2052 = vcmask 523264
        %v2054 = vsel %vm2052, %v2036, 0
        %v2057 = vsel %vm2052, %v2039, 0
        %2059 = vmatprep.subr.bf16.mxu0 0
        %2060 = vmatpush1.bf16.xpose.msra.mxu0 0
        %2061 = vmatprep.subr.bf16.mxu0 0
        %2062 = vmatpush1.bf16.xpose.msra.mxu0 0
        %2063 = vmatprep.subr.bf16.mxu0 0
        %2064 = vmatpush1.bf16.xpose.msra.mxu0 0
        %2065 = vmatprep.subr.bf16.mxu0 0
        %2066 = vmatpush1.bf16.xpose.msra.mxu0 0
        %2067 = vmatprep.subr.bf16.mxu0 0
        %2068 = vmatpush1.bf16.xpose.msra.mxu0 0
        %2069 = vmatprep.subr.bf16.mxu0 0
        %2070 = vmatpush1.bf16.xpose.msra.mxu0 0
        %2071 = vmatprep.subr.bf16.mxu0 0
        %2072 = vmatpush1.bf16.xpose.msra.mxu0 0
        %2073 = vmatprep.subr.bf16.mxu0 0
        %2074 = vmatpush1.bf16.xpose.msra.mxu0 %v2057
        %2075 = vmatprep.subr.bf16.mxu0 0
        %2076 = vmatpush2.bf16.xpose.msra.mxu0 0
        %2077 = vmatprep.subr.bf16.mxu0 0
        %2078 = vmatpush2.bf16.xpose.msra.mxu0 0
        %2079 = vmatprep.subr.bf16.mxu0 0
        %2080 = vmatpush2.bf16.xpose.msra.mxu0 0
        %2081 = vmatprep.subr.bf16.mxu0 0
        %2082 = vmatpush2.bf16.xpose.msra.mxu0 0
        %2083 = vmatprep.subr.bf16.mxu0 0
        %2084 = vmatpush2.bf16.xpose.msra.mxu0 0
        %2085 = vmatprep.subr.bf16.mxu0 0
        %2086 = vmatpush2.bf16.xpose.msra.mxu0 0
        %2087 = vmatprep.subr.bf16.mxu0 0
        %2088 = vmatpush2.bf16.xpose.msra.mxu0 0
        %2089 = vmatprep.subr.bf16.mxu0 0
        %2090 = vmatpush2.bf16.xpose.msra.mxu0 0
        %2091 = vmatprep.mubr.bf16.mxu0 0
        %2092 = vmatmul.mubr.bf16.gmra.mxu0 %v2054
        %v2093 = vpop.f32.mrf.mxu0
        %v2094 = vadd.f32 0.0, %v2093
        %v2095 = vpop.f32.mrf.mxu0
        %v2096 = vpop.f32.mrf.mxu0
        %v2097 = vadd.f32 0.0, %v2096
        %v2098 = vpop.f32.mrf.mxu0
        %2099 = vdwg.mxu0
        %v2100 = vsel %vm2050, %v2094, -1e+30
        %v2101 = vsel %vm2051, %v2097, -1e+30
        %vm2102 = vcmask 130048
        %v2103 = vsel %vm2102, %v2100, -inf
        %2104 = vmax.xlane.f32.xlu0 %v2103
        %v2105 = vpop.xlane.xlu0 %2104
        %v2106 = vsel %vm2102, %v2101, -inf
        %2107 = vmax.xlane.f32.xlu0 %v2106
        %v2108 = vpop.xlane.xlu0 %2107
        %v2109 = vsub.f32 %v2100, %v2105
        %v2110 = vsub.f32 %v2101, %v2108
        %v2111 = vmul.f32 %v2109, 1.442695
        %v2112 = vpow.pop %v2111
        %v2113 = vmul.f32 %v2110, 1.442695
        %v2114 = vpow.pop %v2113
        %v2115 = vsel %vm2102, %v2112, 0.0
        %2116 = vadd.xlane.f32.xlu0 %v2115
        %v2117 = vpop.xlane.xlu0 %2116
        %v2118 = vsel %vm2102, %v2114, 0.0
        %2119 = vadd.xlane.f32.xlu0 %v2118
        %v2120 = vpop.xlane.xlu0 %2119
        %v2121 = vpack.c.bf16 %v2114, %v2112
        %v2123 = vsel %vm2102, %v2121, 0
        %2125 = vmatprep.subr.bf16.mxu0 0
        %2126 = vmatpush1.bf16.msra.mxu0 0
        %2127 = vmatprep.subr.bf16.mxu0 0
        %2128 = vmatpush1.bf16.msra.mxu0 0
        %2129 = vmatprep.subr.bf16.mxu0 0
        %2130 = vmatpush1.bf16.msra.mxu0 0
        %2131 = vmatprep.subr.bf16.mxu0 0
        %2132 = vmatpush1.bf16.msra.mxu0 0
        %2133 = vmatprep.subr.bf16.mxu0 0
        %2134 = vmatpush1.bf16.msra.mxu0 0
        %2135 = vmatprep.subr.bf16.mxu0 0
        %2136 = vmatpush1.bf16.msra.mxu0 0
        %2137 = vmatprep.subr.bf16.mxu0 0
        %2138 = vmatpush1.bf16.msra.mxu0 0
        %2139 = vmatprep.subr.bf16.mxu0 0
        %2140 = vmatpush1.bf16.msra.mxu0 %v2042
        %2141 = vmatprep.subr.bf16.mxu0 0
        %2142 = vmatpush2.bf16.msra.mxu0 0
        %2143 = vmatprep.subr.bf16.mxu0 0
        %2144 = vmatpush2.bf16.msra.mxu0 0
        %2145 = vmatprep.subr.bf16.mxu0 0
        %2146 = vmatpush2.bf16.msra.mxu0 0
        %2147 = vmatprep.subr.bf16.mxu0 0
        %2148 = vmatpush2.bf16.msra.mxu0 0
        %2149 = vmatprep.subr.bf16.mxu0 0
        %2150 = vmatpush2.bf16.msra.mxu0 0
        %2151 = vmatprep.subr.bf16.mxu0 0
        %2152 = vmatpush2.bf16.msra.mxu0 0
        %2153 = vmatprep.subr.bf16.mxu0 0
        %2154 = vmatpush2.bf16.msra.mxu0 0
        %2155 = vmatprep.subr.bf16.mxu0 0
        %2156 = vmatpush2.bf16.msra.mxu0 0
        %2157 = vmatprep.mubr.bf16.mxu0 0
        %2158 = vmatmul.mubr.bf16.gmra.mxu0 %v2123
        %v2159 = vpop.f32.mrf.mxu0
        %v2160 = vadd.f32 0.0, %v2159
        %v2161 = vpop.f32.mrf.mxu0
        %v2162 = vpop.f32.mrf.mxu0
        %v2163 = vadd.f32 0.0, %v2162
        %v2164 = vpop.f32.mrf.mxu0
        %2165 = vdwg.mxu0
        %v2166 = vrcp.pop %v2117
        %v2167 = vrcp.pop %v2120
        %v2168 = vmul.f32 %v2160, %v2166
        %v2169 = vmul.f32 %v2163, %v2167
        %v2170 = vpack.c.bf16 %v2169, %v2168
        %v2172 = vunpack.c.l.b16 %v2170
        %v2173 = vunpack.c.h.b16 %v2170
        %v2174 = vpack.c.b16 %v2172, %v2172
        %v2175 = vpack.c.b16 %v2173, %v2173
        %vm2178 = vcmask 519168
        %2179 = vst.msk [vmem:[#allocation2] sm:$0xf] %vm2178, %v2174
        %2180 = vst.msk [vmem:[#allocation2 + $0xc] sm:$0xf] %vm2178, %v2175
        %2182 = vrot.lane.b32.xlu0 %v2036, 64
        %v2183 = vpop.permute.xlu0 %2182
        %2185 = vrot.lane.b32.xlu0 %v2039, 64
        %v2186 = vpop.permute.xlu0 %2185
        %v2188 = vsel %vm2052, %v2183, 0
        %v2191 = vsel %vm2052, %v2186, 0
        %2193 = vmatprep.subr.bf16.mxu0 0
        %2194 = vmatpush1.bf16.xpose.msra.mxu0 0
        %2195 = vmatprep.subr.bf16.mxu0 0
        %2196 = vmatpush1.bf16.xpose.msra.mxu0 0
        %2197 = vmatprep.subr.bf16.mxu0 0
        %2198 = vmatpush1.bf16.xpose.msra.mxu0 0
        %2199 = vmatprep.subr.bf16.mxu0 0
        %2200 = vmatpush1.bf16.xpose.msra.mxu0 0
        %2201 = vmatprep.subr.bf16.mxu0 0
        %2202 = vmatpush1.bf16.xpose.msra.mxu0 0
        %2203 = vmatprep.subr.bf16.mxu0 0
        %2204 = vmatpush1.bf16.xpose.msra.mxu0 0
        %2205 = vmatprep.subr.bf16.mxu0 0
        %2206 = vmatpush1.bf16.xpose.msra.mxu0 0
        %2207 = vmatprep.subr.bf16.mxu0 0
        %2208 = vmatpush1.bf16.xpose.msra.mxu0 %v2191
        %2209 = vmatprep.subr.bf16.mxu0 0
        %2210 = vmatpush2.bf16.xpose.msra.mxu0 0
        %2211 = vmatprep.subr.bf16.mxu0 0
        %2212 = vmatpush2.bf16.xpose.msra.mxu0 0
        %2213 = vmatprep.subr.bf16.mxu0 0
        %2214 = vmatpush2.bf16.xpose.msra.mxu0 0
        %2215 = vmatprep.subr.bf16.mxu0 0
        %2216 = vmatpush2.bf16.xpose.msra.mxu0 0
        %2217 = vmatprep.subr.bf16.mxu0 0
        %2218 = vmatpush2.bf16.xpose.msra.mxu0 0
        %2219 = vmatprep.subr.bf16.mxu0 0
        %2220 = vmatpush2.bf16.xpose.msra.mxu0 0
        %2221 = vmatprep.subr.bf16.mxu0 0
        %2222 = vmatpush2.bf16.xpose.msra.mxu0 0
        %2223 = vmatprep.subr.bf16.mxu0 0
        %2224 = vmatpush2.bf16.xpose.msra.mxu0 0
        %2225 = vmatprep.mubr.bf16.mxu0 0
        %2226 = vmatmul.mubr.bf16.gmra.mxu0 %v2188
        %v2227 = vpop.f32.mrf.mxu0
        %v2228 = vadd.f32 0.0, %v2227
        %v2229 = vpop.f32.mrf.mxu0
        %v2230 = vpop.f32.mrf.mxu0
        %v2231 = vadd.f32 0.0, %v2230
        %v2232 = vpop.f32.mrf.mxu0
        %2233 = vdwg.mxu0
        %v2234 = vsel %vm2050, %v2228, -1e+30
        %v2235 = vsel %vm2051, %v2231, -1e+30
        %v2236 = vsel %vm2102, %v2234, -inf
        %2237 = vmax.xlane.f32.xlu0 %v2236
        %v2238 = vpop.xlane.xlu0 %2237
        %v2239 = vsel %vm2102, %v2235, -inf
        %2240 = vmax.xlane.f32.xlu0 %v2239
        %v2241 = vpop.xlane.xlu0 %2240
        %v2242 = vsub.f32 %v2234, %v2238
        %v2243 = vsub.f32 %v2235, %v2241
        %v2244 = vmul.f32 %v2242, 1.442695
        %v2245 = vpow.pop %v2244
        %v2246 = vmul.f32 %v2243, 1.442695
        %v2247 = vpow.pop %v2246
        %v2248 = vsel %vm2102, %v2245, 0.0
        %2249 = vadd.xlane.f32.xlu0 %v2248
        %v2250 = vpop.xlane.xlu0 %2249
        %v2251 = vsel %vm2102, %v2247, 0.0
        %2252 = vadd.xlane.f32.xlu0 %v2251
        %v2253 = vpop.xlane.xlu0 %2252
        %v2254 = vpack.c.bf16 %v2247, %v2245
        %2256 = vrot.lane.b32.xlu0 %v2042, 64
        %v2257 = vpop.permute.xlu0 %2256
        %v2260 = vsel %vm2102, %v2254, 0
        %2262 = vmatprep.subr.bf16.mxu0 0
        %2263 = vmatpush1.bf16.msra.mxu0 0
        %2264 = vmatprep.subr.bf16.mxu0 0
        %2265 = vmatpush1.bf16.msra.mxu0 0
        %2266 = vmatprep.subr.bf16.mxu0 0
        %2267 = vmatpush1.bf16.msra.mxu0 0
        %2268 = vmatprep.subr.bf16.mxu0 0
        %2269 = vmatpush1.bf16.msra.mxu0 0
        %2270 = vmatprep.subr.bf16.mxu0 0
        %2271 = vmatpush1.bf16.msra.mxu0 0
        %2272 = vmatprep.subr.bf16.mxu0 0
        %2273 = vmatpush1.bf16.msra.mxu0 0
        %2274 = vmatprep.subr.bf16.mxu0 0
        %2275 = vmatpush1.bf16.msra.mxu0 0
        %2276 = vmatprep.subr.bf16.mxu0 0
        %2277 = vmatpush1.bf16.msra.mxu0 %v2257
        %2278 = vmatprep.subr.bf16.mxu0 0
        %2279 = vmatpush2.bf16.msra.mxu0 0
        %2280 = vmatprep.subr.bf16.mxu0 0
        %2281 = vmatpush2.bf16.msra.mxu0 0
        %2282 = vmatprep.subr.bf16.mxu0 0
        %2283 = vmatpush2.bf16.msra.mxu0 0
        %2284 = vmatprep.subr.bf16.mxu0 0
        %2285 = vmatpush2.bf16.msra.mxu0 0
        %2286 = vmatprep.subr.bf16.mxu0 0
        %2287 = vmatpush2.bf16.msra.mxu0 0
        %2288 = vmatprep.subr.bf16.mxu0 0
        %2289 = vmatpush2.bf16.msra.mxu0 0
        %2290 = vmatprep.subr.bf16.mxu0 0
        %2291 = vmatpush2.bf16.msra.mxu0 0
        %2292 = vmatprep.subr.bf16.mxu0 0
        %2293 = vmatpush2.bf16.msra.mxu0 0
        %2294 = vmatprep.mubr.bf16.mxu0 0
        %2295 = vmatmul.mubr.bf16.gmra.mxu0 %v2260
        %v2296 = vpop.f32.mrf.mxu0
        %v2297 = vadd.f32 0.0, %v2296
        %v2298 = vpop.f32.mrf.mxu0
        %v2299 = vpop.f32.mrf.mxu0
        %v2300 = vadd.f32 0.0, %v2299
        %v2301 = vpop.f32.mrf.mxu0
        %2302 = vdwg.mxu0
        %v2303 = vrcp.pop %v2250
        %v2304 = vrcp.pop %v2253
        %v2305 = vmul.f32 %v2297, %v2303
        %v2306 = vmul.f32 %v2300, %v2304
        %v2307 = vpack.c.bf16 %v2306, %v2305
        %v2309 = vunpack.c.l.b16 %v2307
        %v2310 = vunpack.c.h.b16 %v2307
        %v2311 = vpack.c.b16 %v2309, %v2309
        %v2312 = vpack.c.b16 %v2310, %v2310
        %2313 = vrot.lane.b32.xlu0 %v2311, 64
        %v2314 = vpop.permute.xlu0 %2313
        %2315 = vrot.lane.b32.xlu0 %v2312, 64
        %v2316 = vpop.permute.xlu0 %2315
        %vm2319 = vcmask 1043968
        %2320 = vst.msk [vmem:[#allocation2] sm:$0xf] %vm2319, %v2314
        %2321 = vst.msk [vmem:[#allocation2 + $0xc] sm:$0xf] %vm2319, %v2316
        %v2323 = vsel %vm2052, %v2037, 0
        %v2326 = vsel %vm2052, %v2040, 0
        %2328 = vmatprep.subr.bf16.mxu0 0
        %2329 = vmatpush1.bf16.xpose.msra.mxu0 0
        %2330 = vmatprep.subr.bf16.mxu0 0
        %2331 = vmatpush1.bf16.xpose.msra.mxu0 0
        %2332 = vmatprep.subr.bf16.mxu0 0
        %2333 = vmatpush1.bf16.xpose.msra.mxu0 0
        %2334 = vmatprep.subr.bf16.mxu0 0
        %2335 = vmatpush1.bf16.xpose.msra.mxu0 0
        %2336 = vmatprep.subr.bf16.mxu0 0
        %2337 = vmatpush1.bf16.xpose.msra.mxu0 0
        %2338 = vmatprep.subr.bf16.mxu0 0
        %2339 = vmatpush1.bf16.xpose.msra.mxu0 0
        %2340 = vmatprep.subr.bf16.mxu0 0
        %2341 = vmatpush1.bf16.xpose.msra.mxu0 0
        %2342 = vmatprep.subr.bf16.mxu0 0
        %2343 = vmatpush1.bf16.xpose.msra.mxu0 %v2326
        %2344 = vmatprep.subr.bf16.mxu0 0
        %2345 = vmatpush2.bf16.xpose.msra.mxu0 0
        %2346 = vmatprep.subr.bf16.mxu0 0
        %2347 = vmatpush2.bf16.xpose.msra.mxu0 0
        %2348 = vmatprep.subr.bf16.mxu0 0
        %2349 = vmatpush2.bf16.xpose.msra.mxu0 0
        %2350 = vmatprep.subr.bf16.mxu0 0
        %2351 = vmatpush2.bf16.xpose.msra.mxu0 0
        %2352 = vmatprep.subr.bf16.mxu0 0
        %2353 = vmatpush2.bf16.xpose.msra.mxu0 0
        %2354 = vmatprep.subr.bf16.mxu0 0
        %2355 = vmatpush2.bf16.xpose.msra.mxu0 0
        %2356 = vmatprep.subr.bf16.mxu0 0
        %2357 = vmatpush2.bf16.xpose.msra.mxu0 0
        %2358 = vmatprep.subr.bf16.mxu0 0
        %2359 = vmatpush2.bf16.xpose.msra.mxu0 0
        %2360 = vmatprep.mubr.bf16.mxu0 0
        %2361 = vmatmul.mubr.bf16.gmra.mxu0 %v2323
        %v2362 = vpop.f32.mrf.mxu0
        %v2363 = vadd.f32 0.0, %v2362
        %v2364 = vpop.f32.mrf.mxu0
        %v2365 = vpop.f32.mrf.mxu0
        %v2366 = vadd.f32 0.0, %v2365
        %v2367 = vpop.f32.mrf.mxu0
        %2368 = vdwg.mxu0
        %v2369 = vsel %vm2050, %v2363, -1e+30
        %v2370 = vsel %vm2051, %v2366, -1e+30
        %v2371 = vsel %vm2102, %v2369, -inf
        %2372 = vmax.xlane.f32.xlu0 %v2371
        %v2373 = vpop.xlane.xlu0 %2372
        %v2374 = vsel %vm2102, %v2370, -inf
        %2375 = vmax.xlane.f32.xlu0 %v2374
        %v2376 = vpop.xlane.xlu0 %2375
        %v2377 = vsub.f32 %v2369, %v2373
        %v2378 = vsub.f32 %v2370, %v2376
        %v2379 = vmul.f32 %v2377, 1.442695
        %v2380 = vpow.pop %v2379
        %v2381 = vmul.f32 %v2378, 1.442695
        %v2382 = vpow.pop %v2381
        %v2383 = vsel %vm2102, %v2380, 0.0
        %2384 = vadd.xlane.f32.xlu0 %v2383
        %v2385 = vpop.xlane.xlu0 %2384
        %v2386 = vsel %vm2102, %v2382, 0.0
        %2387 = vadd.xlane.f32.xlu0 %v2386
        %v2388 = vpop.xlane.xlu0 %2387
        %v2389 = vpack.c.bf16 %v2382, %v2380
        %v2391 = vsel %vm2102, %v2389, 0
        %2393 = vmatprep.subr.bf16.mxu0 0
        %2394 = vmatpush1.bf16.msra.mxu0 0
        %2395 = vmatprep.subr.bf16.mxu0 0
        %2396 = vmatpush1.bf16.msra.mxu0 0
        %2397 = vmatprep.subr.bf16.mxu0 0
        %2398 = vmatpush1.bf16.msra.mxu0 0
        %2399 = vmatprep.subr.bf16.mxu0 0
        %2400 = vmatpush1.bf16.msra.mxu0 0
        %2401 = vmatprep.subr.bf16.mxu0 0
        %2402 = vmatpush1.bf16.msra.mxu0 0
        %2403 = vmatprep.subr.bf16.mxu0 0
        %2404 = vmatpush1.bf16.msra.mxu0 0
        %2405 = vmatprep.subr.bf16.mxu0 0
        %2406 = vmatpush1.bf16.msra.mxu0 0
        %2407 = vmatprep.subr.bf16.mxu0 0
        %2408 = vmatpush1.bf16.msra.mxu0 %v2043
        %2409 = vmatprep.subr.bf16.mxu0 0
        %2410 = vmatpush2.bf16.msra.mxu0 0
        %2411 = vmatprep.subr.bf16.mxu0 0
        %2412 = vmatpush2.bf16.msra.mxu0 0
        %2413 = vmatprep.subr.bf16.mxu0 0
        %2414 = vmatpush2.bf16.msra.mxu0 0
        %2415 = vmatprep.subr.bf16.mxu0 0
        %2416 = vmatpush2.bf16.msra.mxu0 0
        %2417 = vmatprep.subr.bf16.mxu0 0
        %2418 = vmatpush2.bf16.msra.mxu0 0
        %2419 = vmatprep.subr.bf16.mxu0 0
        %2420 = vmatpush2.bf16.msra.mxu0 0
        %2421 = vmatprep.subr.bf16.mxu0 0
        %2422 = vmatpush2.bf16.msra.mxu0 0
        %2423 = vmatprep.subr.bf16.mxu0 0
        %2424 = vmatpush2.bf16.msra.mxu0 0
        %2425 = vmatprep.mubr.bf16.mxu0 0
        %2426 = vmatmul.mubr.bf16.gmra.mxu0 %v2391
        %v2427 = vpop.f32.mrf.mxu0
        %v2428 = vadd.f32 0.0, %v2427
        %v2429 = vpop.f32.mrf.mxu0
        %v2430 = vpop.f32.mrf.mxu0
        %v2431 = vadd.f32 0.0, %v2430
        %v2432 = vpop.f32.mrf.mxu0
        %2433 = vdwg.mxu0
        %v2434 = vrcp.pop %v2385
        %v2435 = vrcp.pop %v2388
        %v2436 = vmul.f32 %v2428, %v2434
        %v2437 = vmul.f32 %v2431, %v2435
        %v2438 = vpack.c.bf16 %v2437, %v2436
        %v2440 = vunpack.c.l.b16 %v2438
        %v2441 = vunpack.c.h.b16 %v2438
        %v2442 = vpack.c.b16 %v2440, %v2440
        %v2443 = vpack.c.b16 %v2441, %v2441
        %2446 = vst.msk [vmem:[#allocation2 + $0x4] sm:$0xf] %vm2178, %v2442
        %2447 = vst.msk [vmem:[#allocation2 + $0x10] sm:$0xf] %vm2178, %v2443
        %2449 = vrot.lane.b32.xlu0 %v2037, 64
        %v2450 = vpop.permute.xlu0 %2449
        %2452 = vrot.lane.b32.xlu0 %v2040, 64
        %v2453 = vpop.permute.xlu0 %2452
        %v2455 = vsel %vm2052, %v2450, 0
        %v2458 = vsel %vm2052, %v2453, 0
        %2460 = vmatprep.subr.bf16.mxu0 0
        %2461 = vmatpush1.bf16.xpose.msra.mxu0 0
        %2462 = vmatprep.subr.bf16.mxu0 0
        %2463 = vmatpush1.bf16.xpose.msra.mxu0 0
        %2464 = vmatprep.subr.bf16.mxu0 0
        %2465 = vmatpush1.bf16.xpose.msra.mxu0 0
        %2466 = vmatprep.subr.bf16.mxu0 0
        %2467 = vmatpush1.bf16.xpose.msra.mxu0 0
        %2468 = vmatprep.subr.bf16.mxu0 0
        %2469 = vmatpush1.bf16.xpose.msra.mxu0 0
        %2470 = vmatprep.subr.bf16.mxu0 0
        %2471 = vmatpush1.bf16.xpose.msra.mxu0 0
        %2472 = vmatprep.subr.bf16.mxu0 0
        %2473 = vmatpush1.bf16.xpose.msra.mxu0 0
        %2474 = vmatprep.subr.bf16.mxu0 0
        %2475 = vmatpush1.bf16.xpose.msra.mxu0 %v2458
        %2476 = vmatprep.subr.bf16.mxu0 0
        %2477 = vmatpush2.bf16.xpose.msra.mxu0 0
        %2478 = vmatprep.subr.bf16.mxu0 0
        %2479 = vmatpush2.bf16.xpose.msra.mxu0 0
        %2480 = vmatprep.subr.bf16.mxu0 0
        %2481 = vmatpush2.bf16.xpose.msra.mxu0 0
        %2482 = vmatprep.subr.bf16.mxu0 0
        %2483 = vmatpush2.bf16.xpose.msra.mxu0 0
        %2484 = vmatprep.subr.bf16.mxu0 0
        %2485 = vmatpush2.bf16.xpose.msra.mxu0 0
        %2486 = vmatprep.subr.bf16.mxu0 0
        %2487 = vmatpush2.bf16.xpose.msra.mxu0 0
        %2488 = vmatprep.subr.bf16.mxu0 0
        %2489 = vmatpush2.bf16.xpose.msra.mxu0 0
        %2490 = vmatprep.subr.bf16.mxu0 0
        %2491 = vmatpush2.bf16.xpose.msra.mxu0 0
        %2492 = vmatprep.mubr.bf16.mxu0 0
        %2493 = vmatmul.mubr.bf16.gmra.mxu0 %v2455
        %v2494 = vpop.f32.mrf.mxu0
        %v2495 = vadd.f32 0.0, %v2494
        %v2496 = vpop.f32.mrf.mxu0
        %v2497 = vpop.f32.mrf.mxu0
        %v2498 = vadd.f32 0.0, %v2497
        %v2499 = vpop.f32.mrf.mxu0
        %2500 = vdwg.mxu0
        %v2501 = vsel %vm2050, %v2495, -1e+30
        %v2502 = vsel %vm2051, %v2498, -1e+30
        %v2503 = vsel %vm2102, %v2501, -inf
        %2504 = vmax.xlane.f32.xlu0 %v2503
        %v2505 = vpop.xlane.xlu0 %2504
        %v2506 = vsel %vm2102, %v2502, -inf
        %2507 = vmax.xlane.f32.xlu0 %v2506
        %v2508 = vpop.xlane.xlu0 %2507
        %v2509 = vsub.f32 %v2501, %v2505
        %v2510 = vsub.f32 %v2502, %v2508
        %v2511 = vmul.f32 %v2509, 1.442695
        %v2512 = vpow.pop %v2511
        %v2513 = vmul.f32 %v2510, 1.442695
        %v2514 = vpow.pop %v2513
        %v2515 = vsel %vm2102, %v2512, 0.0
        %2516 = vadd.xlane.f32.xlu0 %v2515
        %v2517 = vpop.xlane.xlu0 %2516
        %v2518 = vsel %vm2102, %v2514, 0.0
        %2519 = vadd.xlane.f32.xlu0 %v2518
        %v2520 = vpop.xlane.xlu0 %2519
        %v2521 = vpack.c.bf16 %v2514, %v2512
        %2523 = vrot.lane.b32.xlu0 %v2043, 64
        %v2524 = vpop.permute.xlu0 %2523
        %v2527 = vsel %vm2102, %v2521, 0
        %2529 = vmatprep.subr.bf16.mxu0 0
        %2530 = vmatpush1.bf16.msra.mxu0 0
        %2531 = vmatprep.subr.bf16.mxu0 0
        %2532 = vmatpush1.bf16.msra.mxu0 0
        %2533 = vmatprep.subr.bf16.mxu0 0
        %2534 = vmatpush1.bf16.msra.mxu0 0
        %2535 = vmatprep.subr.bf16.mxu0 0
        %2536 = vmatpush1.bf16.msra.mxu0 0
        %2537 = vmatprep.subr.bf16.mxu0 0
        %2538 = vmatpush1.bf16.msra.mxu0 0
        %2539 = vmatprep.subr.bf16.mxu0 0
        %2540 = vmatpush1.bf16.msra.mxu0 0
        %2541 = vmatprep.subr.bf16.mxu0 0
        %2542 = vmatpush1.bf16.msra.mxu0 0
        %2543 = vmatprep.subr.bf16.mxu0 0
        %2544 = vmatpush1.bf16.msra.mxu0 %v2524
        %2545 = vmatprep.subr.bf16.mxu0 0
        %2546 = vmatpush2.bf16.msra.mxu0 0
        %2547 = vmatprep.subr.bf16.mxu0 0
        %2548 = vmatpush2.bf16.msra.mxu0 0
        %2549 = vmatprep.subr.bf16.mxu0 0
        %2550 = vmatpush2.bf16.msra.mxu0 0
        %2551 = vmatprep.subr.bf16.mxu0 0
        %2552 = vmatpush2.bf16.msra.mxu0 0
        %2553 = vmatprep.subr.bf16.mxu0 0
        %2554 = vmatpush2.bf16.msra.mxu0 0
        %2555 = vmatprep.subr.bf16.mxu0 0
        %2556 = vmatpush2.bf16.msra.mxu0 0
        %2557 = vmatprep.subr.bf16.mxu0 0
        %2558 = vmatpush2.bf16.msra.mxu0 0
        %2559 = vmatprep.subr.bf16.mxu0 0
        %2560 = vmatpush2.bf16.msra.mxu0 0
        %2561 = vmatprep.mubr.bf16.mxu0 0
        %2562 = vmatmul.mubr.bf16.gmra.mxu0 %v2527
        %v2563 = vpop.f32.mrf.mxu0
        %v2564 = vadd.f32 0.0, %v2563
        %v2565 = vpop.f32.mrf.mxu0
        %v2566 = vpop.f32.mrf.mxu0
        %v2567 = vadd.f32 0.0, %v2566
        %v2568 = vpop.f32.mrf.mxu0
        %2569 = vdwg.mxu0
        %v2570 = vrcp.pop %v2517
        %v2571 = vrcp.pop %v2520
        %v2572 = vmul.f32 %v2564, %v2570
        %v2573 = vmul.f32 %v2567, %v2571
        %v2574 = vpack.c.bf16 %v2573, %v2572
        %v2576 = vunpack.c.l.b16 %v2574
        %v2577 = vunpack.c.h.b16 %v2574
        %v2578 = vpack.c.b16 %v2576, %v2576
        %v2579 = vpack.c.b16 %v2577, %v2577
        %2580 = vrot.lane.b32.xlu0 %v2578, 64
        %v2581 = vpop.permute.xlu0 %2580
        %2582 = vrot.lane.b32.xlu0 %v2579, 64
        %v2583 = vpop.permute.xlu0 %2582
        %2586 = vst.msk [vmem:[#allocation2 + $0x4] sm:$0xf] %vm2319, %v2581
        %2587 = vst.msk [vmem:[#allocation2 + $0x10] sm:$0xf] %vm2319, %v2583
        %v2589 = vsel %vm2052, %v2038, 0
        %v2592 = vsel %vm2052, %v2041, 0
        %2594 = vmatprep.subr.bf16.mxu0 0
        %2595 = vmatpush1.bf16.xpose.msra.mxu0 0
        %2596 = vmatprep.subr.bf16.mxu0 0
        %2597 = vmatpush1.bf16.xpose.msra.mxu0 0
        %2598 = vmatprep.subr.bf16.mxu0 0
        %2599 = vmatpush1.bf16.xpose.msra.mxu0 0
        %2600 = vmatprep.subr.bf16.mxu0 0
        %2601 = vmatpush1.bf16.xpose.msra.mxu0 0
        %2602 = vmatprep.subr.bf16.mxu0 0
        %2603 = vmatpush1.bf16.xpose.msra.mxu0 0
        %2604 = vmatprep.subr.bf16.mxu0 0
        %2605 = vmatpush1.bf16.xpose.msra.mxu0 0
        %2606 = vmatprep.subr.bf16.mxu0 0
        %2607 = vmatpush1.bf16.xpose.msra.mxu0 0
        %2608 = vmatprep.subr.bf16.mxu0 0
        %2609 = vmatpush1.bf16.xpose.msra.mxu0 %v2592
        %2610 = vmatprep.subr.bf16.mxu0 0
        %2611 = vmatpush2.bf16.xpose.msra.mxu0 0
        %2612 = vmatprep.subr.bf16.mxu0 0
        %2613 = vmatpush2.bf16.xpose.msra.mxu0 0
        %2614 = vmatprep.subr.bf16.mxu0 0
        %2615 = vmatpush2.bf16.xpose.msra.mxu0 0
        %2616 = vmatprep.subr.bf16.mxu0 0
        %2617 = vmatpush2.bf16.xpose.msra.mxu0 0
        %2618 = vmatprep.subr.bf16.mxu0 0
        %2619 = vmatpush2.bf16.xpose.msra.mxu0 0
        %2620 = vmatprep.subr.bf16.mxu0 0
        %2621 = vmatpush2.bf16.xpose.msra.mxu0 0
        %2622 = vmatprep.subr.bf16.mxu0 0
        %2623 = vmatpush2.bf16.xpose.msra.mxu0 0
        %2624 = vmatprep.subr.bf16.mxu0 0
        %2625 = vmatpush2.bf16.xpose.msra.mxu0 0
        %2626 = vmatprep.mubr.bf16.mxu0 0
        %2627 = vmatmul.mubr.bf16.gmra.mxu0 %v2589
        %v2628 = vpop.f32.mrf.mxu0
        %v2629 = vadd.f32 0.0, %v2628
        %v2630 = vpop.f32.mrf.mxu0
        %v2631 = vpop.f32.mrf.mxu0
        %v2632 = vadd.f32 0.0, %v2631
        %v2633 = vpop.f32.mrf.mxu0
        %2634 = vdwg.mxu0
        %v2635 = vsel %vm2050, %v2629, -1e+30
        %v2636 = vsel %vm2051, %v2632, -1e+30
        %v2637 = vsel %vm2102, %v2635, -inf
        %2638 = vmax.xlane.f32.xlu0 %v2637
        %v2639 = vpop.xlane.xlu0 %2638
        %v2640 = vsel %vm2102, %v2636, -inf
        %2641 = vmax.xlane.f32.xlu0 %v2640
        %v2642 = vpop.xlane.xlu0 %2641
        %v2643 = vsub.f32 %v2635, %v2639
        %v2644 = vsub.f32 %v2636, %v2642
        %v2645 = vmul.f32 %v2643, 1.442695
        %v2646 = vpow.pop %v2645
        %v2647 = vmul.f32 %v2644, 1.442695
        %v2648 = vpow.pop %v2647
        %v2649 = vsel %vm2102, %v2646, 0.0
        %2650 = vadd.xlane.f32.xlu0 %v2649
        %v2651 = vpop.xlane.xlu0 %2650
        %v2652 = vsel %vm2102, %v2648, 0.0
        %2653 = vadd.xlane.f32.xlu0 %v2652
        %v2654 = vpop.xlane.xlu0 %2653
        %v2655 = vpack.c.bf16 %v2648, %v2646
        %v2657 = vsel %vm2102, %v2655, 0
        %2659 = vmatprep.subr.bf16.mxu0 0
        %2660 = vmatpush1.bf16.msra.mxu0 0
        %2661 = vmatprep.subr.bf16.mxu0 0
        %2662 = vmatpush1.bf16.msra.mxu0 0
        %2663 = vmatprep.subr.bf16.mxu0 0
        %2664 = vmatpush1.bf16.msra.mxu0 0
        %2665 = vmatprep.subr.bf16.mxu0 0
        %2666 = vmatpush1.bf16.msra.mxu0 0
        %2667 = vmatprep.subr.bf16.mxu0 0
        %2668 = vmatpush1.bf16.msra.mxu0 0
        %2669 = vmatprep.subr.bf16.mxu0 0
        %2670 = vmatpush1.bf16.msra.mxu0 0
        %2671 = vmatprep.subr.bf16.mxu0 0
        %2672 = vmatpush1.bf16.msra.mxu0 0
        %2673 = vmatprep.subr.bf16.mxu0 0
        %2674 = vmatpush1.bf16.msra.mxu0 %v2044
        %2675 = vmatprep.subr.bf16.mxu0 0
        %2676 = vmatpush2.bf16.msra.mxu0 0
        %2677 = vmatprep.subr.bf16.mxu0 0
        %2678 = vmatpush2.bf16.msra.mxu0 0
        %2679 = vmatprep.subr.bf16.mxu0 0
        %2680 = vmatpush2.bf16.msra.mxu0 0
        %2681 = vmatprep.subr.bf16.mxu0 0
        %2682 = vmatpush2.bf16.msra.mxu0 0
        %2683 = vmatprep.subr.bf16.mxu0 0
        %2684 = vmatpush2.bf16.msra.mxu0 0
        %2685 = vmatprep.subr.bf16.mxu0 0
        %2686 = vmatpush2.bf16.msra.mxu0 0
        %2687 = vmatprep.subr.bf16.mxu0 0
        %2688 = vmatpush2.bf16.msra.mxu0 0
        %2689 = vmatprep.subr.bf16.mxu0 0
        %2690 = vmatpush2.bf16.msra.mxu0 0
        %2691 = vmatprep.mubr.bf16.mxu0 0
        %2692 = vmatmul.mubr.bf16.gmra.mxu0 %v2657
        %v2693 = vpop.f32.mrf.mxu0
        %v2694 = vadd.f32 0.0, %v2693
        %v2695 = vpop.f32.mrf.mxu0
        %v2696 = vpop.f32.mrf.mxu0
        %v2697 = vadd.f32 0.0, %v2696
        %v2698 = vpop.f32.mrf.mxu0
        %2699 = vdwg.mxu0
        %v2700 = vrcp.pop %v2651
        %v2701 = vrcp.pop %v2654
        %v2702 = vmul.f32 %v2694, %v2700
        %v2703 = vmul.f32 %v2697, %v2701
        %v2704 = vpack.c.bf16 %v2703, %v2702
        %v2706 = vunpack.c.l.b16 %v2704
        %v2707 = vunpack.c.h.b16 %v2704
        %v2708 = vpack.c.b16 %v2706, %v2706
        %v2709 = vpack.c.b16 %v2707, %v2707
        %2712 = vst.msk [vmem:[#allocation2 + $0x8] sm:$0xf] %vm2178, %v2708
        %2713 = vst.msk [vmem:[#allocation2 + $0x14] sm:$0xf] %vm2178, %v2709
        %2715 = vrot.lane.b32.xlu0 %v2038, 64
        %v2716 = vpop.permute.xlu0 %2715
        %2718 = vrot.lane.b32.xlu0 %v2041, 64
        %v2719 = vpop.permute.xlu0 %2718
        %v2721 = vsel %vm2052, %v2716, 0
        %v2724 = vsel %vm2052, %v2719, 0
        %2726 = vmatprep.subr.bf16.mxu0 0
        %2727 = vmatpush1.bf16.xpose.msra.mxu0 0
        %2728 = vmatprep.subr.bf16.mxu0 0
        %2729 = vmatpush1.bf16.xpose.msra.mxu0 0
        %2730 = vmatprep.subr.bf16.mxu0 0
        %2731 = vmatpush1.bf16.xpose.msra.mxu0 0
        %2732 = vmatprep.subr.bf16.mxu0 0
        %2733 = vmatpush1.bf16.xpose.msra.mxu0 0
        %2734 = vmatprep.subr.bf16.mxu0 0
        %2735 = vmatpush1.bf16.xpose.msra.mxu0 0
        %2736 = vmatprep.subr.bf16.mxu0 0
        %2737 = vmatpush1.bf16.xpose.msra.mxu0 0
        %2738 = vmatprep.subr.bf16.mxu0 0
        %2739 = vmatpush1.bf16.xpose.msra.mxu0 0
        %2740 = vmatprep.subr.bf16.mxu0 0
        %2741 = vmatpush1.bf16.xpose.msra.mxu0 %v2724
        %2742 = vmatprep.subr.bf16.mxu0 0
        %2743 = vmatpush2.bf16.xpose.msra.mxu0 0
        %2744 = vmatprep.subr.bf16.mxu0 0
        %2745 = vmatpush2.bf16.xpose.msra.mxu0 0
        %2746 = vmatprep.subr.bf16.mxu0 0
        %2747 = vmatpush2.bf16.xpose.msra.mxu0 0
        %2748 = vmatprep.subr.bf16.mxu0 0
        %2749 = vmatpush2.bf16.xpose.msra.mxu0 0
        %2750 = vmatprep.subr.bf16.mxu0 0
        %2751 = vmatpush2.bf16.xpose.msra.mxu0 0
        %2752 = vmatprep.subr.bf16.mxu0 0
        %2753 = vmatpush2.bf16.xpose.msra.mxu0 0
        %2754 = vmatprep.subr.bf16.mxu0 0
        %2755 = vmatpush2.bf16.xpose.msra.mxu0 0
        %2756 = vmatprep.subr.bf16.mxu0 0
        %2757 = vmatpush2.bf16.xpose.msra.mxu0 0
        %2758 = vmatprep.mubr.bf16.mxu0 0
        %2759 = vmatmul.mubr.bf16.gmra.mxu0 %v2721
        %v2760 = vpop.f32.mrf.mxu0
        %v2761 = vadd.f32 0.0, %v2760
        %v2762 = vpop.f32.mrf.mxu0
        %v2763 = vpop.f32.mrf.mxu0
        %v2764 = vadd.f32 0.0, %v2763
        %v2765 = vpop.f32.mrf.mxu0
        %2766 = vdwg.mxu0
        %v2767 = vsel %vm2050, %v2761, -1e+30
        %v2768 = vsel %vm2051, %v2764, -1e+30
        %v2769 = vsel %vm2102, %v2767, -inf
        %2770 = vmax.xlane.f32.xlu0 %v2769
        %v2771 = vpop.xlane.xlu0 %2770
        %v2772 = vsel %vm2102, %v2768, -inf
        %2773 = vmax.xlane.f32.xlu0 %v2772
        %v2774 = vpop.xlane.xlu0 %2773
        %v2775 = vsub.f32 %v2767, %v2771
        %v2776 = vsub.f32 %v2768, %v2774
        %v2777 = vmul.f32 %v2775, 1.442695
        %v2778 = vpow.pop %v2777
        %v2779 = vmul.f32 %v2776, 1.442695
        %v2780 = vpow.pop %v2779
        %v2781 = vsel %vm2102, %v2778, 0.0
        %2782 = vadd.xlane.f32.xlu0 %v2781
        %v2783 = vpop.xlane.xlu0 %2782
        %v2784 = vsel %vm2102, %v2780, 0.0
        %2785 = vadd.xlane.f32.xlu0 %v2784
        %v2786 = vpop.xlane.xlu0 %2785
        %v2787 = vpack.c.bf16 %v2780, %v2778
        %2789 = vrot.lane.b32.xlu0 %v2044, 64
        %v2790 = vpop.permute.xlu0 %2789
        %v2793 = vsel %vm2102, %v2787, 0
        %2795 = vmatprep.subr.bf16.mxu0 0
        %2796 = vmatpush1.bf16.msra.mxu0 0
        %2797 = vmatprep.subr.bf16.mxu0 0
        %2798 = vmatpush1.bf16.msra.mxu0 0
        %2799 = vmatprep.subr.bf16.mxu0 0
        %2800 = vmatpush1.bf16.msra.mxu0 0
        %2801 = vmatprep.subr.bf16.mxu0 0
        %2802 = vmatpush1.bf16.msra.mxu0 0
        %2803 = vmatprep.subr.bf16.mxu0 0
        %2804 = vmatpush1.bf16.msra.mxu0 0
        %2805 = vmatprep.subr.bf16.mxu0 0
        %2806 = vmatpush1.bf16.msra.mxu0 0
        %2807 = vmatprep.subr.bf16.mxu0 0
        %2808 = vmatpush1.bf16.msra.mxu0 0
        %2809 = vmatprep.subr.bf16.mxu0 0
        %2810 = vmatpush1.bf16.msra.mxu0 %v2790
        %2811 = vmatprep.subr.bf16.mxu0 0
        %2812 = vmatpush2.bf16.msra.mxu0 0
        %2813 = vmatprep.subr.bf16.mxu0 0
        %2814 = vmatpush2.bf16.msra.mxu0 0
        %2815 = vmatprep.subr.bf16.mxu0 0
        %2816 = vmatpush2.bf16.msra.mxu0 0
        %2817 = vmatprep.subr.bf16.mxu0 0
        %2818 = vmatpush2.bf16.msra.mxu0 0
        %2819 = vmatprep.subr.bf16.mxu0 0
        %2820 = vmatpush2.bf16.msra.mxu0 0
        %2821 = vmatprep.subr.bf16.mxu0 0
        %2822 = vmatpush2.bf16.msra.mxu0 0
        %2823 = vmatprep.subr.bf16.mxu0 0
        %2824 = vmatpush2.bf16.msra.mxu0 0
        %2825 = vmatprep.subr.bf16.mxu0 0
        %2826 = vmatpush2.bf16.msra.mxu0 0
        %2827 = vmatprep.mubr.bf16.mxu0 0
        %2828 = vmatmul.mubr.bf16.gmra.mxu0 %v2793
        %v2829 = vpop.f32.mrf.mxu0
        %v2830 = vadd.f32 0.0, %v2829
        %v2831 = vpop.f32.mrf.mxu0
        %v2832 = vpop.f32.mrf.mxu0
        %v2833 = vadd.f32 0.0, %v2832
        %v2834 = vpop.f32.mrf.mxu0
        %2835 = vdwg.mxu0
        %v2836 = vrcp.pop %v2783
        %v2837 = vrcp.pop %v2786
        %v2838 = vmul.f32 %v2830, %v2836
        %v2839 = vmul.f32 %v2833, %v2837
        %v2840 = vpack.c.bf16 %v2839, %v2838
        %v2842 = vunpack.c.l.b16 %v2840
        %v2843 = vunpack.c.h.b16 %v2840
        %v2844 = vpack.c.b16 %v2842, %v2842
        %v2845 = vpack.c.b16 %v2843, %v2843
        %2846 = vrot.lane.b32.xlu0 %v2844, 64
        %v2847 = vpop.permute.xlu0 %2846
        %2848 = vrot.lane.b32.xlu0 %v2845, 64
        %v2849 = vpop.permute.xlu0 %2848
        %2852 = vst.msk [vmem:[#allocation2 + $0x8] sm:$0xf] %vm2319, %v2847
        %2853 = vst.msk [vmem:[#allocation2 + $0x14] sm:$0xf] %vm2319, %v2849
        %v2854 = vld [vmem:[#allocation2] sm:$0xff]
        %v2855 = vld [vmem:[#allocation2 + $0x8] sm:$0xf]
        %v2856 = vld [vmem:[#allocation2 + $0xc] sm:$0xff]
        %v2857 = vld [vmem:[#allocation2 + $0x14] sm:$0xf]
        %v2858 = vld [vmem:[#allocation8] sm:$0xff]
        %v2859 = vld [vmem:[#allocation8 + $0x8] sm:$0xf]
        %v2860 = vld [vmem:[#allocation8 + $0xc] sm:$0xff]
        %v2861 = vld [vmem:[#allocation8 + $0x14] sm:$0xf]
        %v2862 = vld [vmem:[#allocation8 + $0x18] sm:$0xff]
        %v2863 = vld [vmem:[#allocation8 + $0x20] sm:$0xf]
        %v2864 = vld [vmem:[#allocation8 + $0x24] sm:$0xff]
        %v2865 = vld [vmem:[#allocation8 + $0x2c] sm:$0xf]
        %v2866 = vld [vmem:[#allocation8 + $0x30] sm:$0xff]
        %v2867 = vld [vmem:[#allocation8 + $0x38] sm:$0xf]
        %v2868 = vld [vmem:[#allocation8 + $0x3c] sm:$0xff]
        %v2869 = vld [vmem:[#allocation8 + $0x44] sm:$0xf]
        %v2870 = vld [vmem:[#allocation8 + $0x48] sm:$0xff]
        %v2871 = vld [vmem:[#allocation8 + $0x50] sm:$0xf]
        %v2872 = vld [vmem:[#allocation8 + $0x54] sm:$0xff]
        %v2873 = vld [vmem:[#allocation8 + $0x5c] sm:$0xf]
        %v2874 = vld [vmem:[#allocation8 + $0x60] sm:$0xff]
        %v2875 = vld [vmem:[#allocation8 + $0x68] sm:$0xf]
        %v2876 = vld [vmem:[#allocation8 + $0x6c] sm:$0xff]
        %v2877 = vld [vmem:[#allocation8 + $0x74] sm:$0xf]
        %v2878 = vld [vmem:[#allocation8 + $0x78] sm:$0xff]
        %v2879 = vld [vmem:[#allocation8 + $0x80] sm:$0xf]
        %v2880 = vld [vmem:[#allocation8 + $0x84] sm:$0xff]
        %v2881 = vld [vmem:[#allocation8 + $0x8c] sm:$0xf]
        %v2882 = vld [vmem:[#allocation8 + $0x90] sm:$0xff]
        %v2883 = vld [vmem:[#allocation8 + $0x98] sm:$0xf]
        %v2884 = vld [vmem:[#allocation8 + $0x9c] sm:$0xff]
        %v2885 = vld [vmem:[#allocation8 + $0xa4] sm:$0xf]
        %v2886 = vld [vmem:[#allocation8 + $0xa8] sm:$0xff]
        %v2887 = vld [vmem:[#allocation8 + $0xb0] sm:$0xf]
        %v2888 = vld [vmem:[#allocation8 + $0xb4] sm:$0xff]
        %v2889 = vld [vmem:[#allocation8 + $0xbc] sm:$0xf]
        %v2890 = vld [vmem:[#allocation8 + $0xc0] sm:$0xff]
        %v2891 = vld [vmem:[#allocation8 + $0xc8] sm:$0xf]
        %v2892 = vld [vmem:[#allocation8 + $0xcc] sm:$0xff]
        %v2893 = vld [vmem:[#allocation8 + $0xd4] sm:$0xf]
        %v2894 = vld [vmem:[#allocation8 + $0xd8] sm:$0xff]
        %v2895 = vld [vmem:[#allocation8 + $0xe0] sm:$0xf]
        %v2896 = vld [vmem:[#allocation8 + $0xe4] sm:$0xff]
        %v2897 = vld [vmem:[#allocation8 + $0xec] sm:$0xf]
        %v2898 = vld [vmem:[#allocation8 + $0xf0] sm:$0xff]
        %v2899 = vld [vmem:[#allocation8 + $0xf8] sm:$0xf]
        %v2900 = vld [vmem:[#allocation8 + $0xfc] sm:$0xff]
        %v2901 = vld [vmem:[#allocation8 + $0x104] sm:$0xf]
        %v2902 = vld [vmem:[#allocation8 + $0x108] sm:$0xff]
        %v2903 = vld [vmem:[#allocation8 + $0x110] sm:$0xf]
        %v2904 = vld [vmem:[#allocation8 + $0x114] sm:$0xff]
        %v2905 = vld [vmem:[#allocation8 + $0x11c] sm:$0xf]
        %v2906 = vld [vmem:[#allocation8 + $0x120] sm:$0xff]
        %v2907 = vld [vmem:[#allocation8 + $0x128] sm:$0xf]
        %v2908 = vld [vmem:[#allocation8 + $0x12c] sm:$0xff]
        %v2909 = vld [vmem:[#allocation8 + $0x134] sm:$0xf]
        %v2910 = vld [vmem:[#allocation8 + $0x138] sm:$0xff]
        %v2911 = vld [vmem:[#allocation8 + $0x140] sm:$0xf]
        %v2912 = vld [vmem:[#allocation8 + $0x144] sm:$0xff]
        %v2913 = vld [vmem:[#allocation8 + $0x14c] sm:$0xf]
        %v2914 = vld [vmem:[#allocation8 + $0x150] sm:$0xff]
        %v2915 = vld [vmem:[#allocation8 + $0x158] sm:$0xf]
        %v2916 = vld [vmem:[#allocation8 + $0x15c] sm:$0xff]
        %v2917 = vld [vmem:[#allocation8 + $0x164] sm:$0xf]
        %v2918 = vld [vmem:[#allocation8 + $0x168] sm:$0xff]
        %v2919 = vld [vmem:[#allocation8 + $0x170] sm:$0xf]
        %v2920 = vld [vmem:[#allocation8 + $0x174] sm:$0xff]
        %v2921 = vld [vmem:[#allocation8 + $0x17c] sm:$0xf]
        %v2922 = vld [vmem:[#allocation8 + $0x180] sm:$0xff]
        %v2923 = vld [vmem:[#allocation8 + $0x188] sm:$0xf]
        %v2924 = vld [vmem:[#allocation8 + $0x18c] sm:$0xff]
        %v2925 = vld [vmem:[#allocation8 + $0x194] sm:$0xf]
        %v2926 = vld [vmem:[#allocation8 + $0x198] sm:$0xff]
        %v2927 = vld [vmem:[#allocation8 + $0x1a0] sm:$0xf]
        %v2928 = vld [vmem:[#allocation8 + $0x1a4] sm:$0xff]
        %v2929 = vld [vmem:[#allocation8 + $0x1ac] sm:$0xf]
        %v2930 = vld [vmem:[#allocation8 + $0x1b0] sm:$0xff]
        %v2931 = vld [vmem:[#allocation8 + $0x1b8] sm:$0xf]
        %v2932 = vld [vmem:[#allocation8 + $0x1bc] sm:$0xff]
        %v2933 = vld [vmem:[#allocation8 + $0x1c4] sm:$0xf]
        %v2934 = vld [vmem:[#allocation8 + $0x1c8] sm:$0xff]
        %v2935 = vld [vmem:[#allocation8 + $0x1d0] sm:$0xf]
        %v2936 = vld [vmem:[#allocation8 + $0x1d4] sm:$0xff]
        %v2937 = vld [vmem:[#allocation8 + $0x1dc] sm:$0xf]
        %v2938 = vld [vmem:[#allocation8 + $0x1e0] sm:$0xff]
        %v2939 = vld [vmem:[#allocation8 + $0x1e8] sm:$0xf]
        %v2940 = vld [vmem:[#allocation8 + $0x1ec] sm:$0xff]
        %v2941 = vld [vmem:[#allocation8 + $0x1f4] sm:$0xf]
        %v2942 = vld [vmem:[#allocation8 + $0x1f8] sm:$0xff]
        %v2943 = vld [vmem:[#allocation8 + $0x200] sm:$0xf]
        %v2944 = vld [vmem:[#allocation8 + $0x204] sm:$0xff]
        %v2945 = vld [vmem:[#allocation8 + $0x20c] sm:$0xf]
        %v2946 = vld [vmem:[#allocation8 + $0x210] sm:$0xff]
        %v2947 = vld [vmem:[#allocation8 + $0x218] sm:$0xf]
        %v2948 = vld [vmem:[#allocation8 + $0x21c] sm:$0xff]
        %v2949 = vld [vmem:[#allocation8 + $0x224] sm:$0xf]
        %v2950 = vld [vmem:[#allocation8 + $0x228] sm:$0xff]
        %v2951 = vld [vmem:[#allocation8 + $0x230] sm:$0xf]
        %v2952 = vld [vmem:[#allocation8 + $0x234] sm:$0xff]
        %v2953 = vld [vmem:[#allocation8 + $0x23c] sm:$0xf]
        %v2954 = vld [vmem:[%s3] sm:$0x7]
        %v2956 = vlaneseq
        %v2957 = vshrl.u32 %v2956, 7
        %v2958 = vsub.s32 0, %v2957
        %v2959 = vrot.slane %v2954, %v2958
        %v2960 = vlaneseq
        %v2961 = vshrl.u32 %v2960, 7
        %v2962 = vsub.s32 1, %v2961
        %v2963 = vrot.slane %v2954, %v2962
        %v2964 = vlaneseq
        %v2965 = vshrl.u32 %v2964, 7
        %v2966 = vsub.s32 2, %v2965
        %v2967 = vrot.slane %v2954, %v2966
        %v2975 = vunpack.c.l.b16 %v2854
        %v2976 = vunpack.c.h.b16 %v2854
        %v2977 = vunpack.c.l.b16 %v2855
        %v2978 = vunpack.c.l.b16 %v2856
        %v2979 = vunpack.c.h.b16 %v2856
        %v2980 = vunpack.c.l.b16 %v2857
        %v2981 = vpack.c.b16 %v2978, %v2975
        %v2982 = vpack.c.b16 %v2979, %v2976
        %v2983 = vpack.c.b16 %v2980, %v2977
        %v3083 = vunpack.c.l.b16 %v2858
        %v3084 = vunpack.c.h.b16 %v2858
        %v3085 = vunpack.c.l.b16 %v2859
        %v3086 = vunpack.c.l.b16 %v2860
        %v3087 = vunpack.c.h.b16 %v2860
        %v3088 = vunpack.c.l.b16 %v2861
        %v3089 = vunpack.c.l.b16 %v2862
        %v3090 = vunpack.c.h.b16 %v2862
        %v3091 = vunpack.c.l.b16 %v2863
        %v3092 = vunpack.c.l.b16 %v2864
        %v3093 = vunpack.c.h.b16 %v2864
        %v3094 = vunpack.c.l.b16 %v2865
        %v3095 = vunpack.c.l.b16 %v2866
        %v3096 = vunpack.c.h.b16 %v2866
        %v3097 = vunpack.c.l.b16 %v2867
        %v3098 = vunpack.c.l.b16 %v2868
        %v3099 = vunpack.c.h.b16 %v2868
        %v3100 = vunpack.c.l.b16 %v2869
        %v3101 = vunpack.c.l.b16 %v2870
        %v3102 = vunpack.c.h.b16 %v2870
        %v3103 = vunpack.c.l.b16 %v2871
        %v3104 = vunpack.c.l.b16 %v2872
        %v3105 = vunpack.c.h.b16 %v2872
        %v3106 = vunpack.c.l.b16 %v2873
        %v3107 = vunpack.c.l.b16 %v2874
        %v3108 = vunpack.c.h.b16 %v2874
        %v3109 = vunpack.c.l.b16 %v2875
        %v3110 = vunpack.c.l.b16 %v2876
        %v3111 = vunpack.c.h.b16 %v2876
        %v3112 = vunpack.c.l.b16 %v2877
        %v3113 = vunpack.c.l.b16 %v2878
        %v3114 = vunpack.c.h.b16 %v2878
        %v3115 = vunpack.c.l.b16 %v2879
        %v3116 = vunpack.c.l.b16 %v2880
        %v3117 = vunpack.c.h.b16 %v2880
        %v3118 = vunpack.c.l.b16 %v2881
        %v3119 = vunpack.c.l.b16 %v2882
        %v3120 = vunpack.c.h.b16 %v2882
        %v3121 = vunpack.c.l.b16 %v2883
        %v3122 = vunpack.c.l.b16 %v2884
        %v3123 = vunpack.c.h.b16 %v2884
        %v3124 = vunpack.c.l.b16 %v2885
        %v3125 = vunpack.c.l.b16 %v2886
        %v3126 = vunpack.c.h.b16 %v2886
        %v3127 = vunpack.c.l.b16 %v2887
        %v3128 = vunpack.c.l.b16 %v2888
        %v3129 = vunpack.c.h.b16 %v2888
        %v3130 = vunpack.c.l.b16 %v2889
        %v3131 = vunpack.c.l.b16 %v2890
        %v3132 = vunpack.c.h.b16 %v2890
        %v3133 = vunpack.c.l.b16 %v2891
        %v3134 = vunpack.c.l.b16 %v2892
        %v3135 = vunpack.c.h.b16 %v2892
        %v3136 = vunpack.c.l.b16 %v2893
        %v3137 = vunpack.c.l.b16 %v2894
        %v3138 = vunpack.c.h.b16 %v2894
        %v3139 = vunpack.c.l.b16 %v2895
        %v3140 = vunpack.c.l.b16 %v2896
        %v3141 = vunpack.c.h.b16 %v2896
        %v3142 = vunpack.c.l.b16 %v2897
        %v3143 = vunpack.c.l.b16 %v2898
        %v3144 = vunpack.c.h.b16 %v2898
        %v3145 = vunpack.c.l.b16 %v2899
        %v3146 = vunpack.c.l.b16 %v2900
        %v3147 = vunpack.c.h.b16 %v2900
        %v3148 = vunpack.c.l.b16 %v2901
        %v3149 = vunpack.c.l.b16 %v2902
        %v3150 = vunpack.c.h.b16 %v2902
        %v3151 = vunpack.c.l.b16 %v2903
        %v3152 = vunpack.c.l.b16 %v2904
        %v3153 = vunpack.c.h.b16 %v2904
        %v3154 = vunpack.c.l.b16 %v2905
        %v3155 = vunpack.c.l.b16 %v2906
        %v3156 = vunpack.c.h.b16 %v2906
        %v3157 = vunpack.c.l.b16 %v2907
        %v3158 = vunpack.c.l.b16 %v2908
        %v3159 = vunpack.c.h.b16 %v2908
        %v3160 = vunpack.c.l.b16 %v2909
        %v3161 = vunpack.c.l.b16 %v2910
        %v3162 = vunpack.c.h.b16 %v2910
        %v3163 = vunpack.c.l.b16 %v2911
        %v3164 = vunpack.c.l.b16 %v2912
        %v3165 = vunpack.c.h.b16 %v2912
        %v3166 = vunpack.c.l.b16 %v2913
        %v3167 = vunpack.c.l.b16 %v2914
        %v3168 = vunpack.c.h.b16 %v2914
        %v3169 = vunpack.c.l.b16 %v2915
        %v3170 = vunpack.c.l.b16 %v2916
        %v3171 = vunpack.c.h.b16 %v2916
        %v3172 = vunpack.c.l.b16 %v2917
        %v3173 = vunpack.c.l.b16 %v2918
        %v3174 = vunpack.c.h.b16 %v2918
        %v3175 = vunpack.c.l.b16 %v2919
        %v3176 = vunpack.c.l.b16 %v2920
        %v3177 = vunpack.c.h.b16 %v2920
        %v3178 = vunpack.c.l.b16 %v2921
        %v3179 = vunpack.c.l.b16 %v2922
        %v3180 = vunpack.c.h.b16 %v2922
        %v3181 = vunpack.c.l.b16 %v2923
        %v3182 = vunpack.c.l.b16 %v2924
        %v3183 = vunpack.c.h.b16 %v2924
        %v3184 = vunpack.c.l.b16 %v2925
        %v3185 = vunpack.c.l.b16 %v2926
        %v3186 = vunpack.c.h.b16 %v2926
        %v3187 = vunpack.c.l.b16 %v2927
        %v3188 = vunpack.c.l.b16 %v2928
        %v3189 = vunpack.c.h.b16 %v2928
        %v3190 = vunpack.c.l.b16 %v2929
        %v3191 = vunpack.c.l.b16 %v2930
        %v3192 = vunpack.c.h.b16 %v2930
        %v3193 = vunpack.c.l.b16 %v2931
        %v3194 = vunpack.c.l.b16 %v2932
        %v3195 = vunpack.c.h.b16 %v2932
        %v3196 = vunpack.c.l.b16 %v2933
        %v3197 = vunpack.c.l.b16 %v2934
        %v3198 = vunpack.c.h.b16 %v2934
        %v3199 = vunpack.c.l.b16 %v2935
        %v3200 = vunpack.c.l.b16 %v2936
        %v3201 = vunpack.c.h.b16 %v2936
        %v3202 = vunpack.c.l.b16 %v2937
        %v3203 = vunpack.c.l.b16 %v2938
        %v3204 = vunpack.c.h.b16 %v2938
        %v3205 = vunpack.c.l.b16 %v2939
        %v3206 = vunpack.c.l.b16 %v2940
        %v3207 = vunpack.c.h.b16 %v2940
        %v3208 = vunpack.c.l.b16 %v2941
        %v3209 = vunpack.c.l.b16 %v2942
        %v3210 = vunpack.c.h.b16 %v2942
        %v3211 = vunpack.c.l.b16 %v2943
        %v3212 = vunpack.c.l.b16 %v2944
        %v3213 = vunpack.c.h.b16 %v2944
        %v3214 = vunpack.c.l.b16 %v2945
        %v3215 = vunpack.c.l.b16 %v2946
        %v3216 = vunpack.c.h.b16 %v2946
        %v3217 = vunpack.c.l.b16 %v2947
        %v3218 = vunpack.c.l.b16 %v2948
        %v3219 = vunpack.c.h.b16 %v2948
        %v3220 = vunpack.c.l.b16 %v2949
        %v3221 = vunpack.c.l.b16 %v2950
        %v3222 = vunpack.c.h.b16 %v2950
        %v3223 = vunpack.c.l.b16 %v2951
        %v3224 = vunpack.c.l.b16 %v2952
        %v3225 = vunpack.c.h.b16 %v2952
        %v3226 = vunpack.c.l.b16 %v2953
        %v3227 = vpack.c.b16 %v3086, %v3083
        %v3228 = vpack.c.b16 %v3087, %v3084
        %v3229 = vpack.c.b16 %v3088, %v3085
        %v3230 = vpack.c.b16 %v3092, %v3089
        %v3231 = vpack.c.b16 %v3093, %v3090
        %v3232 = vpack.c.b16 %v3094, %v3091
        %v3233 = vpack.c.b16 %v3098, %v3095
        %v3234 = vpack.c.b16 %v3099, %v3096
        %v3235 = vpack.c.b16 %v3100, %v3097
        %v3236 = vpack.c.b16 %v3104, %v3101
        %v3237 = vpack.c.b16 %v3105, %v3102
        %v3238 = vpack.c.b16 %v3106, %v3103
        %v3239 = vpack.c.b16 %v3110, %v3107
        %v3240 = vpack.c.b16 %v3111, %v3108
        %v3241 = vpack.c.b16 %v3112, %v3109
        %v3242 = vpack.c.b16 %v3116, %v3113
        %v3243 = vpack.c.b16 %v3117, %v3114
        %v3244 = vpack.c.b16 %v3118, %v3115
        %v3245 = vpack.c.b16 %v3122, %v3119
        %v3246 = vpack.c.b16 %v3123, %v3120
        %v3247 = vpack.c.b16 %v3124, %v3121
        %v3248 = vpack.c.b16 %v3128, %v3125
        %v3249 = vpack.c.b16 %v3129, %v3126
        %v3250 = vpack.c.b16 %v3130, %v3127
        %v3251 = vpack.c.b16 %v3134, %v3131
        %v3252 = vpack.c.b16 %v3135, %v3132
        %v3253 = vpack.c.b16 %v3136, %v3133
        %v3254 = vpack.c.b16 %v3140, %v3137
        %v3255 = vpack.c.b16 %v3141, %v3138
        %v3256 = vpack.c.b16 %v3142, %v3139
        %v3257 = vpack.c.b16 %v3146, %v3143
        %v3258 = vpack.c.b16 %v3147, %v3144
        %v3259 = vpack.c.b16 %v3148, %v3145
        %v3260 = vpack.c.b16 %v3152, %v3149
        %v3261 = vpack.c.b16 %v3153, %v3150
        %v3262 = vpack.c.b16 %v3154, %v3151
        %v3263 = vpack.c.b16 %v3158, %v3155
        %v3264 = vpack.c.b16 %v3159, %v3156
        %v3265 = vpack.c.b16 %v3160, %v3157
        %v3266 = vpack.c.b16 %v3164, %v3161
        %v3267 = vpack.c.b16 %v3165, %v3162
        %v3268 = vpack.c.b16 %v3166, %v3163
        %v3269 = vpack.c.b16 %v3170, %v3167
        %v3270 = vpack.c.b16 %v3171, %v3168
        %v3271 = vpack.c.b16 %v3172, %v3169
        %v3272 = vpack.c.b16 %v3176, %v3173
        %v3273 = vpack.c.b16 %v3177, %v3174
        %v3274 = vpack.c.b16 %v3178, %v3175
        %v3275 = vpack.c.b16 %v3182, %v3179
        %v3276 = vpack.c.b16 %v3183, %v3180
        %v3277 = vpack.c.b16 %v3184, %v3181
        %v3278 = vpack.c.b16 %v3188, %v3185
        %v3279 = vpack.c.b16 %v3189, %v3186
        %v3280 = vpack.c.b16 %v3190, %v3187
        %v3281 = vpack.c.b16 %v3194, %v3191
        %v3282 = vpack.c.b16 %v3195, %v3192
        %v3283 = vpack.c.b16 %v3196, %v3193
        %v3284 = vpack.c.b16 %v3200, %v3197
        %v3285 = vpack.c.b16 %v3201, %v3198
        %v3286 = vpack.c.b16 %v3202, %v3199
        %v3287 = vpack.c.b16 %v3206, %v3203
        %v3288 = vpack.c.b16 %v3207, %v3204
        %v3289 = vpack.c.b16 %v3208, %v3205
        %v3290 = vpack.c.b16 %v3212, %v3209
        %v3291 = vpack.c.b16 %v3213, %v3210
        %v3292 = vpack.c.b16 %v3214, %v3211
        %v3293 = vpack.c.b16 %v3218, %v3215
        %v3294 = vpack.c.b16 %v3219, %v3216
        %v3295 = vpack.c.b16 %v3220, %v3217
        %v3296 = vpack.c.b16 %v3224, %v3221
        %v3297 = vpack.c.b16 %v3225, %v3222
        %v3298 = vpack.c.b16 %v3226, %v3223
        %3371 = vmatprep.subr.bf16.mxu0 %v3249
        %3372 = vmatpush1.bf16.msra.mxu0 %v3248
        %3373 = vmatprep.subr.bf16.mxu0 %v3246
        %3374 = vmatpush1.bf16.msra.mxu0 %v3245
        %3375 = vmatprep.subr.bf16.mxu0 %v3243
        %3376 = vmatpush1.bf16.msra.mxu0 %v3242
        %3377 = vmatprep.subr.bf16.mxu0 %v3240
        %3378 = vmatpush1.bf16.msra.mxu0 %v3239
        %3379 = vmatprep.subr.bf16.mxu0 %v3237
        %3380 = vmatpush1.bf16.msra.mxu0 %v3236
        %3381 = vmatprep.subr.bf16.mxu0 %v3234
        %3382 = vmatpush1.bf16.msra.mxu0 %v3233
        %3383 = vmatprep.subr.bf16.mxu0 %v3231
        %3384 = vmatpush1.bf16.msra.mxu0 %v3230
        %3385 = vmatprep.subr.bf16.mxu0 %v3228
        %3386 = vmatpush1.bf16.msra.mxu0 %v3227
        %3387 = vmatprep.subr.bf16.mxu0 %v3273
        %3388 = vmatpush2.bf16.msra.mxu0 %v3272
        %3389 = vmatprep.subr.bf16.mxu0 %v3270
        %3390 = vmatpush2.bf16.msra.mxu0 %v3269
        %3391 = vmatprep.subr.bf16.mxu0 %v3267
        %3392 = vmatpush2.bf16.msra.mxu0 %v3266
        %3393 = vmatprep.subr.bf16.mxu0 %v3264
        %3394 = vmatpush2.bf16.msra.mxu0 %v3263
        %3395 = vmatprep.subr.bf16.mxu0 %v3261
        %3396 = vmatpush2.bf16.msra.mxu0 %v3260
        %3397 = vmatprep.subr.bf16.mxu0 %v3258
        %3398 = vmatpush2.bf16.msra.mxu0 %v3257
        %3399 = vmatprep.subr.bf16.mxu0 %v3255
        %3400 = vmatpush2.bf16.msra.mxu0 %v3254
        %3401 = vmatprep.subr.bf16.mxu0 %v3252
        %3402 = vmatpush2.bf16.msra.mxu0 %v3251
        %3403 = vmatprep.mubr.bf16.mxu0 %v2982
        %3404 = vmatmul.mubr.bf16.gmra.mxu0 %v2981
        %v3405 = vpop.f32.mrf.mxu0
        %v3406 = vadd.f32 %v2959, %v3405
        %v3407 = vpop.f32.mrf.mxu0
        %v3408 = vadd.f32 %v2963, %v3407
        %v3409 = vpop.f32.mrf.mxu0
        %v3410 = vadd.f32 %v2959, %v3409
        %v3411 = vpop.f32.mrf.mxu0
        %v3412 = vadd.f32 %v2963, %v3411
        %3413 = vdwg.mxu0
        %3414 = vmatprep.subr.bf16.mxu0 %v3297
        %3415 = vmatpush1.bf16.msra.mxu0 %v3296
        %3416 = vmatprep.subr.bf16.mxu0 %v3294
        %3417 = vmatpush1.bf16.msra.mxu0 %v3293
        %3418 = vmatprep.subr.bf16.mxu0 %v3291
        %3419 = vmatpush1.bf16.msra.mxu0 %v3290
        %3420 = vmatprep.subr.bf16.mxu0 %v3288
        %3421 = vmatpush1.bf16.msra.mxu0 %v3287
        %3422 = vmatprep.subr.bf16.mxu0 %v3285
        %3423 = vmatpush1.bf16.msra.mxu0 %v3284
        %3424 = vmatprep.subr.bf16.mxu0 %v3282
        %3425 = vmatpush1.bf16.msra.mxu0 %v3281
        %3426 = vmatprep.subr.bf16.mxu0 %v3279
        %3427 = vmatpush1.bf16.msra.mxu0 %v3278
        %3428 = vmatprep.subr.bf16.mxu0 %v3276
        %3429 = vmatpush1.bf16.msra.mxu0 %v3275
        %3430 = vmatprep.subr.bf16.mxu0 0
        %3431 = vmatpush2.bf16.msra.mxu0 0
        %3432 = vmatprep.subr.bf16.mxu0 0
        %3433 = vmatpush2.bf16.msra.mxu0 0
        %3434 = vmatprep.subr.bf16.mxu0 0
        %3435 = vmatpush2.bf16.msra.mxu0 0
        %3436 = vmatprep.subr.bf16.mxu0 0
        %3437 = vmatpush2.bf16.msra.mxu0 0
        %3438 = vmatprep.subr.bf16.mxu0 0
        %3439 = vmatpush2.bf16.msra.mxu0 0
        %3440 = vmatprep.subr.bf16.mxu0 0
        %3441 = vmatpush2.bf16.msra.mxu0 0
        %3442 = vmatprep.subr.bf16.mxu0 0
        %3443 = vmatpush2.bf16.msra.mxu0 0
        %3444 = vmatprep.subr.bf16.mxu0 0
        %3445 = vmatpush2.bf16.msra.mxu0 0
        %3446 = vmatprep.mubr.bf16.mxu0 0
        %3447 = vmatmul.mubr.bf16.gmra.mxu0 %v2983
        %v3448 = vpop.f32.mrf.mxu0
        %v3449 = vadd.f32 %v3406, %v3448
        %v3450 = vpop.f32.mrf.mxu0
        %v3451 = vadd.f32 %v3408, %v3450
        %v3452 = vpop.f32.mrf.mxu0
        %v3453 = vadd.f32 %v3410, %v3452
        %v3454 = vpop.f32.mrf.mxu0
        %v3455 = vadd.f32 %v3412, %v3454
        %3456 = vdwg.mxu0
        %3457 = vmatprep.subr.bf16.mxu0 0
        %3458 = vmatpush1.bf16.msra.mxu0 %v3250
        %3459 = vmatprep.subr.bf16.mxu0 0
        %3460 = vmatpush1.bf16.msra.mxu0 %v3247
        %3461 = vmatprep.subr.bf16.mxu0 0
        %3462 = vmatpush1.bf16.msra.mxu0 %v3244
        %3463 = vmatprep.subr.bf16.mxu0 0
        %3464 = vmatpush1.bf16.msra.mxu0 %v3241
        %3465 = vmatprep.subr.bf16.mxu0 0
        %3466 = vmatpush1.bf16.msra.mxu0 %v3238
        %3467 = vmatprep.subr.bf16.mxu0 0
        %3468 = vmatpush1.bf16.msra.mxu0 %v3235
        %3469 = vmatprep.subr.bf16.mxu0 0
        %3470 = vmatpush1.bf16.msra.mxu0 %v3232
        %3471 = vmatprep.subr.bf16.mxu0 0
        %3472 = vmatpush1.bf16.msra.mxu0 %v3229
        %3473 = vmatprep.subr.bf16.mxu0 0
        %3474 = vmatpush2.bf16.msra.mxu0 %v3274
        %3475 = vmatprep.subr.bf16.mxu0 0
        %3476 = vmatpush2.bf16.msra.mxu0 %v3271
        %3477 = vmatprep.subr.bf16.mxu0 0
        %3478 = vmatpush2.bf16.msra.mxu0 %v3268
        %3479 = vmatprep.subr.bf16.mxu0 0
        %3480 = vmatpush2.bf16.msra.mxu0 %v3265
        %3481 = vmatprep.subr.bf16.mxu0 0
        %3482 = vmatpush2.bf16.msra.mxu0 %v3262
        %3483 = vmatprep.subr.bf16.mxu0 0
        %3484 = vmatpush2.bf16.msra.mxu0 %v3259
        %3485 = vmatprep.subr.bf16.mxu0 0
        %3486 = vmatpush2.bf16.msra.mxu0 %v3256
        %3487 = vmatprep.subr.bf16.mxu0 0
        %3488 = vmatpush2.bf16.msra.mxu0 %v3253
        %3489 = vmatprep.mubr.bf16.mxu0 %v2982
        %3490 = vmatmul.mubr.bf16.gmra.mxu0 %v2981
        %v3491 = vpop.f32.mrf.mxu0
        %v3492 = vadd.f32 %v2967, %v3491
        %v3493 = vpop.f32.mrf.mxu0
        %v3494 = vpop.f32.mrf.mxu0
        %v3495 = vadd.f32 %v2967, %v3494
        %v3496 = vpop.f32.mrf.mxu0
        %3497 = vdwg.mxu0
        %3498 = vmatprep.subr.bf16.mxu0 0
        %3499 = vmatpush1.bf16.msra.mxu0 %v3298
        %3500 = vmatprep.subr.bf16.mxu0 0
        %3501 = vmatpush1.bf16.msra.mxu0 %v3295
        %3502 = vmatprep.subr.bf16.mxu0 0
        %3503 = vmatpush1.bf16.msra.mxu0 %v3292
        %3504 = vmatprep.subr.bf16.mxu0 0
        %3505 = vmatpush1.bf16.msra.mxu0 %v3289
        %3506 = vmatprep.subr.bf16.mxu0 0
        %3507 = vmatpush1.bf16.msra.mxu0 %v3286
        %3508 = vmatprep.subr.bf16.mxu0 0
        %3509 = vmatpush1.bf16.msra.mxu0 %v3283
        %3510 = vmatprep.subr.bf16.mxu0 0
        %3511 = vmatpush1.bf16.msra.mxu0 %v3280
        %3512 = vmatprep.subr.bf16.mxu0 0
        %3513 = vmatpush1.bf16.msra.mxu0 %v3277
        %3514 = vmatprep.subr.bf16.mxu0 0
        %3515 = vmatpush2.bf16.msra.mxu0 0
        %3516 = vmatprep.subr.bf16.mxu0 0
        %3517 = vmatpush2.bf16.msra.mxu0 0
        %3518 = vmatprep.subr.bf16.mxu0 0
        %3519 = vmatpush2.bf16.msra.mxu0 0
        %3520 = vmatprep.subr.bf16.mxu0 0
        %3521 = vmatpush2.bf16.msra.mxu0 0
        %3522 = vmatprep.subr.bf16.mxu0 0
        %3523 = vmatpush2.bf16.msra.mxu0 0
        %3524 = vmatprep.subr.bf16.mxu0 0
        %3525 = vmatpush2.bf16.msra.mxu0 0
        %3526 = vmatprep.subr.bf16.mxu0 0
        %3527 = vmatpush2.bf16.msra.mxu0 0
        %3528 = vmatprep.subr.bf16.mxu0 0
        %3529 = vmatpush2.bf16.msra.mxu0 0
        %3530 = vmatprep.mubr.bf16.mxu0 0
        %3531 = vmatmul.mubr.bf16.gmra.mxu0 %v2983
        %v3532 = vpop.f32.mrf.mxu0
        %v3533 = vadd.f32 %v3492, %v3532
        %v3534 = vpop.f32.mrf.mxu0
        %v3535 = vpop.f32.mrf.mxu0
        %v3536 = vadd.f32 %v3495, %v3535
        %v3537 = vpop.f32.mrf.mxu0
        %3538 = vdwg.mxu0
        %v3539 = vpack.c.bf16 %v3453, %v3449
        %v3540 = vpack.c.bf16 %v3455, %v3451
        %v3541 = vpack.c.bf16 %v3536, %v3533
        %v3545 = vunpack.c.l.b16 %v3539
        %v3546 = vunpack.c.l.b16 %v3540
        %v3547 = vunpack.c.l.b16 %v3541
        %v3548 = vunpack.c.h.b16 %v3539
        %v3549 = vunpack.c.h.b16 %v3540
        %v3550 = vunpack.c.h.b16 %v3541
        %v3551 = vpack.c.b16 %v3546, %v3545
        %v3552 = vpack.c.b16 %v3547, %v3547
        %v3553 = vpack.c.b16 %v3549, %v3548
        %v3554 = vpack.c.b16 %v3550, %v3550
        %3559 = vst [vmem:[%s244] sm:$0xff] %v3551
        %3560 = vst [vmem:[%s244 + $0x8] sm:$0xf] %v3552
        %3561 = vst [vmem:[%s244 + $0xc] sm:$0xff] %v3553
        %3562 = vst [vmem:[%s244 + $0x14] sm:$0xf] %v3554
        %s3563 = sand.u32 %s119, 1
        %s3564 = scalar_lea.sflag [#allocation5], %s3563
        %s3565 = sand.u32 %s119, 1
        %s3566 = smul.addr %s3565, 24
        %s3567 = scalar_lea.vmem [#allocation9], %s3566
        // Predicated region
        $region49: #{tpu_custom_call.1} parent=35 // pred_check
          %p3568 = pneg %p129
        $region50: #{tpu_custom_call.1} parent=35 // pred_check_branch
          %3570 = sbr.rel (%p3568) target = $region52
        $region51: #{tpu_custom_call.1} parent=35 // pred_region
          %s3572 = ssub.s32 384, 384
          %3573 = vsyncadd %s3564, %s3572
          %s3574 = smul.addr %s22, 6
          %s3575 = smul.addr %s3574, 64
          %s3576 = scalar_lea.hbm %s4, %s3575
          %s3577 = sshll.u32 %s3567, 4
          %s3578 = int_to_ptr.vmem [resolvable:$true] %s3577
          %3583 = dma.vmem_to_hbm [thread:$0]  %s3578, 384, %s3576, %s3564, 192, 192, 12
        $region52: #{tpu_custom_call.1} parent=35 // pred_fallthru
          _
      $region36: #{tpu_custom_call.1} parent=5 // pred_fallthru
        _
      %p3584 = scmp.le.s32.totalorder 2, %s17
      // Predicated region
      $region53: #{tpu_custom_call.1} parent=5 // pred_check
        %p3585 = pneg %p3584
      $region54: #{tpu_custom_call.1} parent=5 // pred_check_branch
        %3587 = sbr.rel (%p3585) target = $region56
      $region55: #{tpu_custom_call.1} parent=5 // pred_region
        %s3588 = ssub.s32 %s17, 2
        // Predicated region
        $region57: #{tpu_custom_call.1} parent=55 // pred_check
          %p3589 = pneg %p135
        $region58: #{tpu_custom_call.1} parent=55 // pred_check_branch
          %3591 = sbr.rel (%p3589) target = $region60
        $region59: #{tpu_custom_call.1} parent=55 // pred_region
          %s3592 = sand.u32 %s120, 1
          %s3593 = scalar_lea.sflag [#allocation5], %s3592
          %s3594 = sand.u32 %s120, 1
          %s3595 = smul.addr %s3594, 24
          %s3596 = scalar_lea.vmem [#allocation9], %s3595
          %3597 = dma.done %s3593, 384
        $region60: #{tpu_custom_call.1} parent=55 // pred_fallthru
          _
      $region56: #{tpu_custom_call.1} parent=5 // pred_fallthru
        _
    $region6: #{tpu_custom_call.1} parent=1 // loop_footer
      %s21 = sadd.s32 1, %s17
    $region7: #{tpu_custom_call.1} parent=1 // loop_footer_branch
      %16 = sbr.rel target = $region3
    $region8: #{tpu_custom_call.1} parent=1 // loop_exit
      _
    %3598 = vsyncpa [#allocation4], 1
    %s3599 = scalar_lea.sflag [#allocation4], 1
    %3600 = vsyncpa %s3599, 1
    %3601 = vsyncpa [#allocation7], 1
    %3602 = vsyncpa [#allocation5], 1
    %s3603 = scalar_lea.sflag [#allocation5], 1
    %3604 = vsyncpa %s3603, 1

</llo_original>
